<compile_context>
chip_gen: v6e
topology: v6e:2x2x1
jax: 0.10.0
libtpu: 0.0.40
codegen_flags: <defaults>
</compile_context>

<pallas_src>
import jax
import jax.numpy as jnp
from jax.experimental import pallas as pl
from jax.experimental.pallas import tpu as pltpu


# ----------------------------- Pallas kernels ------------------------------

def _conv_pool_kernel(p_ref, w_ref, shift_ref, o_ref):
    """p_ref: [4, TM, K] bf16 (one slab per 2x2 pooling position),
    w_ref: [K, 128] bf16 (BN scale folded in), shift_ref: [1, 128] f32.
    Computes relu(max_pos(p[pos] @ w) + shift) == conv+BN+ReLU+MaxPool,
    using a single MXU matmul for all 4 pooling positions."""
    tm, n = o_ref.shape
    k = p_ref.shape[-1]
    p = p_ref[...].reshape(4 * tm, k)          # layout-free: K stays the lane dim
    m4 = jnp.dot(p, w_ref[...], preferred_element_type=jnp.float32)
    m4 = m4.reshape(4, tm, n)
    m = jnp.maximum(jnp.maximum(m4[0], m4[1]), jnp.maximum(m4[2], m4[3]))
    o_ref[...] = jnp.maximum(m + shift_ref[...], 0.0).astype(o_ref.dtype)


def _linear_kernel(x_ref, w_ref, b_ref, o_ref):
    o_ref[...] = (
        jnp.dot(x_ref[...], w_ref[...], preferred_element_type=jnp.float32)
        + b_ref[...]
    )


# ------------------------------ tiling helpers ------------------------------

_N_PAD = 128           # lane-dense output width (unmasked full-lane stores)


def _round_up(n, m):
    return (n + m - 1) // m * m


def _chip_tuning():
    """Chip-aware (row-tile cap, VMEM limit): bigger tiles on v5e/v6e's
    128 MiB VMEM, conservative 1024 / 32 MB on v7x (64 MiB per TC)."""
    tm_max, vmem_limit = 1024, 32 * 1024 * 1024
    try:
        info = pltpu.get_tpu_info()
        if getattr(info, "vmem_capacity_bytes", 0) >= 96 * 1024 * 1024:
            tm_max, vmem_limit = 2048, 64 * 1024 * 1024
    except Exception:
        pass
    return tm_max, vmem_limit


_TM_MAX, _VMEM_LIMIT = _chip_tuning()


def _tiles(m):
    """Pick (tile, padded_M): tile % 16 == 0, padded_M % tile == 0, and
    >= 2 grid steps whenever m > 256 so the 'parallel' axis can be sharded
    across v7x's two TensorCores."""
    if m <= 256:
        t = _round_up(m, 16)
        return t, t
    if m <= 2 * _TM_MAX:
        t = _round_up(_round_up(m, 2) // 2, 16)
        return t, 2 * t
    return _TM_MAX, _round_up(m, _TM_MAX)


def _compiler_params():
    return pltpu.CompilerParams(
        dimension_semantics=("parallel",),
        vmem_limit_bytes=_VMEM_LIMIT,
    )


# --------------------------- kernel call wrappers ---------------------------

def conv_bn_relu_pool(patches, w_mat, scale, shift):
    """patches: [4, M, K]; w_mat: [K, C] f32; scale/shift: [C] f32.
    Returns pooled conv+BN+ReLU output [M, C] bf16."""
    _, M, K = patches.shape
    C = w_mat.shape[1]
    tm, Mp = _tiles(M)

    w_scaled = (w_mat * scale[None, :]).astype(jnp.bfloat16)       # fold BN scale
    w_pad = jnp.zeros((K, _N_PAD), jnp.bfloat16).at[:, :C].set(w_scaled)
    shift_pad = jnp.zeros((1, _N_PAD), jnp.float32).at[0, :C].set(shift)

    p = patches.astype(jnp.bfloat16)
    if Mp != M:
        p = jnp.pad(p, ((0, 0), (0, Mp - M), (0, 0)))

    out = pl.pallas_call(
        _conv_pool_kernel,
        out_shape=jax.ShapeDtypeStruct((Mp, _N_PAD), jnp.bfloat16),
        grid=(Mp // tm,),
        in_specs=[
            pl.BlockSpec((4, tm, K), lambda i: (0, i, 0)),
            pl.BlockSpec((K, _N_PAD), lambda i: (0, 0)),    # VMEM-resident weights
            pl.BlockSpec((1, _N_PAD), lambda i: (0, 0)),
        ],
        out_specs=pl.BlockSpec((tm, _N_PAD), lambda i: (i, 0)),
        compiler_params=_compiler_params(),
    )(p, w_pad, shift_pad)
    return out[:M, :C]


def linear_pallas(x, w_t, b):
    """x: [M, K]; w_t: [K, N]; b: [N]. Returns [M, N] f32."""
    M, K = x.shape
    N = w_t.shape[1]
    tm, Mp = _tiles(M)

    w_pad = jnp.zeros((K, _N_PAD), jnp.bfloat16).at[:, :N].set(
        w_t.astype(jnp.bfloat16))
    b_pad = jnp.zeros((1, _N_PAD), jnp.float32).at[0, :N].set(b)

    xb = x.astype(jnp.bfloat16)
    if Mp != M:
        xb = jnp.pad(xb, ((0, Mp - M), (0, 0)))

    out = pl.pallas_call(
        _linear_kernel,
        out_shape=jax.ShapeDtypeStruct((Mp, _N_PAD), jnp.float32),
        grid=(Mp // tm,),
        in_specs=[
            pl.BlockSpec((tm, K), lambda i: (i, 0)),
            pl.BlockSpec((K, _N_PAD), lambda i: (0, 0)),
            pl.BlockSpec((1, _N_PAD), lambda i: (0, 0)),
        ],
        out_specs=pl.BlockSpec((tm, _N_PAD), lambda i: (i, 0)),
        compiler_params=_compiler_params(),
    )(xb, w_pad, b_pad)
    return out[:M, :N]


# ------------------------------ JAX glue code -------------------------------

def im2col_pooled(x, k=5, pad=2):
    """x: [B, H, W, C] -> patches [4, B*(H//2)*(W//2), k*k*C], feature order
    (kh, kw, c).  Position p = 2*ph + pw is the offset inside the 2x2 pool
    window, so the kernel can MaxPool by maxing over the leading axis."""
    B, H, W, C = x.shape
    Ho, Wo = H // 2, W // 2
    xp = jnp.pad(x, ((0, 0), (pad, pad), (pad, pad), (0, 0)))
    pos_slabs = []
    for ph in range(2):
        for pw in range(2):
            feats = []
            for kh in range(k):
                for kw in range(k):
                    sl = xp[:, ph + kh::2, pw + kw::2, :][:, :Ho, :Wo, :]
                    feats.append(sl)
            pat = jnp.concatenate(feats, axis=-1)        # [B, Ho, Wo, k*k*C]
            pos_slabs.append(pat.reshape(B * Ho * Wo, k * k * C))
    return jnp.stack(pos_slabs, axis=0), (B, Ho, Wo)


def fold_bn(gamma, beta, mean, var, conv_bias, eps=1e-5):
    scale = gamma / jnp.sqrt(var + eps)
    shift = beta + scale * (conv_bias - mean)
    return scale, shift


def cnn_forward(x_nchw, params):
    B = x_nchw.shape[0]
    x = jnp.transpose(x_nchw, (0, 2, 3, 1)).astype(jnp.bfloat16)   # NHWC

    # layer1: Conv2d(1,16,5,p=2) + BN(16) + ReLU + MaxPool(2)
    p1, (_, H1, W1) = im2col_pooled(x)                             # [4, B*196, 25]
    w1 = params["conv1_w"].transpose(2, 3, 1, 0).reshape(25, 16)   # (kh,kw,c) rows
    s1, sh1 = fold_bn(params["bn1_gamma"], params["bn1_beta"],
                      params["bn1_mean"], params["bn1_var"], params["conv1_b"])
    o1 = conv_bn_relu_pool(p1, w1, s1, sh1).reshape(B, H1, W1, 16)  # [B,14,14,16] bf16

    # layer2: Conv2d(16,32,5,p=2) + BN(32) + ReLU + MaxPool(2)
    p2, (_, H2, W2) = im2col_pooled(o1)                            # [4, B*49, 400]
    w2 = params["conv2_w"].transpose(2, 3, 1, 0).reshape(400, 32)
    s2, sh2 = fold_bn(params["bn2_gamma"], params["bn2_beta"],
                      params["bn2_mean"], params["bn2_var"], params["conv2_b"])
    o2 = conv_bn_relu_pool(p2, w2, s2, sh2).reshape(B, H2, W2, 32)  # [B,7,7,32] bf16

    # flatten in PyTorch NCHW order: (C, H, W) -> 1568 features
    flat = jnp.transpose(o2, (0, 3, 1, 2)).reshape(B, -1)          # [B, 1568]

    # final_stage: Linear(1568, 10)
    return linear_pallas(flat, params["fc_w"].T, params["fc_b"])   # [B, 10] f32


def make_params(key):
    ks = jax.random.split(key, 14)
    f32 = jnp.float32
    return {
        "conv1_w": (0.1 * jax.random.normal(ks[0], (16, 1, 5, 5))).astype(f32),
        "conv1_b": (0.1 * jax.random.normal(ks[1], (16,))).astype(f32),
        "bn1_gamma": (1.0 + 0.1 * jax.random.normal(ks[2], (16,))).astype(f32),
        "bn1_beta": (0.1 * jax.random.normal(ks[3], (16,))).astype(f32),
        "bn1_mean": (0.1 * jax.random.normal(ks[4], (16,))).astype(f32),
        "bn1_var": jax.random.uniform(ks[5], (16,), minval=0.5, maxval=1.5).astype(f32),
        "conv2_w": (0.05 * jax.random.normal(ks[6], (32, 16, 5, 5))).astype(f32),
        "conv2_b": (0.1 * jax.random.normal(ks[7], (32,))).astype(f32),
        "bn2_gamma": (1.0 + 0.1 * jax.random.normal(ks[8], (32,))).astype(f32),
        "bn2_beta": (0.1 * jax.random.normal(ks[9], (32,))).astype(f32),
        "bn2_mean": (0.1 * jax.random.normal(ks[10], (32,))).astype(f32),
        "bn2_var": jax.random.uniform(ks[11], (32,), minval=0.5, maxval=1.5).astype(f32),
        "fc_w": (0.02 * jax.random.normal(ks[12], (10, 7 * 7 * 32))).astype(f32),
        "fc_b": (0.1 * jax.random.normal(ks[13], (10,))).astype(f32),
    }


if __name__ == "__main__":
    key = jax.random.PRNGKey(0)
    k_param, k_x = jax.random.split(key)
    params = make_params(k_param)
    # Module requires 1x28x28 spatial input (final Linear is 7*7*32).
    x = jax.random.normal(k_x, (2, 1, 28, 28), dtype=jnp.float32)

    out = jax.jit(cnn_forward)(x, params)
    out = jax.block_until_ready(out)
    assert out.shape == (2, 10)
    assert bool(jnp.all(jnp.isfinite(out)))
    print("KERNEL_OK")
</pallas_src>

<mosaic_0001>
module attributes {stable_mosaic.version = 11 : i64} {
  func.func @_conv_pool_kernel(%arg0: i32, %arg1: memref<4x208x25xbf16, #tpu.memory_space<vmem>>, %arg2: memref<25x128xbf16, #tpu.memory_space<vmem>>, %arg3: memref<1x128xf32, #tpu.memory_space<vmem>>, %arg4: memref<208x128xbf16, #tpu.memory_space<vmem>>) attributes {dimension_semantics = [#tpu.dimension_semantics<parallel>], iteration_bounds = array<i64: 2>, scalar_prefetch = 0 : i64, scratch_operands = 0 : i64, tpu.core_type = #tpu.core_type<tc>, window_params = [{transform_indices = @transform_0, window_bounds = array<i64: 4, 208, 25>}, {pipeline_mode = #tpu.pipeline_mode<synchronous>, transform_indices = @transform_1, window_bounds = array<i64: 25, 128>}, {pipeline_mode = #tpu.pipeline_mode<synchronous>, transform_indices = @transform_2, window_bounds = array<i64: 1, 128>}, {transform_indices = @transform_3, window_bounds = array<i64: 208, 128>}]} {
    %c0 = arith.constant 0 : index
    %c0_0 = arith.constant 0 : index
    %c0_1 = arith.constant 0 : index
    %0 = vector.load %arg1[%c0, %c0_0, %c0_1] : memref<4x208x25xbf16, #tpu.memory_space<vmem>>, vector<4x208x25xbf16>
    %1 = vector.shape_cast %0 : vector<4x208x25xbf16> to vector<832x25xbf16>
    %c0_2 = arith.constant 0 : index
    %c0_3 = arith.constant 0 : index
    %2 = vector.load %arg2[%c0_2, %c0_3] : memref<25x128xbf16, #tpu.memory_space<vmem>>, vector<25x128xbf16>
    %cst = arith.constant dense<0.000000e+00> : vector<832x128xf32>
    %3 = tpu.matmul %1, %2, %cst {dimension_numbers = #tpu.dot_dimension_numbers<[1], [0], [0], [1], [0, 0, 1, 1], [], []>} : vector<832x25xbf16>, vector<25x128xbf16>, vector<832x128xf32> -> vector<832x128xf32>
    %4 = vector.shape_cast %3 : vector<832x128xf32> to vector<4x208x128xf32>
    %5 = vector.extract_strided_slice %4 {offsets = [0, 0, 0], sizes = [1, 208, 128], strides = [1, 1, 1]} : vector<4x208x128xf32> to vector<1x208x128xf32>
    %6 = vector.shape_cast %5 : vector<1x208x128xf32> to vector<208x128xf32>
    %7 = vector.extract_strided_slice %4 {offsets = [1, 0, 0], sizes = [1, 208, 128], strides = [1, 1, 1]} : vector<4x208x128xf32> to vector<1x208x128xf32>
    %8 = vector.shape_cast %7 : vector<1x208x128xf32> to vector<208x128xf32>
    %9 = arith.maximumf %6, %8 : vector<208x128xf32>
    %10 = vector.extract_strided_slice %4 {offsets = [2, 0, 0], sizes = [1, 208, 128], strides = [1, 1, 1]} : vector<4x208x128xf32> to vector<1x208x128xf32>
    %11 = vector.shape_cast %10 : vector<1x208x128xf32> to vector<208x128xf32>
    %12 = vector.extract_strided_slice %4 {offsets = [3, 0, 0], sizes = [1, 208, 128], strides = [1, 1, 1]} : vector<4x208x128xf32> to vector<1x208x128xf32>
    %13 = vector.shape_cast %12 : vector<1x208x128xf32> to vector<208x128xf32>
    %14 = arith.maximumf %11, %13 : vector<208x128xf32>
    %15 = arith.maximumf %9, %14 : vector<208x128xf32>
    %c0_4 = arith.constant 0 : index
    %c0_5 = arith.constant 0 : index
    %16 = vector.load %arg3[%c0_4, %c0_5] : memref<1x128xf32, #tpu.memory_space<vmem>>, vector<1x128xf32>
    %17 = vector.broadcast %16 : vector<1x128xf32> to vector<208x128xf32>
    %18 = arith.addf %15, %17 : vector<208x128xf32>
    %cst_6 = arith.constant 0.000000e+00 : f32
    %19 = vector.broadcast %cst_6 : f32 to vector<208x128xf32>
    %20 = arith.maximumf %18, %19 : vector<208x128xf32>
    %21 = arith.truncf %20 : vector<208x128xf32> to vector<208x128xbf16>
    %c0_7 = arith.constant 0 : index
    %c0_8 = arith.constant 0 : index
    %22 = vector.load %arg4[%c0_7, %c0_8] : memref<208x128xbf16, #tpu.memory_space<vmem>>, vector<208x128xbf16>
    tpu.vector_store %arg4[%c0_7, %c0_8], %21 {strides = array<i32>} : memref<208x128xbf16, #tpu.memory_space<vmem>>, vector<208x128xbf16>,
    return
  }
  func.func @transform_0(%arg0: i32) -> (i32, i32, i32) {
    %c0_i32 = arith.constant 0 : i32
    %c0_i32_0 = arith.constant 0 : i32
    %c0_i32_1 = arith.constant 0 : i32
    return %c0_i32, %arg0, %c0_i32_0 : i32, i32, i32
  }
  func.func @transform_1(%arg0: i32) -> (i32, i32) {
    %c0_i32 = arith.constant 0 : i32
    %c0_i32_0 = arith.constant 0 : i32
    %c0_i32_1 = arith.constant 0 : i32
    return %c0_i32, %c0_i32_0 : i32, i32
  }
  func.func @transform_2(%arg0: i32) -> (i32, i32) {
    %c0_i32 = arith.constant 0 : i32
    %c0_i32_0 = arith.constant 0 : i32
    %c0_i32_1 = arith.constant 0 : i32
    return %c0_i32, %c0_i32_0 : i32, i32
  }
  func.func @transform_3(%arg0: i32) -> (i32, i32) {
    %c0_i32 = arith.constant 0 : i32
    %c0_i32_0 = arith.constant 0 : i32
    return %arg0, %c0_i32 : i32, i32
  }
}

module attributes {stable_mosaic.version = 11 : i64} {
  func.func @_conv_pool_kernel(%arg0: i32, %arg1: memref<4x112x400xbf16, #tpu.memory_space<vmem>>, %arg2: memref<400x128xbf16, #tpu.memory_space<vmem>>, %arg3: memref<1x128xf32, #tpu.memory_space<vmem>>, %arg4: memref<112x128xbf16, #tpu.memory_space<vmem>>) attributes {dimension_semantics = [#tpu.dimension_semantics<parallel>], iteration_bounds = array<i64: 1>, scalar_prefetch = 0 : i64, scratch_operands = 0 : i64, tpu.core_type = #tpu.core_type<tc>, window_params = [{transform_indices = @transform_0, window_bounds = array<i64: 4, 112, 400>}, {pipeline_mode = #tpu.pipeline_mode<synchronous>, transform_indices = @transform_1, window_bounds = array<i64: 400, 128>}, {pipeline_mode = #tpu.pipeline_mode<synchronous>, transform_indices = @transform_2, window_bounds = array<i64: 1, 128>}, {transform_indices = @transform_3, window_bounds = array<i64: 112, 128>}]} {
    %c0 = arith.constant 0 : index
    %c0_0 = arith.constant 0 : index
    %c0_1 = arith.constant 0 : index
    %0 = vector.load %arg1[%c0, %c0_0, %c0_1] : memref<4x112x400xbf16, #tpu.memory_space<vmem>>, vector<4x112x400xbf16>
    %1 = vector.shape_cast %0 : vector<4x112x400xbf16> to vector<448x400xbf16>
    %c0_2 = arith.constant 0 : index
    %c0_3 = arith.constant 0 : index
    %2 = vector.load %arg2[%c0_2, %c0_3] : memref<400x128xbf16, #tpu.memory_space<vmem>>, vector<400x128xbf16>
    %cst = arith.constant dense<0.000000e+00> : vector<448x128xf32>
    %3 = tpu.matmul %1, %2, %cst {dimension_numbers = #tpu.dot_dimension_numbers<[1], [0], [0], [1], [0, 0, 1, 1], [], []>} : vector<448x400xbf16>, vector<400x128xbf16>, vector<448x128xf32> -> vector<448x128xf32>
    %4 = vector.shape_cast %3 : vector<448x128xf32> to vector<4x112x128xf32>
    %5 = vector.extract_strided_slice %4 {offsets = [0, 0, 0], sizes = [1, 112, 128], strides = [1, 1, 1]} : vector<4x112x128xf32> to vector<1x112x128xf32>
    %6 = vector.shape_cast %5 : vector<1x112x128xf32> to vector<112x128xf32>
    %7 = vector.extract_strided_slice %4 {offsets = [1, 0, 0], sizes = [1, 112, 128], strides = [1, 1, 1]} : vector<4x112x128xf32> to vector<1x112x128xf32>
    %8 = vector.shape_cast %7 : vector<1x112x128xf32> to vector<112x128xf32>
    %9 = arith.maximumf %6, %8 : vector<112x128xf32>
    %10 = vector.extract_strided_slice %4 {offsets = [2, 0, 0], sizes = [1, 112, 128], strides = [1, 1, 1]} : vector<4x112x128xf32> to vector<1x112x128xf32>
    %11 = vector.shape_cast %10 : vector<1x112x128xf32> to vector<112x128xf32>
    %12 = vector.extract_strided_slice %4 {offsets = [3, 0, 0], sizes = [1, 112, 128], strides = [1, 1, 1]} : vector<4x112x128xf32> to vector<1x112x128xf32>
    %13 = vector.shape_cast %12 : vector<1x112x128xf32> to vector<112x128xf32>
    %14 = arith.maximumf %11, %13 : vector<112x128xf32>
    %15 = arith.maximumf %9, %14 : vector<112x128xf32>
    %c0_4 = arith.constant 0 : index
    %c0_5 = arith.constant 0 : index
    %16 = vector.load %arg3[%c0_4, %c0_5] : memref<1x128xf32, #tpu.memory_space<vmem>>, vector<1x128xf32>
    %17 = vector.broadcast %16 : vector<1x128xf32> to vector<112x128xf32>
    %18 = arith.addf %15, %17 : vector<112x128xf32>
    %cst_6 = arith.constant 0.000000e+00 : f32
    %19 = vector.broadcast %cst_6 : f32 to vector<112x128xf32>
    %20 = arith.maximumf %18, %19 : vector<112x128xf32>
    %21 = arith.truncf %20 : vector<112x128xf32> to vector<112x128xbf16>
    %c0_7 = arith.constant 0 : index
    %c0_8 = arith.constant 0 : index
    %22 = vector.load %arg4[%c0_7, %c0_8] : memref<112x128xbf16, #tpu.memory_space<vmem>>, vector<112x128xbf16>
    tpu.vector_store %arg4[%c0_7, %c0_8], %21 {strides = array<i32>} : memref<112x128xbf16, #tpu.memory_space<vmem>>, vector<112x128xbf16>,
    return
  }
  func.func @transform_0(%arg0: i32) -> (i32, i32, i32) {
    %c0_i32 = arith.constant 0 : i32
    %c0_i32_0 = arith.constant 0 : i32
    %c0_i32_1 = arith.constant 0 : i32
    return %c0_i32, %arg0, %c0_i32_0 : i32, i32, i32
  }
  func.func @transform_1(%arg0: i32) -> (i32, i32) {
    %c0_i32 = arith.constant 0 : i32
    %c0_i32_0 = arith.constant 0 : i32
    %c0_i32_1 = arith.constant 0 : i32
    return %c0_i32, %c0_i32_0 : i32, i32
  }
  func.func @transform_2(%arg0: i32) -> (i32, i32) {
    %c0_i32 = arith.constant 0 : i32
    %c0_i32_0 = arith.constant 0 : i32
    %c0_i32_1 = arith.constant 0 : i32
    return %c0_i32, %c0_i32_0 : i32, i32
  }
  func.func @transform_3(%arg0: i32) -> (i32, i32) {
    %c0_i32 = arith.constant 0 : i32
    %c0_i32_0 = arith.constant 0 : i32
    return %arg0, %c0_i32 : i32, i32
  }
}

module attributes {stable_mosaic.version = 11 : i64} {
  func.func @_linear_kernel(%arg0: i32, %arg1: memref<16x1568xbf16, #tpu.memory_space<vmem>>, %arg2: memref<1568x128xbf16, #tpu.memory_space<vmem>>, %arg3: memref<1x128xf32, #tpu.memory_space<vmem>>, %arg4: memref<16x128xf32, #tpu.memory_space<vmem>>) attributes {dimension_semantics = [#tpu.dimension_semantics<parallel>], iteration_bounds = array<i64: 1>, scalar_prefetch = 0 : i64, scratch_operands = 0 : i64, tpu.core_type = #tpu.core_type<tc>, window_params = [{transform_indices = @transform_0, window_bounds = array<i64: 16, 1568>}, {pipeline_mode = #tpu.pipeline_mode<synchronous>, transform_indices = @transform_1, window_bounds = array<i64: 1568, 128>}, {pipeline_mode = #tpu.pipeline_mode<synchronous>, transform_indices = @transform_2, window_bounds = array<i64: 1, 128>}, {transform_indices = @transform_3, window_bounds = array<i64: 16, 128>}]} {
    %c0 = arith.constant 0 : index
    %c0_0 = arith.constant 0 : index
    %0 = vector.load %arg1[%c0, %c0_0] : memref<16x1568xbf16, #tpu.memory_space<vmem>>, vector<16x1568xbf16>
    %c0_1 = arith.constant 0 : index
    %c0_2 = arith.constant 0 : index
    %1 = vector.load %arg2[%c0_1, %c0_2] : memref<1568x128xbf16, #tpu.memory_space<vmem>>, vector<1568x128xbf16>
    %cst = arith.constant dense<0.000000e+00> : vector<16x128xf32>
    %2 = tpu.matmul %0, %1, %cst {dimension_numbers = #tpu.dot_dimension_numbers<[1], [0], [0], [1], [0, 0, 1, 1], [], []>} : vector<16x1568xbf16>, vector<1568x128xbf16>, vector<16x128xf32> -> vector<16x128xf32>
    %c0_3 = arith.constant 0 : index
    %c0_4 = arith.constant 0 : index
    %3 = vector.load %arg3[%c0_3, %c0_4] : memref<1x128xf32, #tpu.memory_space<vmem>>, vector<1x128xf32>
    %4 = vector.broadcast %3 : vector<1x128xf32> to vector<16x128xf32>
    %5 = arith.addf %2, %4 : vector<16x128xf32>
    %c0_5 = arith.constant 0 : index
    %c0_6 = arith.constant 0 : index
    %6 = vector.load %arg4[%c0_5, %c0_6] : memref<16x128xf32, #tpu.memory_space<vmem>>, vector<16x128xf32>
    tpu.vector_store %arg4[%c0_5, %c0_6], %5 {strides = array<i32>} : memref<16x128xf32, #tpu.memory_space<vmem>>, vector<16x128xf32>,
    return
  }
  func.func @transform_0(%arg0: i32) -> (i32, i32) {
    %c0_i32 = arith.constant 0 : i32
    %c0_i32_0 = arith.constant 0 : i32
    return %arg0, %c0_i32 : i32, i32
  }
  func.func @transform_1(%arg0: i32) -> (i32, i32) {
    %c0_i32 = arith.constant 0 : i32
    %c0_i32_0 = arith.constant 0 : i32
    %c0_i32_1 = arith.constant 0 : i32
    return %c0_i32, %c0_i32_0 : i32, i32
  }
  func.func @transform_2(%arg0: i32) -> (i32, i32) {
    %c0_i32 = arith.constant 0 : i32
    %c0_i32_0 = arith.constant 0 : i32
    %c0_i32_1 = arith.constant 0 : i32
    return %c0_i32, %c0_i32_0 : i32, i32
  }
  func.func @transform_3(%arg0: i32) -> (i32, i32) {
    %c0_i32 = arith.constant 0 : i32
    %c0_i32_0 = arith.constant 0 : i32
    return %arg0, %c0_i32 : i32, i32
  }
}

</mosaic_0001>

<llo_original>
// kernel: cnn_forward.3
$region0: #{cnn_forward.3}
  #allocation0 [shape = 'u32[]', space=smem, size = 0x4, offset = 0x4, fixed_abs, tag = 'smem constant byte address 0x4 - core index']
  #allocation1 [shape = 'u32[144,128]{1,0:T(1,128)}', space=vmem, size = 0x12000, scoped, tag = 'internal scratch']
  %s0 = inlined_call_operand.vmem [shape: bf16[4,416,25], index: 0, kind: input, shape index: {}]
  %s1 = inlined_call_operand.vmem [shape: bf16[25,128], index: 1, kind: input, shape index: {}]
  %s2 = inlined_call_operand.vmem [shape: f32[1,128], index: 2, kind: input, shape index: {}]
  %s3 = inlined_call_operand.vmem [shape: bf16[416,128], index: 3, kind: output, shape index: {}]
  %s4 = sld [smem:[#allocation0]]
  $region86: #{cnn_forward.3} parent=0
    _
  %s6 = ssub.s32 1, %s4
  %s7 = scalar_select 0, %s6, %s4
  $region1: #{cnn_forward.3} parent=0
    #allocation2 [shape = 'u8[425984]{0}', space=vmem, size = 0x68000, scoped, tag = 'input window, operand 0']
    loop: start=0, step=1, limit=4
    $region2: #{cnn_forward.3} parent=1 // loop_pre_header
      _
    $region3: #{cnn_forward.3} parent=1 // loop_header
      %s9 = sphi 0, %s13
      %p10 = scmp.ge.s32.totalorder %s9, 4
      %s19 = sphi 0, %s21
      %s22 = sphi 0, %s19
      %s23 = sphi 0, %s22
      %s39 = sphi 0, %s23
      %s43 = sphi 0, %s43
      %s45 = sphi 0, %s43
      %s46 = sphi 0, %s45
      %s60 = sphi 0, %s46
      %s64 = sphi 0, %s64
      %s66 = sphi 0, %s64
      %s67 = sphi 0, %s66
      %s81 = sphi 0, %s67
      %s87 = sphi 0, %s89
      %s90 = sphi 0, %s87
      %s91 = sphi 0, %s90
      %s107 = sphi 0, %s91
    $region4: #{cnn_forward.3} parent=1 // loop_header_branch
      %12 = sbr.rel (%p10) target = $region8
    $region5: #{cnn_forward.3} parent=1 // loop_body
      %s14 = ssub.s32 %s9, 1
      %s15 = ssub.s32 %s9, 2
      %s16 = sadd.s32 %s9, 1
      %s17 = ssub.s32 %s9, %s16
      %p18 = scmp.eq.s32.totalorder %s17, 0
      %s20 = sadd.s32 %s19, 1
      %s21 = scalar_select %p18, %s19, %s20
      %p24 = pneg %p18
      %p25 = scmp.eq.s32.totalorder %s9, 1
      %p26 = por %p24, %p25
      %p27 = scmp.ne.s32.totalorder %s19, %s22
      %p28 = scmp.eq.s32.totalorder %s9, 0
      %p29 = por %p27, %p28
      %p30 = scmp.ne.s32.totalorder %s19, %s22
      %p31 = scmp.eq.s32.totalorder %s14, 1
      %p32 = por %p30, %p31
      %p33 = scmp.ne.s32.totalorder %s22, %s23
      %p34 = scmp.eq.s32.totalorder %s14, 0
      %p35 = por %p33, %p34
      %p36 = scmp.ne.s32.totalorder %s22, %s23
      %p37 = scmp.eq.s32.totalorder %s15, 1
      %p38 = por %p36, %p37
      %p40 = scmp.ne.s32.totalorder %s23, %s39
      %p41 = scmp.eq.s32.totalorder %s15, 0
      %p42 = por %p40, %p41
      %s44 = sadd.s32 %s43, 1
      %p47 = scmp.eq.s32.totalorder %s9, 1
      %p48 = scmp.ne.s32.totalorder %s43, %s45
      %p49 = scmp.eq.s32.totalorder %s9, 0
      %p50 = por %p48, %p49
      %p51 = scmp.ne.s32.totalorder %s43, %s45
      %p52 = scmp.eq.s32.totalorder %s14, 1
      %p53 = por %p51, %p52
      %p54 = scmp.ne.s32.totalorder %s45, %s46
      %p55 = scmp.eq.s32.totalorder %s14, 0
      %p56 = por %p54, %p55
      %p57 = scmp.ne.s32.totalorder %s45, %s46
      %p58 = scmp.eq.s32.totalorder %s15, 1
      %p59 = por %p57, %p58
      %p61 = scmp.ne.s32.totalorder %s46, %s60
      %p62 = scmp.eq.s32.totalorder %s15, 0
      %p63 = por %p61, %p62
      %s65 = sadd.s32 %s64, 1
      %p68 = scmp.eq.s32.totalorder %s9, 1
      %p69 = scmp.ne.s32.totalorder %s64, %s66
      %p70 = scmp.eq.s32.totalorder %s9, 0
      %p71 = por %p69, %p70
      %p72 = scmp.ne.s32.totalorder %s64, %s66
      %p73 = scmp.eq.s32.totalorder %s14, 1
      %p74 = por %p72, %p73
      %p75 = scmp.ne.s32.totalorder %s66, %s67
      %p76 = scmp.eq.s32.totalorder %s14, 0
      %p77 = por %p75, %p76
      %p78 = scmp.ne.s32.totalorder %s66, %s67
      %p79 = scmp.eq.s32.totalorder %s15, 1
      %p80 = por %p78, %p79
      %p82 = scmp.ne.s32.totalorder %s67, %s81
      %p83 = scmp.eq.s32.totalorder %s15, 0
      %p84 = por %p82, %p83
      %s85 = ssub.s32 %s9, %s16
      %p86 = scmp.eq.s32.totalorder %s85, 0
      %s88 = sadd.s32 %s87, 1
      %s89 = scalar_select %p86, %s87, %s88
      %p92 = pneg %p86
      %p93 = scmp.eq.s32.totalorder %s9, 1
      %p94 = por %p92, %p93
      %p95 = scmp.ne.s32.totalorder %s87, %s90
      %p96 = scmp.eq.s32.totalorder %s9, 0
      %p97 = por %p95, %p96
      %p98 = scmp.ne.s32.totalorder %s87, %s90
      %p99 = scmp.eq.s32.totalorder %s14, 1
      %p100 = por %p98, %p99
      %p101 = scmp.ne.s32.totalorder %s90, %s91
      %p102 = scmp.eq.s32.totalorder %s14, 0
      %p103 = por %p101, %p102
      %p104 = scmp.ne.s32.totalorder %s90, %s91
      %p105 = scmp.eq.s32.totalorder %s15, 1
      %p106 = por %p104, %p105
      %p108 = scmp.ne.s32.totalorder %s91, %s107
      %p109 = scmp.eq.s32.totalorder %s15, 0
      %p110 = por %p108, %p109
      %p111 = scmp.le.s32.totalorder 1, %s9
      %p112 = scmp.lt.s32.totalorder %s9, 3
      %p113 = pnand %p111, %p112
      %p114 = pneg %p113
      // Predicated region
      $region9: #{cnn_forward.3} parent=5 // pred_check
        _
      $region10: #{cnn_forward.3} parent=5 // pred_check_branch
        %116 = sbr.rel (%p113) target = $region12
      $region11: #{cnn_forward.3} parent=5 // pred_region
        %s117 = ssub.s32 %s9, 1
        // Predicated region
        $region13: #{cnn_forward.3} parent=11 // pred_check
          %p118 = pneg %p56
        $region14: #{cnn_forward.3} parent=11 // pred_check_branch
          %120 = sbr.rel (%p118) target = $region16
        $region15: #{cnn_forward.3} parent=11 // pred_region
          _
        $region16: #{cnn_forward.3} parent=11 // pred_fallthru
          _
        // Predicated region
        $region17: #{cnn_forward.3} parent=11 // pred_check
          %p121 = pneg %p77
        $region18: #{cnn_forward.3} parent=11 // pred_check_branch
          %123 = sbr.rel (%p121) target = $region20
        $region19: #{cnn_forward.3} parent=11 // pred_region
          _
        $region20: #{cnn_forward.3} parent=11 // pred_fallthru
          _
      $region12: #{cnn_forward.3} parent=5 // pred_fallthru
        _
      %p124 = scmp.lt.s32.totalorder %s9, 2
      // Predicated region
      $region21: #{cnn_forward.3} parent=5 // pred_check
        %p125 = pneg %p124
      $region22: #{cnn_forward.3} parent=5 // pred_check_branch
        %127 = sbr.rel (%p125) target = $region24
      $region23: #{cnn_forward.3} parent=5 // pred_region
        // Predicated region
        $region25: #{cnn_forward.3} parent=23 // pred_check
          %p128 = pneg %p29
        $region26: #{cnn_forward.3} parent=23 // pred_check_branch
          %130 = sbr.rel (%p128) target = $region28
        $region27: #{cnn_forward.3} parent=23 // pred_region
          %s131 = sand.u32 %s19, 1
          %s132 = sand.u32 %s19, 1
          %s133 = smul.addr %s132, 416
          %s134 = scalar_lea.vmem [#allocation2], %s133
          %s135 = smul.u32 26, %s9
          %s136 = smul.addr %s135, 4
          %s137 = scalar_lea.vmem %s0, %s136
          // Predicated region
          $region29: #{cnn_forward.3} parent=27 // pred_check
            _
          $region30: #{cnn_forward.3} parent=27 // pred_check_branch
            %139 = sbr.rel (0) target = $region32
          $region31: #{cnn_forward.3} parent=27 // pred_region
            // Predicated region
            $region33: #{cnn_forward.3} parent=31 // pred_check
              _
            $region34: #{cnn_forward.3} parent=31 // pred_check_branch
              %141 = sbr.rel target = $region36
            $region35: #{cnn_forward.3} parent=31 // pred_region
              // Predicated region
              $region48: #{cnn_forward.3} parent=35 // pred_check
                _
              $region49: #{cnn_forward.3} parent=35 // pred_check_branch
                %363 = sbr.rel (0) target = $region51
              $region50: #{cnn_forward.3} parent=35 // pred_region
                loop: start=0, step=1, limit=1
                $region52: #{cnn_forward.3} parent=50 // loop_pre_header
                  _
                $region53: #{cnn_forward.3} parent=50 // loop_header
                  %s365 = sphi 0, %s369
                  %p366 = scmp.ge.s32.totalorder %s365, 1
                  %s370 = sphi %s137, %s137
                  %s371 = sphi %s134, %s134
                $region54: #{cnn_forward.3} parent=50 // loop_header_branch
                  %368 = sbr.rel (%p366) target = $region58
                $region55: #{cnn_forward.3} parent=50 // loop_body
                  _
                $region56: #{cnn_forward.3} parent=50 // loop_footer
                  %s369 = sadd.s32 1, %s365
                $region57: #{cnn_forward.3} parent=50 // loop_footer_branch
                  %364 = sbr.rel target = $region53
                $region58: #{cnn_forward.3} parent=50 // loop_exit
                  _
                %s373 = ssub.s32 16, 1
                loop: start=0, step=1, limit=1
                $region59: #{cnn_forward.3} parent=50 // loop_pre_header
                  _
                $region60: #{cnn_forward.3} parent=50 // loop_header
                  %s375 = sphi 0, %s379
                  %p376 = scmp.ge.s32.totalorder %s375, 1
                  %s380 = sphi %s137, %s137
                  %s381 = sphi %s134, %s134
                $region61: #{cnn_forward.3} parent=50 // loop_header_branch
                  %378 = sbr.rel (%p376) target = $region65
                $region62: #{cnn_forward.3} parent=50 // loop_body
                  %v382 = vld [vmem:[%s380] sm:%s373]
                  %383 = vst [vmem:[%s381] sm:%s373] %v382
                  %v384 = vld [vmem:[%s380 + $0x4] sm:%s373]
                  %385 = vst [vmem:[%s381 + $0x4] sm:%s373] %v384
                  %v386 = vld [vmem:[%s380 + $0x8] sm:%s373]
                  %387 = vst [vmem:[%s381 + $0x8] sm:%s373] %v386
                  %v388 = vld [vmem:[%s380 + $0xc] sm:%s373]
                  %389 = vst [vmem:[%s381 + $0xc] sm:%s373] %v388
                  %v390 = vld [vmem:[%s380 + $0x10] sm:%s373]
                  %391 = vst [vmem:[%s381 + $0x10] sm:%s373] %v390
                  %v392 = vld [vmem:[%s380 + $0x14] sm:%s373]
                  %393 = vst [vmem:[%s381 + $0x14] sm:%s373] %v392
                  %v394 = vld [vmem:[%s380 + $0x18] sm:%s373]
                  %395 = vst [vmem:[%s381 + $0x18] sm:%s373] %v394
                  %v396 = vld [vmem:[%s380 + $0x1c] sm:%s373]
                  %397 = vst [vmem:[%s381 + $0x1c] sm:%s373] %v396
                  %v398 = vld [vmem:[%s380 + $0x20] sm:%s373]
                  %399 = vst [vmem:[%s381 + $0x20] sm:%s373] %v398
                  %v400 = vld [vmem:[%s380 + $0x24] sm:%s373]
                  %401 = vst [vmem:[%s381 + $0x24] sm:%s373] %v400
                  %v402 = vld [vmem:[%s380 + $0x28] sm:%s373]
                  %403 = vst [vmem:[%s381 + $0x28] sm:%s373] %v402
                  %v404 = vld [vmem:[%s380 + $0x2c] sm:%s373]
                  %405 = vst [vmem:[%s381 + $0x2c] sm:%s373] %v404
                  %v406 = vld [vmem:[%s380 + $0x30] sm:%s373]
                  %407 = vst [vmem:[%s381 + $0x30] sm:%s373] %v406
                  %v408 = vld [vmem:[%s380 + $0x34] sm:%s373]
                  %409 = vst [vmem:[%s381 + $0x34] sm:%s373] %v408
                  %v410 = vld [vmem:[%s380 + $0x38] sm:%s373]
                  %411 = vst [vmem:[%s381 + $0x38] sm:%s373] %v410
                  %v412 = vld [vmem:[%s380 + $0x3c] sm:%s373]
                  %413 = vst [vmem:[%s381 + $0x3c] sm:%s373] %v412
                  %v414 = vld [vmem:[%s380 + $0x40] sm:%s373]
                  %415 = vst [vmem:[%s381 + $0x40] sm:%s373] %v414
                  %v416 = vld [vmem:[%s380 + $0x44] sm:%s373]
                  %417 = vst [vmem:[%s381 + $0x44] sm:%s373] %v416
                  %v418 = vld [vmem:[%s380 + $0x48] sm:%s373]
                  %419 = vst [vmem:[%s381 + $0x48] sm:%s373] %v418
                  %v420 = vld [vmem:[%s380 + $0x4c] sm:%s373]
                  %421 = vst [vmem:[%s381 + $0x4c] sm:%s373] %v420
                  %v422 = vld [vmem:[%s380 + $0x50] sm:%s373]
                  %423 = vst [vmem:[%s381 + $0x50] sm:%s373] %v422
                  %v424 = vld [vmem:[%s380 + $0x54] sm:%s373]
                  %425 = vst [vmem:[%s381 + $0x54] sm:%s373] %v424
                  %v426 = vld [vmem:[%s380 + $0x58] sm:%s373]
                  %427 = vst [vmem:[%s381 + $0x58] sm:%s373] %v426
                  %v428 = vld [vmem:[%s380 + $0x5c] sm:%s373]
                  %429 = vst [vmem:[%s381 + $0x5c] sm:%s373] %v428
                  %v430 = vld [vmem:[%s380 + $0x60] sm:%s373]
                  %431 = vst [vmem:[%s381 + $0x60] sm:%s373] %v430
                  %v432 = vld [vmem:[%s380 + $0x64] sm:%s373]
                  %433 = vst [vmem:[%s381 + $0x64] sm:%s373] %v432
                  %v434 = vld [vmem:[%s380 + $0xd0] sm:%s373]
                  %435 = vst [vmem:[%s381 + $0x68] sm:%s373] %v434
                  %v436 = vld [vmem:[%s380 + $0xd4] sm:%s373]
                  %437 = vst [vmem:[%s381 + $0x6c] sm:%s373] %v436
                  %v438 = vld [vmem:[%s380 + $0xd8] sm:%s373]
                  %439 = vst [vmem:[%s381 + $0x70] sm:%s373] %v438
                  %v440 = vld [vmem:[%s380 + $0xdc] sm:%s373]
                  %441 = vst [vmem:[%s381 + $0x74] sm:%s373] %v440
                  %v442 = vld [vmem:[%s380 + $0xe0] sm:%s373]
                  %443 = vst [vmem:[%s381 + $0x78] sm:%s373] %v442
                  %v444 = vld [vmem:[%s380 + $0xe4] sm:%s373]
                  %445 = vst [vmem:[%s381 + $0x7c] sm:%s373] %v444
                  %v446 = vld [vmem:[%s380 + $0xe8] sm:%s373]
                  %447 = vst [vmem:[%s381 + $0x80] sm:%s373] %v446
                  %v448 = vld [vmem:[%s380 + $0xec] sm:%s373]
                  %449 = vst [vmem:[%s381 + $0x84] sm:%s373] %v448
                  %v450 = vld [vmem:[%s380 + $0xf0] sm:%s373]
                  %451 = vst [vmem:[%s381 + $0x88] sm:%s373] %v450
                  %v452 = vld [vmem:[%s380 + $0xf4] sm:%s373]
                  %453 = vst [vmem:[%s381 + $0x8c] sm:%s373] %v452
                  %v454 = vld [vmem:[%s380 + $0xf8] sm:%s373]
                  %455 = vst [vmem:[%s381 + $0x90] sm:%s373] %v454
                  %v456 = vld [vmem:[%s380 + $0xfc] sm:%s373]
                  %457 = vst [vmem:[%s381 + $0x94] sm:%s373] %v456
                  %v458 = vld [vmem:[%s380 + $0x100] sm:%s373]
                  %459 = vst [vmem:[%s381 + $0x98] sm:%s373] %v458
                  %v460 = vld [vmem:[%s380 + $0x104] sm:%s373]
                  %461 = vst [vmem:[%s381 + $0x9c] sm:%s373] %v460
                  %v462 = vld [vmem:[%s380 + $0x108] sm:%s373]
                  %463 = vst [vmem:[%s381 + $0xa0] sm:%s373] %v462
                  %v464 = vld [vmem:[%s380 + $0x10c] sm:%s373]
                  %465 = vst [vmem:[%s381 + $0xa4] sm:%s373] %v464
                  %v466 = vld [vmem:[%s380 + $0x110] sm:%s373]
                  %467 = vst [vmem:[%s381 + $0xa8] sm:%s373] %v466
                  %v468 = vld [vmem:[%s380 + $0x114] sm:%s373]
                  %469 = vst [vmem:[%s381 + $0xac] sm:%s373] %v468
                  %v470 = vld [vmem:[%s380 + $0x118] sm:%s373]
                  %471 = vst [vmem:[%s381 + $0xb0] sm:%s373] %v470
                  %v472 = vld [vmem:[%s380 + $0x11c] sm:%s373]
                  %473 = vst [vmem:[%s381 + $0xb4] sm:%s373] %v472
                  %v474 = vld [vmem:[%s380 + $0x120] sm:%s373]
                  %475 = vst [vmem:[%s381 + $0xb8] sm:%s373] %v474
                  %v476 = vld [vmem:[%s380 + $0x124] sm:%s373]
                  %477 = vst [vmem:[%s381 + $0xbc] sm:%s373] %v476
                  %v478 = vld [vmem:[%s380 + $0x128] sm:%s373]
                  %479 = vst [vmem:[%s381 + $0xc0] sm:%s373] %v478
                  %v480 = vld [vmem:[%s380 + $0x12c] sm:%s373]
                  %481 = vst [vmem:[%s381 + $0xc4] sm:%s373] %v480
                  %v482 = vld [vmem:[%s380 + $0x130] sm:%s373]
                  %483 = vst [vmem:[%s381 + $0xc8] sm:%s373] %v482
                  %v484 = vld [vmem:[%s380 + $0x134] sm:%s373]
                  %485 = vst [vmem:[%s381 + $0xcc] sm:%s373] %v484
                  %v486 = vld [vmem:[%s380 + $0x1a0] sm:%s373]
                  %487 = vst [vmem:[%s381 + $0xd0] sm:%s373] %v486
                  %v488 = vld [vmem:[%s380 + $0x1a4] sm:%s373]
                  %489 = vst [vmem:[%s381 + $0xd4] sm:%s373] %v488
                  %v490 = vld [vmem:[%s380 + $0x1a8] sm:%s373]
                  %491 = vst [vmem:[%s381 + $0xd8] sm:%s373] %v490
                  %v492 = vld [vmem:[%s380 + $0x1ac] sm:%s373]
                  %493 = vst [vmem:[%s381 + $0xdc] sm:%s373] %v492
                  %v494 = vld [vmem:[%s380 + $0x1b0] sm:%s373]
                  %495 = vst [vmem:[%s381 + $0xe0] sm:%s373] %v494
                  %v496 = vld [vmem:[%s380 + $0x1b4] sm:%s373]
                  %497 = vst [vmem:[%s381 + $0xe4] sm:%s373] %v496
                  %v498 = vld [vmem:[%s380 + $0x1b8] sm:%s373]
                  %499 = vst [vmem:[%s381 + $0xe8] sm:%s373] %v498
                  %v500 = vld [vmem:[%s380 + $0x1bc] sm:%s373]
                  %501 = vst [vmem:[%s381 + $0xec] sm:%s373] %v500
                  %v502 = vld [vmem:[%s380 + $0x1c0] sm:%s373]
                  %503 = vst [vmem:[%s381 + $0xf0] sm:%s373] %v502
                  %v504 = vld [vmem:[%s380 + $0x1c4] sm:%s373]
                  %505 = vst [vmem:[%s381 + $0xf4] sm:%s373] %v504
                  %v506 = vld [vmem:[%s380 + $0x1c8] sm:%s373]
                  %507 = vst [vmem:[%s381 + $0xf8] sm:%s373] %v506
                  %v508 = vld [vmem:[%s380 + $0x1cc] sm:%s373]
                  %509 = vst [vmem:[%s381 + $0xfc] sm:%s373] %v508
                  %v510 = vld [vmem:[%s380 + $0x1d0] sm:%s373]
                  %511 = vst [vmem:[%s381 + $0x100] sm:%s373] %v510
                  %v512 = vld [vmem:[%s380 + $0x1d4] sm:%s373]
                  %513 = vst [vmem:[%s381 + $0x104] sm:%s373] %v512
                  %v514 = vld [vmem:[%s380 + $0x1d8] sm:%s373]
                  %515 = vst [vmem:[%s381 + $0x108] sm:%s373] %v514
                  %v516 = vld [vmem:[%s380 + $0x1dc] sm:%s373]
                  %517 = vst [vmem:[%s381 + $0x10c] sm:%s373] %v516
                  %v518 = vld [vmem:[%s380 + $0x1e0] sm:%s373]
                  %519 = vst [vmem:[%s381 + $0x110] sm:%s373] %v518
                  %v520 = vld [vmem:[%s380 + $0x1e4] sm:%s373]
                  %521 = vst [vmem:[%s381 + $0x114] sm:%s373] %v520
                  %v522 = vld [vmem:[%s380 + $0x1e8] sm:%s373]
                  %523 = vst [vmem:[%s381 + $0x118] sm:%s373] %v522
                  %v524 = vld [vmem:[%s380 + $0x1ec] sm:%s373]
                  %525 = vst [vmem:[%s381 + $0x11c] sm:%s373] %v524
                  %v526 = vld [vmem:[%s380 + $0x1f0] sm:%s373]
                  %527 = vst [vmem:[%s381 + $0x120] sm:%s373] %v526
                  %v528 = vld [vmem:[%s380 + $0x1f4] sm:%s373]
                  %529 = vst [vmem:[%s381 + $0x124] sm:%s373] %v528
                  %v530 = vld [vmem:[%s380 + $0x1f8] sm:%s373]
                  %531 = vst [vmem:[%s381 + $0x128] sm:%s373] %v530
                  %v532 = vld [vmem:[%s380 + $0x1fc] sm:%s373]
                  %533 = vst [vmem:[%s381 + $0x12c] sm:%s373] %v532
                  %v534 = vld [vmem:[%s380 + $0x200] sm:%s373]
                  %535 = vst [vmem:[%s381 + $0x130] sm:%s373] %v534
                  %v536 = vld [vmem:[%s380 + $0x204] sm:%s373]
                  %537 = vst [vmem:[%s381 + $0x134] sm:%s373] %v536
                  %v538 = vld [vmem:[%s380 + $0x270] sm:%s373]
                  %539 = vst [vmem:[%s381 + $0x138] sm:%s373] %v538
                  %v540 = vld [vmem:[%s380 + $0x274] sm:%s373]
                  %541 = vst [vmem:[%s381 + $0x13c] sm:%s373] %v540
                  %v542 = vld [vmem:[%s380 + $0x278] sm:%s373]
                  %543 = vst [vmem:[%s381 + $0x140] sm:%s373] %v542
                  %v544 = vld [vmem:[%s380 + $0x27c] sm:%s373]
                  %545 = vst [vmem:[%s381 + $0x144] sm:%s373] %v544
                  %v546 = vld [vmem:[%s380 + $0x280] sm:%s373]
                  %547 = vst [vmem:[%s381 + $0x148] sm:%s373] %v546
                  %v548 = vld [vmem:[%s380 + $0x284] sm:%s373]
                  %549 = vst [vmem:[%s381 + $0x14c] sm:%s373] %v548
                  %v550 = vld [vmem:[%s380 + $0x288] sm:%s373]
                  %551 = vst [vmem:[%s381 + $0x150] sm:%s373] %v550
                  %v552 = vld [vmem:[%s380 + $0x28c] sm:%s373]
                  %553 = vst [vmem:[%s381 + $0x154] sm:%s373] %v552
                  %v554 = vld [vmem:[%s380 + $0x290] sm:%s373]
                  %555 = vst [vmem:[%s381 + $0x158] sm:%s373] %v554
                  %v556 = vld [vmem:[%s380 + $0x294] sm:%s373]
                  %557 = vst [vmem:[%s381 + $0x15c] sm:%s373] %v556
                  %v558 = vld [vmem:[%s380 + $0x298] sm:%s373]
                  %559 = vst [vmem:[%s381 + $0x160] sm:%s373] %v558
                  %v560 = vld [vmem:[%s380 + $0x29c] sm:%s373]
                  %561 = vst [vmem:[%s381 + $0x164] sm:%s373] %v560
                  %v562 = vld [vmem:[%s380 + $0x2a0] sm:%s373]
                  %563 = vst [vmem:[%s381 + $0x168] sm:%s373] %v562
                  %v564 = vld [vmem:[%s380 + $0x2a4] sm:%s373]
                  %565 = vst [vmem:[%s381 + $0x16c] sm:%s373] %v564
                  %v566 = vld [vmem:[%s380 + $0x2a8] sm:%s373]
                  %567 = vst [vmem:[%s381 + $0x170] sm:%s373] %v566
                  %v568 = vld [vmem:[%s380 + $0x2ac] sm:%s373]
                  %569 = vst [vmem:[%s381 + $0x174] sm:%s373] %v568
                  %v570 = vld [vmem:[%s380 + $0x2b0] sm:%s373]
                  %571 = vst [vmem:[%s381 + $0x178] sm:%s373] %v570
                  %v572 = vld [vmem:[%s380 + $0x2b4] sm:%s373]
                  %573 = vst [vmem:[%s381 + $0x17c] sm:%s373] %v572
                  %v574 = vld [vmem:[%s380 + $0x2b8] sm:%s373]
                  %575 = vst [vmem:[%s381 + $0x180] sm:%s373] %v574
                  %v576 = vld [vmem:[%s380 + $0x2bc] sm:%s373]
                  %577 = vst [vmem:[%s381 + $0x184] sm:%s373] %v576
                  %v578 = vld [vmem:[%s380 + $0x2c0] sm:%s373]
                  %579 = vst [vmem:[%s381 + $0x188] sm:%s373] %v578
                  %v580 = vld [vmem:[%s380 + $0x2c4] sm:%s373]
                  %581 = vst [vmem:[%s381 + $0x18c] sm:%s373] %v580
                  %v582 = vld [vmem:[%s380 + $0x2c8] sm:%s373]
                  %583 = vst [vmem:[%s381 + $0x190] sm:%s373] %v582
                  %v584 = vld [vmem:[%s380 + $0x2cc] sm:%s373]
                  %585 = vst [vmem:[%s381 + $0x194] sm:%s373] %v584
                  %v586 = vld [vmem:[%s380 + $0x2d0] sm:%s373]
                  %587 = vst [vmem:[%s381 + $0x198] sm:%s373] %v586
                  %v588 = vld [vmem:[%s380 + $0x2d4] sm:%s373]
                  %589 = vst [vmem:[%s381 + $0x19c] sm:%s373] %v588
                $region63: #{cnn_forward.3} parent=50 // loop_footer
                  %s379 = sadd.s32 1, %s375
                $region64: #{cnn_forward.3} parent=50 // loop_footer_branch
                  %374 = sbr.rel target = $region60
                $region65: #{cnn_forward.3} parent=50 // loop_exit
                  _
              $region51: #{cnn_forward.3} parent=35 // pred_fallthru
                _
            $region36: #{cnn_forward.3} parent=31 // pred_fallthru
              _
            // Predicated region
            $region37: #{cnn_forward.3} parent=31 // pred_check
              _
            $region38: #{cnn_forward.3} parent=31 // pred_check_branch
              %143 = sbr.rel (0) target = $region40
            $region39: #{cnn_forward.3} parent=31 // pred_region
              %s145 = ssub.s32 16, 1
              loop: start=0, step=1, limit=1
              $region41: #{cnn_forward.3} parent=39 // loop_pre_header
                _
              $region42: #{cnn_forward.3} parent=39 // loop_header
                %s147 = sphi 0, %s151
                %p148 = scmp.ge.s32.totalorder %s147, 1
                %s152 = sphi %s137, %s137
                %s153 = sphi %s134, %s134
              $region43: #{cnn_forward.3} parent=39 // loop_header_branch
                %150 = sbr.rel (%p148) target = $region47
              $region44: #{cnn_forward.3} parent=39 // loop_body
                %v154 = vld [vmem:[%s152] sm:%s145]
                %155 = vst [vmem:[%s153] sm:%s145] %v154
                %v156 = vld [vmem:[%s152 + $0x4] sm:%s145]
                %157 = vst [vmem:[%s153 + $0x4] sm:%s145] %v156
                %v158 = vld [vmem:[%s152 + $0x8] sm:%s145]
                %159 = vst [vmem:[%s153 + $0x8] sm:%s145] %v158
                %v160 = vld [vmem:[%s152 + $0xc] sm:%s145]
                %161 = vst [vmem:[%s153 + $0xc] sm:%s145] %v160
                %v162 = vld [vmem:[%s152 + $0x10] sm:%s145]
                %163 = vst [vmem:[%s153 + $0x10] sm:%s145] %v162
                %v164 = vld [vmem:[%s152 + $0x14] sm:%s145]
                %165 = vst [vmem:[%s153 + $0x14] sm:%s145] %v164
                %v166 = vld [vmem:[%s152 + $0x18] sm:%s145]
                %167 = vst [vmem:[%s153 + $0x18] sm:%s145] %v166
                %v168 = vld [vmem:[%s152 + $0x1c] sm:%s145]
                %169 = vst [vmem:[%s153 + $0x1c] sm:%s145] %v168
                %v170 = vld [vmem:[%s152 + $0x20] sm:%s145]
                %171 = vst [vmem:[%s153 + $0x20] sm:%s145] %v170
                %v172 = vld [vmem:[%s152 + $0x24] sm:%s145]
                %173 = vst [vmem:[%s153 + $0x24] sm:%s145] %v172
                %v174 = vld [vmem:[%s152 + $0x28] sm:%s145]
                %175 = vst [vmem:[%s153 + $0x28] sm:%s145] %v174
                %v176 = vld [vmem:[%s152 + $0x2c] sm:%s145]
                %177 = vst [vmem:[%s153 + $0x2c] sm:%s145] %v176
                %v178 = vld [vmem:[%s152 + $0x30] sm:%s145]
                %179 = vst [vmem:[%s153 + $0x30] sm:%s145] %v178
                %v180 = vld [vmem:[%s152 + $0x34] sm:%s145]
                %181 = vst [vmem:[%s153 + $0x34] sm:%s145] %v180
                %v182 = vld [vmem:[%s152 + $0x38] sm:%s145]
                %183 = vst [vmem:[%s153 + $0x38] sm:%s145] %v182
                %v184 = vld [vmem:[%s152 + $0x3c] sm:%s145]
                %185 = vst [vmem:[%s153 + $0x3c] sm:%s145] %v184
                %v186 = vld [vmem:[%s152 + $0x40] sm:%s145]
                %187 = vst [vmem:[%s153 + $0x40] sm:%s145] %v186
                %v188 = vld [vmem:[%s152 + $0x44] sm:%s145]
                %189 = vst [vmem:[%s153 + $0x44] sm:%s145] %v188
                %v190 = vld [vmem:[%s152 + $0x48] sm:%s145]
                %191 = vst [vmem:[%s153 + $0x48] sm:%s145] %v190
                %v192 = vld [vmem:[%s152 + $0x4c] sm:%s145]
                %193 = vst [vmem:[%s153 + $0x4c] sm:%s145] %v192
                %v194 = vld [vmem:[%s152 + $0x50] sm:%s145]
                %195 = vst [vmem:[%s153 + $0x50] sm:%s145] %v194
                %v196 = vld [vmem:[%s152 + $0x54] sm:%s145]
                %197 = vst [vmem:[%s153 + $0x54] sm:%s145] %v196
                %v198 = vld [vmem:[%s152 + $0x58] sm:%s145]
                %199 = vst [vmem:[%s153 + $0x58] sm:%s145] %v198
                %v200 = vld [vmem:[%s152 + $0x5c] sm:%s145]
                %201 = vst [vmem:[%s153 + $0x5c] sm:%s145] %v200
                %v202 = vld [vmem:[%s152 + $0x60] sm:%s145]
                %203 = vst [vmem:[%s153 + $0x60] sm:%s145] %v202
                %v204 = vld [vmem:[%s152 + $0x64] sm:%s145]
                %205 = vst [vmem:[%s153 + $0x64] sm:%s145] %v204
                %v206 = vld [vmem:[%s152 + $0xd0] sm:%s145]
                %207 = vst [vmem:[%s153 + $0x68] sm:%s145] %v206
                %v208 = vld [vmem:[%s152 + $0xd4] sm:%s145]
                %209 = vst [vmem:[%s153 + $0x6c] sm:%s145] %v208
                %v210 = vld [vmem:[%s152 + $0xd8] sm:%s145]
                %211 = vst [vmem:[%s153 + $0x70] sm:%s145] %v210
                %v212 = vld [vmem:[%s152 + $0xdc] sm:%s145]
                %213 = vst [vmem:[%s153 + $0x74] sm:%s145] %v212
                %v214 = vld [vmem:[%s152 + $0xe0] sm:%s145]
                %215 = vst [vmem:[%s153 + $0x78] sm:%s145] %v214
                %v216 = vld [vmem:[%s152 + $0xe4] sm:%s145]
                %217 = vst [vmem:[%s153 + $0x7c] sm:%s145] %v216
                %v218 = vld [vmem:[%s152 + $0xe8] sm:%s145]
                %219 = vst [vmem:[%s153 + $0x80] sm:%s145] %v218
                %v220 = vld [vmem:[%s152 + $0xec] sm:%s145]
                %221 = vst [vmem:[%s153 + $0x84] sm:%s145] %v220
                %v222 = vld [vmem:[%s152 + $0xf0] sm:%s145]
                %223 = vst [vmem:[%s153 + $0x88] sm:%s145] %v222
                %v224 = vld [vmem:[%s152 + $0xf4] sm:%s145]
                %225 = vst [vmem:[%s153 + $0x8c] sm:%s145] %v224
                %v226 = vld [vmem:[%s152 + $0xf8] sm:%s145]
                %227 = vst [vmem:[%s153 + $0x90] sm:%s145] %v226
                %v228 = vld [vmem:[%s152 + $0xfc] sm:%s145]
                %229 = vst [vmem:[%s153 + $0x94] sm:%s145] %v228
                %v230 = vld [vmem:[%s152 + $0x100] sm:%s145]
                %231 = vst [vmem:[%s153 + $0x98] sm:%s145] %v230
                %v232 = vld [vmem:[%s152 + $0x104] sm:%s145]
                %233 = vst [vmem:[%s153 + $0x9c] sm:%s145] %v232
                %v234 = vld [vmem:[%s152 + $0x108] sm:%s145]
                %235 = vst [vmem:[%s153 + $0xa0] sm:%s145] %v234
                %v236 = vld [vmem:[%s152 + $0x10c] sm:%s145]
                %237 = vst [vmem:[%s153 + $0xa4] sm:%s145] %v236
                %v238 = vld [vmem:[%s152 + $0x110] sm:%s145]
                %239 = vst [vmem:[%s153 + $0xa8] sm:%s145] %v238
                %v240 = vld [vmem:[%s152 + $0x114] sm:%s145]
                %241 = vst [vmem:[%s153 + $0xac] sm:%s145] %v240
                %v242 = vld [vmem:[%s152 + $0x118] sm:%s145]
                %243 = vst [vmem:[%s153 + $0xb0] sm:%s145] %v242
                %v244 = vld [vmem:[%s152 + $0x11c] sm:%s145]
                %245 = vst [vmem:[%s153 + $0xb4] sm:%s145] %v244
                %v246 = vld [vmem:[%s152 + $0x120] sm:%s145]
                %247 = vst [vmem:[%s153 + $0xb8] sm:%s145] %v246
                %v248 = vld [vmem:[%s152 + $0x124] sm:%s145]
                %249 = vst [vmem:[%s153 + $0xbc] sm:%s145] %v248
                %v250 = vld [vmem:[%s152 + $0x128] sm:%s145]
                %251 = vst [vmem:[%s153 + $0xc0] sm:%s145] %v250
                %v252 = vld [vmem:[%s152 + $0x12c] sm:%s145]
                %253 = vst [vmem:[%s153 + $0xc4] sm:%s145] %v252
                %v254 = vld [vmem:[%s152 + $0x130] sm:%s145]
                %255 = vst [vmem:[%s153 + $0xc8] sm:%s145] %v254
                %v256 = vld [vmem:[%s152 + $0x134] sm:%s145]
                %257 = vst [vmem:[%s153 + $0xcc] sm:%s145] %v256
                %v258 = vld [vmem:[%s152 + $0x1a0] sm:%s145]
                %259 = vst [vmem:[%s153 + $0xd0] sm:%s145] %v258
                %v260 = vld [vmem:[%s152 + $0x1a4] sm:%s145]
                %261 = vst [vmem:[%s153 + $0xd4] sm:%s145] %v260
                %v262 = vld [vmem:[%s152 + $0x1a8] sm:%s145]
                %263 = vst [vmem:[%s153 + $0xd8] sm:%s145] %v262
                %v264 = vld [vmem:[%s152 + $0x1ac] sm:%s145]
                %265 = vst [vmem:[%s153 + $0xdc] sm:%s145] %v264
                %v266 = vld [vmem:[%s152 + $0x1b0] sm:%s145]
                %267 = vst [vmem:[%s153 + $0xe0] sm:%s145] %v266
                %v268 = vld [vmem:[%s152 + $0x1b4] sm:%s145]
                %269 = vst [vmem:[%s153 + $0xe4] sm:%s145] %v268
                %v270 = vld [vmem:[%s152 + $0x1b8] sm:%s145]
                %271 = vst [vmem:[%s153 + $0xe8] sm:%s145] %v270
                %v272 = vld [vmem:[%s152 + $0x1bc] sm:%s145]
                %273 = vst [vmem:[%s153 + $0xec] sm:%s145] %v272
                %v274 = vld [vmem:[%s152 + $0x1c0] sm:%s145]
                %275 = vst [vmem:[%s153 + $0xf0] sm:%s145] %v274
                %v276 = vld [vmem:[%s152 + $0x1c4] sm:%s145]
                %277 = vst [vmem:[%s153 + $0xf4] sm:%s145] %v276
                %v278 = vld [vmem:[%s152 + $0x1c8] sm:%s145]
                %279 = vst [vmem:[%s153 + $0xf8] sm:%s145] %v278
                %v280 = vld [vmem:[%s152 + $0x1cc] sm:%s145]
                %281 = vst [vmem:[%s153 + $0xfc] sm:%s145] %v280
                %v282 = vld [vmem:[%s152 + $0x1d0] sm:%s145]
                %283 = vst [vmem:[%s153 + $0x100] sm:%s145] %v282
                %v284 = vld [vmem:[%s152 + $0x1d4] sm:%s145]
                %285 = vst [vmem:[%s153 + $0x104] sm:%s145] %v284
                %v286 = vld [vmem:[%s152 + $0x1d8] sm:%s145]
                %287 = vst [vmem:[%s153 + $0x108] sm:%s145] %v286
                %v288 = vld [vmem:[%s152 + $0x1dc] sm:%s145]
                %289 = vst [vmem:[%s153 + $0x10c] sm:%s145] %v288
                %v290 = vld [vmem:[%s152 + $0x1e0] sm:%s145]
                %291 = vst [vmem:[%s153 + $0x110] sm:%s145] %v290
                %v292 = vld [vmem:[%s152 + $0x1e4] sm:%s145]
                %293 = vst [vmem:[%s153 + $0x114] sm:%s145] %v292
                %v294 = vld [vmem:[%s152 + $0x1e8] sm:%s145]
                %295 = vst [vmem:[%s153 + $0x118] sm:%s145] %v294
                %v296 = vld [vmem:[%s152 + $0x1ec] sm:%s145]
                %297 = vst [vmem:[%s153 + $0x11c] sm:%s145] %v296
                %v298 = vld [vmem:[%s152 + $0x1f0] sm:%s145]
                %299 = vst [vmem:[%s153 + $0x120] sm:%s145] %v298
                %v300 = vld [vmem:[%s152 + $0x1f4] sm:%s145]
                %301 = vst [vmem:[%s153 + $0x124] sm:%s145] %v300
                %v302 = vld [vmem:[%s152 + $0x1f8] sm:%s145]
                %303 = vst [vmem:[%s153 + $0x128] sm:%s145] %v302
                %v304 = vld [vmem:[%s152 + $0x1fc] sm:%s145]
                %305 = vst [vmem:[%s153 + $0x12c] sm:%s145] %v304
                %v306 = vld [vmem:[%s152 + $0x200] sm:%s145]
                %307 = vst [vmem:[%s153 + $0x130] sm:%s145] %v306
                %v308 = vld [vmem:[%s152 + $0x204] sm:%s145]
                %309 = vst [vmem:[%s153 + $0x134] sm:%s145] %v308
                %v310 = vld [vmem:[%s152 + $0x270] sm:%s145]
                %311 = vst [vmem:[%s153 + $0x138] sm:%s145] %v310
                %v312 = vld [vmem:[%s152 + $0x274] sm:%s145]
                %313 = vst [vmem:[%s153 + $0x13c] sm:%s145] %v312
                %v314 = vld [vmem:[%s152 + $0x278] sm:%s145]
                %315 = vst [vmem:[%s153 + $0x140] sm:%s145] %v314
                %v316 = vld [vmem:[%s152 + $0x27c] sm:%s145]
                %317 = vst [vmem:[%s153 + $0x144] sm:%s145] %v316
                %v318 = vld [vmem:[%s152 + $0x280] sm:%s145]
                %319 = vst [vmem:[%s153 + $0x148] sm:%s145] %v318
                %v320 = vld [vmem:[%s152 + $0x284] sm:%s145]
                %321 = vst [vmem:[%s153 + $0x14c] sm:%s145] %v320
                %v322 = vld [vmem:[%s152 + $0x288] sm:%s145]
                %323 = vst [vmem:[%s153 + $0x150] sm:%s145] %v322
                %v324 = vld [vmem:[%s152 + $0x28c] sm:%s145]
                %325 = vst [vmem:[%s153 + $0x154] sm:%s145] %v324
                %v326 = vld [vmem:[%s152 + $0x290] sm:%s145]
                %327 = vst [vmem:[%s153 + $0x158] sm:%s145] %v326
                %v328 = vld [vmem:[%s152 + $0x294] sm:%s145]
                %329 = vst [vmem:[%s153 + $0x15c] sm:%s145] %v328
                %v330 = vld [vmem:[%s152 + $0x298] sm:%s145]
                %331 = vst [vmem:[%s153 + $0x160] sm:%s145] %v330
                %v332 = vld [vmem:[%s152 + $0x29c] sm:%s145]
                %333 = vst [vmem:[%s153 + $0x164] sm:%s145] %v332
                %v334 = vld [vmem:[%s152 + $0x2a0] sm:%s145]
                %335 = vst [vmem:[%s153 + $0x168] sm:%s145] %v334
                %v336 = vld [vmem:[%s152 + $0x2a4] sm:%s145]
                %337 = vst [vmem:[%s153 + $0x16c] sm:%s145] %v336
                %v338 = vld [vmem:[%s152 + $0x2a8] sm:%s145]
                %339 = vst [vmem:[%s153 + $0x170] sm:%s145] %v338
                %v340 = vld [vmem:[%s152 + $0x2ac] sm:%s145]
                %341 = vst [vmem:[%s153 + $0x174] sm:%s145] %v340
                %v342 = vld [vmem:[%s152 + $0x2b0] sm:%s145]
                %343 = vst [vmem:[%s153 + $0x178] sm:%s145] %v342
                %v344 = vld [vmem:[%s152 + $0x2b4] sm:%s145]
                %345 = vst [vmem:[%s153 + $0x17c] sm:%s145] %v344
                %v346 = vld [vmem:[%s152 + $0x2b8] sm:%s145]
                %347 = vst [vmem:[%s153 + $0x180] sm:%s145] %v346
                %v348 = vld [vmem:[%s152 + $0x2bc] sm:%s145]
                %349 = vst [vmem:[%s153 + $0x184] sm:%s145] %v348
                %v350 = vld [vmem:[%s152 + $0x2c0] sm:%s145]
                %351 = vst [vmem:[%s153 + $0x188] sm:%s145] %v350
                %v352 = vld [vmem:[%s152 + $0x2c4] sm:%s145]
                %353 = vst [vmem:[%s153 + $0x18c] sm:%s145] %v352
                %v354 = vld [vmem:[%s152 + $0x2c8] sm:%s145]
                %355 = vst [vmem:[%s153 + $0x190] sm:%s145] %v354
                %v356 = vld [vmem:[%s152 + $0x2cc] sm:%s145]
                %357 = vst [vmem:[%s153 + $0x194] sm:%s145] %v356
                %v358 = vld [vmem:[%s152 + $0x2d0] sm:%s145]
                %359 = vst [vmem:[%s153 + $0x198] sm:%s145] %v358
                %v360 = vld [vmem:[%s152 + $0x2d4] sm:%s145]
                %361 = vst [vmem:[%s153 + $0x19c] sm:%s145] %v360
              $region45: #{cnn_forward.3} parent=39 // loop_footer
                %s151 = sadd.s32 1, %s147
              $region46: #{cnn_forward.3} parent=39 // loop_footer_branch
                %146 = sbr.rel target = $region42
              $region47: #{cnn_forward.3} parent=39 // loop_exit
                _
            $region40: #{cnn_forward.3} parent=31 // pred_fallthru
              _
          $region32: #{cnn_forward.3} parent=27 // pred_fallthru
            _
          %590 = vnop
        $region28: #{cnn_forward.3} parent=23 // pred_fallthru
          _
      $region24: #{cnn_forward.3} parent=5 // pred_fallthru
        _
      %p591 = scmp.le.s32.totalorder 1, %s9
      %p592 = scmp.lt.s32.totalorder %s9, 3
      %p593 = pnand %p591, %p592
      %p594 = pneg %p593
      // Predicated region
      $region66: #{cnn_forward.3} parent=5 // pred_check
        _
      $region67: #{cnn_forward.3} parent=5 // pred_check_branch
        %596 = sbr.rel (%p593) target = $region69
      $region68: #{cnn_forward.3} parent=5 // pred_region
        %s597 = ssub.s32 %s9, 1
        %s598 = sand.u32 %s22, 1
        %s599 = sand.u32 %s22, 1
        %s600 = smul.addr %s599, 416
        %s601 = scalar_lea.vmem [#allocation2], %s600
        // Predicated region
        $region70: #{cnn_forward.3} parent=68 // pred_check
          %p602 = pneg %p35
        $region71: #{cnn_forward.3} parent=68 // pred_check_branch
          %604 = sbr.rel (%p602) target = $region73
        $region72: #{cnn_forward.3} parent=68 // pred_region
          _
        $region73: #{cnn_forward.3} parent=68 // pred_fallthru
          _
        %s605 = sand.u32 %s22, 1
        %s606 = sand.u32 %s22, 1
        %s607 = smul.addr %s606, 416
        %s608 = scalar_lea.vmem [#allocation2], %s607
        %p609 = pneg %p35
        %p610 = pneg %p32
        %p611 = pneg %p56
        %p612 = pneg %p53
        %p613 = pneg %p77
        %p614 = pneg %p74
        %p615 = pneg %p103
        %p616 = pneg %p100
        %s617 = smul.u32 26, %s14
        %p618 = scmp.lt.s32.totalorder %s617, 51
        %s619 = scalar_select %p618, %s617, 51
        %s620 = smul.addr %s619, 4
        %s621 = scalar_lea.vmem %s3, %s620
        %s622 = smul.u32 26, %s14
        %s623 = smul.u32 26, %s14
        %p624 = scmp.lt.s32.totalorder %s623, 51
        %s625 = scalar_select %p624, %s623, 51
        %s626 = smul.addr %s625, 4
        %s627 = scalar_lea.vmem %s3, %s626
        %s628 = smul.u32 26, %s14
        %v630 = vld [vmem:[%s601] sm:$0xf]
        %v631 = vld [vmem:[%s601 + $0x4] sm:$0xf]
        %v632 = vld [vmem:[%s601 + $0x8] sm:$0xf]
        %v633 = vld [vmem:[%s601 + $0xc] sm:$0xf]
        %v634 = vld [vmem:[%s601 + $0x10] sm:$0xf]
        %v635 = vld [vmem:[%s601 + $0x14] sm:$0xf]
        %v636 = vld [vmem:[%s601 + $0x18] sm:$0xf]
        %v637 = vld [vmem:[%s601 + $0x1c] sm:$0xf]
        %v638 = vld [vmem:[%s601 + $0x20] sm:$0xf]
        %v639 = vld [vmem:[%s601 + $0x24] sm:$0xf]
        %v640 = vld [vmem:[%s601 + $0x28] sm:$0xf]
        %v641 = vld [vmem:[%s601 + $0x2c] sm:$0xf]
        %v642 = vld [vmem:[%s601 + $0x30] sm:$0xf]
        %v643 = vld [vmem:[%s601 + $0x34] sm:$0xf]
        %v644 = vld [vmem:[%s601 + $0x38] sm:$0xf]
        %v645 = vld [vmem:[%s601 + $0x3c] sm:$0xf]
        %v646 = vld [vmem:[%s601 + $0x40] sm:$0xf]
        %v647 = vld [vmem:[%s601 + $0x44] sm:$0xf]
        %v648 = vld [vmem:[%s601 + $0x48] sm:$0xf]
        %v649 = vld [vmem:[%s601 + $0x4c] sm:$0xf]
        %v650 = vld [vmem:[%s601 + $0x50] sm:$0xf]
        %v651 = vld [vmem:[%s601 + $0x54] sm:$0xf]
        %v652 = vld [vmem:[%s601 + $0x58] sm:$0xf]
        %v653 = vld [vmem:[%s601 + $0x5c] sm:$0xf]
        %v654 = vld [vmem:[%s601 + $0x60] sm:$0xf]
        %v655 = vld [vmem:[%s601 + $0x64] sm:$0xf]
        %v656 = vld [vmem:[%s601 + $0x68] sm:$0xf]
        %v657 = vld [vmem:[%s601 + $0x6c] sm:$0xf]
        %v658 = vld [vmem:[%s601 + $0x70] sm:$0xf]
        %v659 = vld [vmem:[%s601 + $0x74] sm:$0xf]
        %v660 = vld [vmem:[%s601 + $0x78] sm:$0xf]
        %v661 = vld [vmem:[%s601 + $0x7c] sm:$0xf]
        %v662 = vld [vmem:[%s601 + $0x80] sm:$0xf]
        %v663 = vld [vmem:[%s601 + $0x84] sm:$0xf]
        %v664 = vld [vmem:[%s601 + $0x88] sm:$0xf]
        %v665 = vld [vmem:[%s601 + $0x8c] sm:$0xf]
        %v666 = vld [vmem:[%s601 + $0x90] sm:$0xf]
        %v667 = vld [vmem:[%s601 + $0x94] sm:$0xf]
        %v668 = vld [vmem:[%s601 + $0x98] sm:$0xf]
        %v669 = vld [vmem:[%s601 + $0x9c] sm:$0xf]
        %v670 = vld [vmem:[%s601 + $0xa0] sm:$0xf]
        %v671 = vld [vmem:[%s601 + $0xa4] sm:$0xf]
        %v672 = vld [vmem:[%s601 + $0xa8] sm:$0xf]
        %v673 = vld [vmem:[%s601 + $0xac] sm:$0xf]
        %v674 = vld [vmem:[%s601 + $0xb0] sm:$0xf]
        %v675 = vld [vmem:[%s601 + $0xb4] sm:$0xf]
        %v676 = vld [vmem:[%s601 + $0xb8] sm:$0xf]
        %v677 = vld [vmem:[%s601 + $0xbc] sm:$0xf]
        %v678 = vld [vmem:[%s601 + $0xc0] sm:$0xf]
        %v679 = vld [vmem:[%s601 + $0xc4] sm:$0xf]
        %v680 = vld [vmem:[%s601 + $0xc8] sm:$0xf]
        %v681 = vld [vmem:[%s601 + $0xcc] sm:$0xf]
        %v682 = vld [vmem:[%s601 + $0xd0] sm:$0xf]
        %v683 = vld [vmem:[%s601 + $0xd4] sm:$0xf]
        %v684 = vld [vmem:[%s601 + $0xd8] sm:$0xf]
        %v685 = vld [vmem:[%s601 + $0xdc] sm:$0xf]
        %v686 = vld [vmem:[%s601 + $0xe0] sm:$0xf]
        %v687 = vld [vmem:[%s601 + $0xe4] sm:$0xf]
        %v688 = vld [vmem:[%s601 + $0xe8] sm:$0xf]
        %v689 = vld [vmem:[%s601 + $0xec] sm:$0xf]
        %v690 = vld [vmem:[%s601 + $0xf0] sm:$0xf]
        %v691 = vld [vmem:[%s601 + $0xf4] sm:$0xf]
        %v692 = vld [vmem:[%s601 + $0xf8] sm:$0xf]
        %v693 = vld [vmem:[%s601 + $0xfc] sm:$0xf]
        %v694 = vld [vmem:[%s601 + $0x100] sm:$0xf]
        %v695 = vld [vmem:[%s601 + $0x104] sm:$0xf]
        %v696 = vld [vmem:[%s601 + $0x108] sm:$0xf]
        %v697 = vld [vmem:[%s601 + $0x10c] sm:$0xf]
        %v698 = vld [vmem:[%s601 + $0x110] sm:$0xf]
        %v699 = vld [vmem:[%s601 + $0x114] sm:$0xf]
        %v700 = vld [vmem:[%s601 + $0x118] sm:$0xf]
        %v701 = vld [vmem:[%s601 + $0x11c] sm:$0xf]
        %v702 = vld [vmem:[%s601 + $0x120] sm:$0xf]
        %v703 = vld [vmem:[%s601 + $0x124] sm:$0xf]
        %v704 = vld [vmem:[%s601 + $0x128] sm:$0xf]
        %v705 = vld [vmem:[%s601 + $0x12c] sm:$0xf]
        %v706 = vld [vmem:[%s601 + $0x130] sm:$0xf]
        %v707 = vld [vmem:[%s601 + $0x134] sm:$0xf]
        %v708 = vld [vmem:[%s601 + $0x138] sm:$0xf]
        %v709 = vld [vmem:[%s601 + $0x13c] sm:$0xf]
        %v710 = vld [vmem:[%s601 + $0x140] sm:$0xf]
        %v711 = vld [vmem:[%s601 + $0x144] sm:$0xf]
        %v712 = vld [vmem:[%s601 + $0x148] sm:$0xf]
        %v713 = vld [vmem:[%s601 + $0x14c] sm:$0xf]
        %v714 = vld [vmem:[%s601 + $0x150] sm:$0xf]
        %v715 = vld [vmem:[%s601 + $0x154] sm:$0xf]
        %v716 = vld [vmem:[%s601 + $0x158] sm:$0xf]
        %v717 = vld [vmem:[%s601 + $0x15c] sm:$0xf]
        %v718 = vld [vmem:[%s601 + $0x160] sm:$0xf]
        %v719 = vld [vmem:[%s601 + $0x164] sm:$0xf]
        %v720 = vld [vmem:[%s601 + $0x168] sm:$0xf]
        %v721 = vld [vmem:[%s601 + $0x16c] sm:$0xf]
        %v722 = vld [vmem:[%s601 + $0x170] sm:$0xf]
        %v723 = vld [vmem:[%s601 + $0x174] sm:$0xf]
        %v724 = vld [vmem:[%s601 + $0x178] sm:$0xf]
        %v725 = vld [vmem:[%s601 + $0x17c] sm:$0xf]
        %v726 = vld [vmem:[%s601 + $0x180] sm:$0xf]
        %v727 = vld [vmem:[%s601 + $0x184] sm:$0xf]
        %v728 = vld [vmem:[%s601 + $0x188] sm:$0xf]
        %v729 = vld [vmem:[%s601 + $0x18c] sm:$0xf]
        %v730 = vld [vmem:[%s601 + $0x190] sm:$0xf]
        %v731 = vld [vmem:[%s601 + $0x194] sm:$0xf]
        %v732 = vld [vmem:[%s601 + $0x198] sm:$0xf]
        %v733 = vld [vmem:[%s601 + $0x19c] sm:$0xf]
        %v734 = vld [vmem:[%s1] sm:$0xf]
        %v735 = vld [vmem:[%s1 + $0x4] sm:$0xf]
        %v736 = vld [vmem:[%s1 + $0x8] sm:$0xf]
        %v737 = vld [vmem:[%s1 + $0xc] sm:$0x1]
        %v842 = vunpack.c.l.b16 %v630
        %v843 = vunpack.c.l.b16 %v631
        %v844 = vunpack.c.l.b16 %v632
        %v845 = vunpack.c.l.b16 %v633
        %v846 = vunpack.c.l.b16 %v634
        %v847 = vunpack.c.l.b16 %v635
        %v848 = vunpack.c.l.b16 %v636
        %v849 = vunpack.c.l.b16 %v637
        %v850 = vunpack.c.l.b16 %v638
        %v851 = vunpack.c.l.b16 %v639
        %v852 = vunpack.c.l.b16 %v640
        %v853 = vunpack.c.l.b16 %v641
        %v854 = vunpack.c.l.b16 %v642
        %v855 = vunpack.c.l.b16 %v643
        %v856 = vunpack.c.l.b16 %v644
        %v857 = vunpack.c.l.b16 %v645
        %v858 = vunpack.c.l.b16 %v646
        %v859 = vunpack.c.l.b16 %v647
        %v860 = vunpack.c.l.b16 %v648
        %v861 = vunpack.c.l.b16 %v649
        %v862 = vunpack.c.l.b16 %v650
        %v863 = vunpack.c.l.b16 %v651
        %v864 = vunpack.c.l.b16 %v652
        %v865 = vunpack.c.l.b16 %v653
        %v866 = vunpack.c.l.b16 %v654
        %v867 = vunpack.c.l.b16 %v655
        %v868 = vunpack.c.l.b16 %v656
        %v869 = vunpack.c.l.b16 %v657
        %v870 = vunpack.c.l.b16 %v658
        %v871 = vunpack.c.l.b16 %v659
        %v872 = vunpack.c.l.b16 %v660
        %v873 = vunpack.c.l.b16 %v661
        %v874 = vunpack.c.l.b16 %v662
        %v875 = vunpack.c.l.b16 %v663
        %v876 = vunpack.c.l.b16 %v664
        %v877 = vunpack.c.l.b16 %v665
        %v878 = vunpack.c.l.b16 %v666
        %v879 = vunpack.c.l.b16 %v667
        %v880 = vunpack.c.l.b16 %v668
        %v881 = vunpack.c.l.b16 %v669
        %v882 = vunpack.c.l.b16 %v670
        %v883 = vunpack.c.l.b16 %v671
        %v884 = vunpack.c.l.b16 %v672
        %v885 = vunpack.c.l.b16 %v673
        %v886 = vunpack.c.l.b16 %v674
        %v887 = vunpack.c.l.b16 %v675
        %v888 = vunpack.c.l.b16 %v676
        %v889 = vunpack.c.l.b16 %v677
        %v890 = vunpack.c.l.b16 %v678
        %v891 = vunpack.c.l.b16 %v679
        %v892 = vunpack.c.l.b16 %v680
        %v893 = vunpack.c.l.b16 %v681
        %v894 = vunpack.c.l.b16 %v682
        %v895 = vunpack.c.l.b16 %v683
        %v896 = vunpack.c.l.b16 %v684
        %v897 = vunpack.c.l.b16 %v685
        %v898 = vunpack.c.l.b16 %v686
        %v899 = vunpack.c.l.b16 %v687
        %v900 = vunpack.c.l.b16 %v688
        %v901 = vunpack.c.l.b16 %v689
        %v902 = vunpack.c.l.b16 %v690
        %v903 = vunpack.c.l.b16 %v691
        %v904 = vunpack.c.l.b16 %v692
        %v905 = vunpack.c.l.b16 %v693
        %v906 = vunpack.c.l.b16 %v694
        %v907 = vunpack.c.l.b16 %v695
        %v908 = vunpack.c.l.b16 %v696
        %v909 = vunpack.c.l.b16 %v697
        %v910 = vunpack.c.l.b16 %v698
        %v911 = vunpack.c.l.b16 %v699
        %v912 = vunpack.c.l.b16 %v700
        %v913 = vunpack.c.l.b16 %v701
        %v914 = vunpack.c.l.b16 %v702
        %v915 = vunpack.c.l.b16 %v703
        %v916 = vunpack.c.l.b16 %v704
        %v917 = vunpack.c.l.b16 %v705
        %v918 = vunpack.c.l.b16 %v706
        %v919 = vunpack.c.l.b16 %v707
        %v920 = vunpack.c.l.b16 %v708
        %v921 = vunpack.c.l.b16 %v709
        %v922 = vunpack.c.l.b16 %v710
        %v923 = vunpack.c.l.b16 %v711
        %v924 = vunpack.c.l.b16 %v712
        %v925 = vunpack.c.l.b16 %v713
        %v926 = vunpack.c.l.b16 %v714
        %v927 = vunpack.c.l.b16 %v715
        %v928 = vunpack.c.l.b16 %v716
        %v929 = vunpack.c.l.b16 %v717
        %v930 = vunpack.c.l.b16 %v718
        %v931 = vunpack.c.l.b16 %v719
        %v932 = vunpack.c.l.b16 %v720
        %v933 = vunpack.c.l.b16 %v721
        %v934 = vunpack.c.l.b16 %v722
        %v935 = vunpack.c.l.b16 %v723
        %v936 = vunpack.c.l.b16 %v724
        %v937 = vunpack.c.l.b16 %v725
        %v938 = vunpack.c.l.b16 %v726
        %v939 = vunpack.c.l.b16 %v727
        %v940 = vunpack.c.l.b16 %v728
        %v941 = vunpack.c.l.b16 %v729
        %v942 = vunpack.c.l.b16 %v730
        %v943 = vunpack.c.l.b16 %v731
        %v944 = vunpack.c.l.b16 %v732
        %v945 = vunpack.c.l.b16 %v733
        %v946 = vpack.c.b16 %v843, %v842
        %v947 = vpack.c.b16 %v845, %v844
        %v948 = vpack.c.b16 %v847, %v846
        %v949 = vpack.c.b16 %v849, %v848
        %v950 = vpack.c.b16 %v851, %v850
        %v951 = vpack.c.b16 %v853, %v852
        %v952 = vpack.c.b16 %v855, %v854
        %v953 = vpack.c.b16 %v857, %v856
        %v954 = vpack.c.b16 %v859, %v858
        %v955 = vpack.c.b16 %v861, %v860
        %v956 = vpack.c.b16 %v863, %v862
        %v957 = vpack.c.b16 %v865, %v864
        %v958 = vpack.c.b16 %v867, %v866
        %v959 = vpack.c.b16 %v869, %v868
        %v960 = vpack.c.b16 %v871, %v870
        %v961 = vpack.c.b16 %v873, %v872
        %v962 = vpack.c.b16 %v875, %v874
        %v963 = vpack.c.b16 %v877, %v876
        %v964 = vpack.c.b16 %v879, %v878
        %v965 = vpack.c.b16 %v881, %v880
        %v966 = vpack.c.b16 %v883, %v882
        %v967 = vpack.c.b16 %v885, %v884
        %v968 = vpack.c.b16 %v887, %v886
        %v969 = vpack.c.b16 %v889, %v888
        %v970 = vpack.c.b16 %v891, %v890
        %v971 = vpack.c.b16 %v893, %v892
        %v972 = vpack.c.b16 %v895, %v894
        %v973 = vpack.c.b16 %v897, %v896
        %v974 = vpack.c.b16 %v899, %v898
        %v975 = vpack.c.b16 %v901, %v900
        %v976 = vpack.c.b16 %v903, %v902
        %v977 = vpack.c.b16 %v905, %v904
        %v978 = vpack.c.b16 %v907, %v906
        %v979 = vpack.c.b16 %v909, %v908
        %v980 = vpack.c.b16 %v911, %v910
        %v981 = vpack.c.b16 %v913, %v912
        %v982 = vpack.c.b16 %v915, %v914
        %v983 = vpack.c.b16 %v917, %v916
        %v984 = vpack.c.b16 %v919, %v918
        %v985 = vpack.c.b16 %v921, %v920
        %v986 = vpack.c.b16 %v923, %v922
        %v987 = vpack.c.b16 %v925, %v924
        %v988 = vpack.c.b16 %v927, %v926
        %v989 = vpack.c.b16 %v929, %v928
        %v990 = vpack.c.b16 %v931, %v930
        %v991 = vpack.c.b16 %v933, %v932
        %v992 = vpack.c.b16 %v935, %v934
        %v993 = vpack.c.b16 %v937, %v936
        %v994 = vpack.c.b16 %v939, %v938
        %v995 = vpack.c.b16 %v941, %v940
        %v996 = vpack.c.b16 %v943, %v942
        %v997 = vpack.c.b16 %v945, %v944
        %v1002 = vunpack.c.l.b16 %v734
        %v1003 = vunpack.c.l.b16 %v735
        %v1004 = vunpack.c.l.b16 %v736
        %v1005 = vunpack.c.l.b16 %v737
        %v1006 = vpack.c.b16 %v1003, %v1002
        %v1007 = vpack.c.b16 %v1005, %v1004
        %vm1009 = vcmask 203776
        %v1011 = vsel %vm1009, %v946, 0
        %v1014 = vsel %vm1009, %v947, 0
        %v1017 = vsel %vm1009, %v948, 0
        %v1020 = vsel %vm1009, %v949, 0
        %v1023 = vsel %vm1009, %v950, 0
        %v1026 = vsel %vm1009, %v951, 0
        %v1029 = vsel %vm1009, %v952, 0
        %v1032 = vsel %vm1009, %v953, 0
        %v1035 = vsel %vm1009, %v954, 0
        %v1038 = vsel %vm1009, %v955, 0
        %v1041 = vsel %vm1009, %v956, 0
        %v1044 = vsel %vm1009, %v957, 0
        %v1047 = vsel %vm1009, %v958, 0
        %v1050 = vsel %vm1009, %v959, 0
        %v1053 = vsel %vm1009, %v960, 0
        %v1056 = vsel %vm1009, %v961, 0
        %v1059 = vsel %vm1009, %v962, 0
        %v1062 = vsel %vm1009, %v963, 0
        %v1065 = vsel %vm1009, %v964, 0
        %v1068 = vsel %vm1009, %v965, 0
        %v1071 = vsel %vm1009, %v966, 0
        %v1074 = vsel %vm1009, %v967, 0
        %v1077 = vsel %vm1009, %v968, 0
        %v1080 = vsel %vm1009, %v969, 0
        %v1083 = vsel %vm1009, %v970, 0
        %v1086 = vsel %vm1009, %v971, 0
        %v1089 = vsel %vm1009, %v972, 0
        %v1092 = vsel %vm1009, %v973, 0
        %v1095 = vsel %vm1009, %v974, 0
        %v1098 = vsel %vm1009, %v975, 0
        %v1101 = vsel %vm1009, %v976, 0
        %v1104 = vsel %vm1009, %v977, 0
        %v1107 = vsel %vm1009, %v978, 0
        %v1110 = vsel %vm1009, %v979, 0
        %v1113 = vsel %vm1009, %v980, 0
        %v1116 = vsel %vm1009, %v981, 0
        %v1119 = vsel %vm1009, %v982, 0
        %v1122 = vsel %vm1009, %v983, 0
        %v1125 = vsel %vm1009, %v984, 0
        %v1128 = vsel %vm1009, %v985, 0
        %v1131 = vsel %vm1009, %v986, 0
        %v1134 = vsel %vm1009, %v987, 0
        %v1137 = vsel %vm1009, %v988, 0
        %v1140 = vsel %vm1009, %v989, 0
        %v1143 = vsel %vm1009, %v990, 0
        %v1146 = vsel %vm1009, %v991, 0
        %v1149 = vsel %vm1009, %v992, 0
        %v1152 = vsel %vm1009, %v993, 0
        %v1155 = vsel %vm1009, %v994, 0
        %v1158 = vsel %vm1009, %v995, 0
        %v1161 = vsel %vm1009, %v996, 0
        %v1164 = vsel %vm1009, %v997, 0
        %vm1166 = vcmask 1043456
        %vm1167 = vcmask 1044480
        %v1168 = vsel %vm1166, 4294967295, 65535
        %v1169 = vsel %vm1167, %v1168, 0
        %v1171 = vand.u32 %v1007, %v1169
        %1173 = vmatprep.subr.bf16.mxu0 0
        %1174 = vmatpush1.bf16.msra.mxu0 0
        %1175 = vmatprep.subr.bf16.mxu0 0
        %1176 = vmatpush1.bf16.msra.mxu0 0
        %1177 = vmatprep.subr.bf16.mxu0 0
        %1178 = vmatpush1.bf16.msra.mxu0 0
        %1179 = vmatprep.subr.bf16.mxu0 0
        %1180 = vmatpush1.bf16.msra.mxu0 0
        %1181 = vmatprep.subr.bf16.mxu0 0
        %1182 = vmatpush1.bf16.msra.mxu0 0
        %1183 = vmatprep.subr.bf16.mxu0 0
        %1184 = vmatpush1.bf16.msra.mxu0 0
        %1185 = vmatprep.subr.bf16.mxu0 0
        %1186 = vmatpush1.bf16.msra.mxu0 %v1171
        %1187 = vmatprep.subr.bf16.mxu0 0
        %1188 = vmatpush1.bf16.msra.mxu0 %v1006
        %1189 = vmatprep.subr.bf16.mxu0 0
        %1190 = vmatpush2.bf16.msra.mxu0 0
        %1191 = vmatprep.subr.bf16.mxu0 0
        %1192 = vmatpush2.bf16.msra.mxu0 0
        %1193 = vmatprep.subr.bf16.mxu0 0
        %1194 = vmatpush2.bf16.msra.mxu0 0
        %1195 = vmatprep.subr.bf16.mxu0 0
        %1196 = vmatpush2.bf16.msra.mxu0 0
        %1197 = vmatprep.subr.bf16.mxu0 0
        %1198 = vmatpush2.bf16.msra.mxu0 0
        %1199 = vmatprep.subr.bf16.mxu0 0
        %1200 = vmatpush2.bf16.msra.mxu0 0
        %1201 = vmatprep.subr.bf16.mxu0 0
        %1202 = vmatpush2.bf16.msra.mxu0 0
        %1203 = vmatprep.subr.bf16.mxu0 0
        %1204 = vmatpush2.bf16.msra.mxu0 0
        %1205 = vmatprep.mubr.bf16.mxu0 0
        %1206 = vmatmul.mubr.bf16.gmra.mxu0 %v1011
        %v1207 = vpop.f32.mrf.mxu0
        %v1208 = vadd.f32 0.0, %v1207
        %v1209 = vpop.f32.mrf.mxu0
        %v1210 = vpop.f32.mrf.mxu0
        %v1211 = vadd.f32 0.0, %v1210
        %v1212 = vpop.f32.mrf.mxu0
        %1213 = vmatprep.mubr.bf16.mxu0 0
        %1214 = vmatmul.mubr.bf16.gmra.mxu0 %v1014
        %v1215 = vpop.f32.mrf.mxu0
        %v1216 = vadd.f32 0.0, %v1215
        %v1217 = vpop.f32.mrf.mxu0
        %v1218 = vpop.f32.mrf.mxu0
        %v1219 = vadd.f32 0.0, %v1218
        %v1220 = vpop.f32.mrf.mxu0
        %1221 = vmatprep.mubr.bf16.mxu0 0
        %1222 = vmatmul.mubr.bf16.gmra.mxu0 %v1017
        %v1223 = vpop.f32.mrf.mxu0
        %v1224 = vadd.f32 0.0, %v1223
        %v1225 = vpop.f32.mrf.mxu0
        %v1226 = vpop.f32.mrf.mxu0
        %v1227 = vadd.f32 0.0, %v1226
        %v1228 = vpop.f32.mrf.mxu0
        %1229 = vmatprep.mubr.bf16.mxu0 0
        %1230 = vmatmul.mubr.bf16.gmra.mxu0 %v1020
        %v1231 = vpop.f32.mrf.mxu0
        %v1232 = vadd.f32 0.0, %v1231
        %v1233 = vpop.f32.mrf.mxu0
        %v1234 = vpop.f32.mrf.mxu0
        %v1235 = vadd.f32 0.0, %v1234
        %v1236 = vpop.f32.mrf.mxu0
        %1237 = vmatprep.mubr.bf16.mxu0 0
        %1238 = vmatmul.mubr.bf16.gmra.mxu0 %v1023
        %v1239 = vpop.f32.mrf.mxu0
        %v1240 = vadd.f32 0.0, %v1239
        %v1241 = vpop.f32.mrf.mxu0
        %v1242 = vpop.f32.mrf.mxu0
        %v1243 = vadd.f32 0.0, %v1242
        %v1244 = vpop.f32.mrf.mxu0
        %1245 = vmatprep.mubr.bf16.mxu0 0
        %1246 = vmatmul.mubr.bf16.gmra.mxu0 %v1026
        %v1247 = vpop.f32.mrf.mxu0
        %v1248 = vadd.f32 0.0, %v1247
        %v1249 = vpop.f32.mrf.mxu0
        %v1250 = vpop.f32.mrf.mxu0
        %v1251 = vadd.f32 0.0, %v1250
        %v1252 = vpop.f32.mrf.mxu0
        %1253 = vmatprep.mubr.bf16.mxu0 0
        %1254 = vmatmul.mubr.bf16.gmra.mxu0 %v1029
        %v1255 = vpop.f32.mrf.mxu0
        %v1256 = vadd.f32 0.0, %v1255
        %v1257 = vpop.f32.mrf.mxu0
        %v1258 = vpop.f32.mrf.mxu0
        %v1259 = vadd.f32 0.0, %v1258
        %v1260 = vpop.f32.mrf.mxu0
        %1261 = vmatprep.mubr.bf16.mxu0 0
        %1262 = vmatmul.mubr.bf16.gmra.mxu0 %v1032
        %v1263 = vpop.f32.mrf.mxu0
        %v1264 = vadd.f32 0.0, %v1263
        %v1265 = vpop.f32.mrf.mxu0
        %v1266 = vpop.f32.mrf.mxu0
        %v1267 = vadd.f32 0.0, %v1266
        %v1268 = vpop.f32.mrf.mxu0
        %1269 = vmatprep.mubr.bf16.mxu0 0
        %1270 = vmatmul.mubr.bf16.gmra.mxu0 %v1035
        %v1271 = vpop.f32.mrf.mxu0
        %v1272 = vadd.f32 0.0, %v1271
        %v1273 = vpop.f32.mrf.mxu0
        %v1274 = vpop.f32.mrf.mxu0
        %v1275 = vadd.f32 0.0, %v1274
        %v1276 = vpop.f32.mrf.mxu0
        %1277 = vmatprep.mubr.bf16.mxu0 0
        %1278 = vmatmul.mubr.bf16.gmra.mxu0 %v1038
        %v1279 = vpop.f32.mrf.mxu0
        %v1280 = vadd.f32 0.0, %v1279
        %v1281 = vpop.f32.mrf.mxu0
        %v1282 = vpop.f32.mrf.mxu0
        %v1283 = vadd.f32 0.0, %v1282
        %v1284 = vpop.f32.mrf.mxu0
        %1285 = vmatprep.mubr.bf16.mxu0 0
        %1286 = vmatmul.mubr.bf16.gmra.mxu0 %v1041
        %v1287 = vpop.f32.mrf.mxu0
        %v1288 = vadd.f32 0.0, %v1287
        %v1289 = vpop.f32.mrf.mxu0
        %v1290 = vpop.f32.mrf.mxu0
        %v1291 = vadd.f32 0.0, %v1290
        %v1292 = vpop.f32.mrf.mxu0
        %1293 = vmatprep.mubr.bf16.mxu0 0
        %1294 = vmatmul.mubr.bf16.gmra.mxu0 %v1044
        %v1295 = vpop.f32.mrf.mxu0
        %v1296 = vadd.f32 0.0, %v1295
        %v1297 = vpop.f32.mrf.mxu0
        %v1298 = vpop.f32.mrf.mxu0
        %v1299 = vadd.f32 0.0, %v1298
        %v1300 = vpop.f32.mrf.mxu0
        %1301 = vmatprep.mubr.bf16.mxu0 0
        %1302 = vmatmul.mubr.bf16.gmra.mxu0 %v1047
        %v1303 = vpop.f32.mrf.mxu0
        %v1304 = vadd.f32 0.0, %v1303
        %v1305 = vpop.f32.mrf.mxu0
        %v1306 = vpop.f32.mrf.mxu0
        %v1307 = vadd.f32 0.0, %v1306
        %v1308 = vpop.f32.mrf.mxu0
        %1309 = vmatprep.mubr.bf16.mxu0 0
        %1310 = vmatmul.mubr.bf16.gmra.mxu0 %v1050
        %v1311 = vpop.f32.mrf.mxu0
        %v1312 = vadd.f32 0.0, %v1311
        %v1313 = vpop.f32.mrf.mxu0
        %v1314 = vpop.f32.mrf.mxu0
        %v1315 = vadd.f32 0.0, %v1314
        %v1316 = vpop.f32.mrf.mxu0
        %1317 = vmatprep.mubr.bf16.mxu0 0
        %1318 = vmatmul.mubr.bf16.gmra.mxu0 %v1053
        %v1319 = vpop.f32.mrf.mxu0
        %v1320 = vadd.f32 0.0, %v1319
        %v1321 = vpop.f32.mrf.mxu0
        %v1322 = vpop.f32.mrf.mxu0
        %v1323 = vadd.f32 0.0, %v1322
        %v1324 = vpop.f32.mrf.mxu0
        %1325 = vmatprep.mubr.bf16.mxu0 0
        %1326 = vmatmul.mubr.bf16.gmra.mxu0 %v1056
        %v1327 = vpop.f32.mrf.mxu0
        %v1328 = vadd.f32 0.0, %v1327
        %v1329 = vpop.f32.mrf.mxu0
        %v1330 = vpop.f32.mrf.mxu0
        %v1331 = vadd.f32 0.0, %v1330
        %v1332 = vpop.f32.mrf.mxu0
        %1333 = vmatprep.mubr.bf16.mxu0 0
        %1334 = vmatmul.mubr.bf16.gmra.mxu0 %v1059
        %v1335 = vpop.f32.mrf.mxu0
        %v1336 = vadd.f32 0.0, %v1335
        %v1337 = vpop.f32.mrf.mxu0
        %v1338 = vpop.f32.mrf.mxu0
        %v1339 = vadd.f32 0.0, %v1338
        %v1340 = vpop.f32.mrf.mxu0
        %1341 = vmatprep.mubr.bf16.mxu0 0
        %1342 = vmatmul.mubr.bf16.gmra.mxu0 %v1062
        %v1343 = vpop.f32.mrf.mxu0
        %v1344 = vadd.f32 0.0, %v1343
        %v1345 = vpop.f32.mrf.mxu0
        %v1346 = vpop.f32.mrf.mxu0
        %v1347 = vadd.f32 0.0, %v1346
        %v1348 = vpop.f32.mrf.mxu0
        %1349 = vmatprep.mubr.bf16.mxu0 0
        %1350 = vmatmul.mubr.bf16.gmra.mxu0 %v1065
        %v1351 = vpop.f32.mrf.mxu0
        %v1352 = vadd.f32 0.0, %v1351
        %v1353 = vpop.f32.mrf.mxu0
        %v1354 = vpop.f32.mrf.mxu0
        %v1355 = vadd.f32 0.0, %v1354
        %v1356 = vpop.f32.mrf.mxu0
        %1357 = vmatprep.mubr.bf16.mxu0 0
        %1358 = vmatmul.mubr.bf16.gmra.mxu0 %v1068
        %v1359 = vpop.f32.mrf.mxu0
        %v1360 = vadd.f32 0.0, %v1359
        %v1361 = vpop.f32.mrf.mxu0
        %v1362 = vpop.f32.mrf.mxu0
        %v1363 = vadd.f32 0.0, %v1362
        %v1364 = vpop.f32.mrf.mxu0
        %1365 = vmatprep.mubr.bf16.mxu0 0
        %1366 = vmatmul.mubr.bf16.gmra.mxu0 %v1071
        %v1367 = vpop.f32.mrf.mxu0
        %v1368 = vadd.f32 0.0, %v1367
        %v1369 = vpop.f32.mrf.mxu0
        %v1370 = vpop.f32.mrf.mxu0
        %v1371 = vadd.f32 0.0, %v1370
        %v1372 = vpop.f32.mrf.mxu0
        %1373 = vmatprep.mubr.bf16.mxu0 0
        %1374 = vmatmul.mubr.bf16.gmra.mxu0 %v1074
        %v1375 = vpop.f32.mrf.mxu0
        %v1376 = vadd.f32 0.0, %v1375
        %v1377 = vpop.f32.mrf.mxu0
        %v1378 = vpop.f32.mrf.mxu0
        %v1379 = vadd.f32 0.0, %v1378
        %v1380 = vpop.f32.mrf.mxu0
        %1381 = vmatprep.mubr.bf16.mxu0 0
        %1382 = vmatmul.mubr.bf16.gmra.mxu0 %v1077
        %v1383 = vpop.f32.mrf.mxu0
        %v1384 = vadd.f32 0.0, %v1383
        %v1385 = vpop.f32.mrf.mxu0
        %v1386 = vpop.f32.mrf.mxu0
        %v1387 = vadd.f32 0.0, %v1386
        %v1388 = vpop.f32.mrf.mxu0
        %1389 = vmatprep.mubr.bf16.mxu0 0
        %1390 = vmatmul.mubr.bf16.gmra.mxu0 %v1080
        %v1391 = vpop.f32.mrf.mxu0
        %v1392 = vadd.f32 0.0, %v1391
        %v1393 = vpop.f32.mrf.mxu0
        %v1394 = vpop.f32.mrf.mxu0
        %v1395 = vadd.f32 0.0, %v1394
        %v1396 = vpop.f32.mrf.mxu0
        %1397 = vmatprep.mubr.bf16.mxu0 0
        %1398 = vmatmul.mubr.bf16.gmra.mxu0 %v1083
        %v1399 = vpop.f32.mrf.mxu0
        %v1400 = vadd.f32 0.0, %v1399
        %v1401 = vpop.f32.mrf.mxu0
        %v1402 = vpop.f32.mrf.mxu0
        %v1403 = vadd.f32 0.0, %v1402
        %v1404 = vpop.f32.mrf.mxu0
        %1405 = vmatprep.mubr.bf16.mxu0 0
        %1406 = vmatmul.mubr.bf16.gmra.mxu0 %v1086
        %v1407 = vpop.f32.mrf.mxu0
        %v1408 = vadd.f32 0.0, %v1407
        %v1409 = vpop.f32.mrf.mxu0
        %v1410 = vpop.f32.mrf.mxu0
        %v1411 = vadd.f32 0.0, %v1410
        %v1412 = vpop.f32.mrf.mxu0
        %1413 = vmatprep.mubr.bf16.mxu0 0
        %1414 = vmatmul.mubr.bf16.gmra.mxu0 %v1089
        %v1415 = vpop.f32.mrf.mxu0
        %v1416 = vadd.f32 0.0, %v1415
        %v1417 = vpop.f32.mrf.mxu0
        %v1418 = vpop.f32.mrf.mxu0
        %v1419 = vadd.f32 0.0, %v1418
        %v1420 = vpop.f32.mrf.mxu0
        %1421 = vmatprep.mubr.bf16.mxu0 0
        %1422 = vmatmul.mubr.bf16.gmra.mxu0 %v1092
        %v1423 = vpop.f32.mrf.mxu0
        %v1424 = vadd.f32 0.0, %v1423
        %v1425 = vpop.f32.mrf.mxu0
        %v1426 = vpop.f32.mrf.mxu0
        %v1427 = vadd.f32 0.0, %v1426
        %v1428 = vpop.f32.mrf.mxu0
        %1429 = vmatprep.mubr.bf16.mxu0 0
        %1430 = vmatmul.mubr.bf16.gmra.mxu0 %v1095
        %v1431 = vpop.f32.mrf.mxu0
        %v1432 = vadd.f32 0.0, %v1431
        %v1433 = vpop.f32.mrf.mxu0
        %v1434 = vpop.f32.mrf.mxu0
        %v1435 = vadd.f32 0.0, %v1434
        %v1436 = vpop.f32.mrf.mxu0
        %1437 = vmatprep.mubr.bf16.mxu0 0
        %1438 = vmatmul.mubr.bf16.gmra.mxu0 %v1098
        %v1439 = vpop.f32.mrf.mxu0
        %v1440 = vadd.f32 0.0, %v1439
        %v1441 = vpop.f32.mrf.mxu0
        %v1442 = vpop.f32.mrf.mxu0
        %v1443 = vadd.f32 0.0, %v1442
        %v1444 = vpop.f32.mrf.mxu0
        %1445 = vmatprep.mubr.bf16.mxu0 0
        %1446 = vmatmul.mubr.bf16.gmra.mxu0 %v1101
        %v1447 = vpop.f32.mrf.mxu0
        %v1448 = vadd.f32 0.0, %v1447
        %v1449 = vpop.f32.mrf.mxu0
        %v1450 = vpop.f32.mrf.mxu0
        %v1451 = vadd.f32 0.0, %v1450
        %v1452 = vpop.f32.mrf.mxu0
        %1453 = vmatprep.mubr.bf16.mxu0 0
        %1454 = vmatmul.mubr.bf16.gmra.mxu0 %v1104
        %v1455 = vpop.f32.mrf.mxu0
        %v1456 = vadd.f32 0.0, %v1455
        %v1457 = vpop.f32.mrf.mxu0
        %v1458 = vpop.f32.mrf.mxu0
        %v1459 = vadd.f32 0.0, %v1458
        %v1460 = vpop.f32.mrf.mxu0
        %1461 = vmatprep.mubr.bf16.mxu0 0
        %1462 = vmatmul.mubr.bf16.gmra.mxu0 %v1107
        %v1463 = vpop.f32.mrf.mxu0
        %v1464 = vadd.f32 0.0, %v1463
        %v1465 = vpop.f32.mrf.mxu0
        %v1466 = vpop.f32.mrf.mxu0
        %v1467 = vadd.f32 0.0, %v1466
        %v1468 = vpop.f32.mrf.mxu0
        %1469 = vmatprep.mubr.bf16.mxu0 0
        %1470 = vmatmul.mubr.bf16.gmra.mxu0 %v1110
        %v1471 = vpop.f32.mrf.mxu0
        %v1472 = vadd.f32 0.0, %v1471
        %v1473 = vpop.f32.mrf.mxu0
        %v1474 = vpop.f32.mrf.mxu0
        %v1475 = vadd.f32 0.0, %v1474
        %v1476 = vpop.f32.mrf.mxu0
        %1477 = vmatprep.mubr.bf16.mxu0 0
        %1478 = vmatmul.mubr.bf16.gmra.mxu0 %v1113
        %v1479 = vpop.f32.mrf.mxu0
        %v1480 = vadd.f32 0.0, %v1479
        %v1481 = vpop.f32.mrf.mxu0
        %v1482 = vpop.f32.mrf.mxu0
        %v1483 = vadd.f32 0.0, %v1482
        %v1484 = vpop.f32.mrf.mxu0
        %1485 = vmatprep.mubr.bf16.mxu0 0
        %1486 = vmatmul.mubr.bf16.gmra.mxu0 %v1116
        %v1487 = vpop.f32.mrf.mxu0
        %v1488 = vadd.f32 0.0, %v1487
        %v1489 = vpop.f32.mrf.mxu0
        %v1490 = vpop.f32.mrf.mxu0
        %v1491 = vadd.f32 0.0, %v1490
        %v1492 = vpop.f32.mrf.mxu0
        %1493 = vmatprep.mubr.bf16.mxu0 0
        %1494 = vmatmul.mubr.bf16.gmra.mxu0 %v1119
        %v1495 = vpop.f32.mrf.mxu0
        %v1496 = vadd.f32 0.0, %v1495
        %v1497 = vpop.f32.mrf.mxu0
        %v1498 = vpop.f32.mrf.mxu0
        %v1499 = vadd.f32 0.0, %v1498
        %v1500 = vpop.f32.mrf.mxu0
        %1501 = vmatprep.mubr.bf16.mxu0 0
        %1502 = vmatmul.mubr.bf16.gmra.mxu0 %v1122
        %v1503 = vpop.f32.mrf.mxu0
        %v1504 = vadd.f32 0.0, %v1503
        %v1505 = vpop.f32.mrf.mxu0
        %v1506 = vpop.f32.mrf.mxu0
        %v1507 = vadd.f32 0.0, %v1506
        %v1508 = vpop.f32.mrf.mxu0
        %1509 = vmatprep.mubr.bf16.mxu0 0
        %1510 = vmatmul.mubr.bf16.gmra.mxu0 %v1125
        %v1511 = vpop.f32.mrf.mxu0
        %v1512 = vadd.f32 0.0, %v1511
        %v1513 = vpop.f32.mrf.mxu0
        %v1514 = vpop.f32.mrf.mxu0
        %v1515 = vadd.f32 0.0, %v1514
        %v1516 = vpop.f32.mrf.mxu0
        %1517 = vmatprep.mubr.bf16.mxu0 0
        %1518 = vmatmul.mubr.bf16.gmra.mxu0 %v1128
        %v1519 = vpop.f32.mrf.mxu0
        %v1520 = vadd.f32 0.0, %v1519
        %v1521 = vpop.f32.mrf.mxu0
        %v1522 = vpop.f32.mrf.mxu0
        %v1523 = vadd.f32 0.0, %v1522
        %v1524 = vpop.f32.mrf.mxu0
        %1525 = vmatprep.mubr.bf16.mxu0 0
        %1526 = vmatmul.mubr.bf16.gmra.mxu0 %v1131
        %v1527 = vpop.f32.mrf.mxu0
        %v1528 = vadd.f32 0.0, %v1527
        %v1529 = vpop.f32.mrf.mxu0
        %v1530 = vpop.f32.mrf.mxu0
        %v1531 = vadd.f32 0.0, %v1530
        %v1532 = vpop.f32.mrf.mxu0
        %1533 = vmatprep.mubr.bf16.mxu0 0
        %1534 = vmatmul.mubr.bf16.gmra.mxu0 %v1134
        %v1535 = vpop.f32.mrf.mxu0
        %v1536 = vadd.f32 0.0, %v1535
        %v1537 = vpop.f32.mrf.mxu0
        %v1538 = vpop.f32.mrf.mxu0
        %v1539 = vadd.f32 0.0, %v1538
        %v1540 = vpop.f32.mrf.mxu0
        %1541 = vmatprep.mubr.bf16.mxu0 0
        %1542 = vmatmul.mubr.bf16.gmra.mxu0 %v1137
        %v1543 = vpop.f32.mrf.mxu0
        %v1544 = vadd.f32 0.0, %v1543
        %v1545 = vpop.f32.mrf.mxu0
        %v1546 = vpop.f32.mrf.mxu0
        %v1547 = vadd.f32 0.0, %v1546
        %v1548 = vpop.f32.mrf.mxu0
        %1549 = vmatprep.mubr.bf16.mxu0 0
        %1550 = vmatmul.mubr.bf16.gmra.mxu0 %v1140
        %v1551 = vpop.f32.mrf.mxu0
        %v1552 = vadd.f32 0.0, %v1551
        %v1553 = vpop.f32.mrf.mxu0
        %v1554 = vpop.f32.mrf.mxu0
        %v1555 = vadd.f32 0.0, %v1554
        %v1556 = vpop.f32.mrf.mxu0
        %1557 = vmatprep.mubr.bf16.mxu0 0
        %1558 = vmatmul.mubr.bf16.gmra.mxu0 %v1143
        %v1559 = vpop.f32.mrf.mxu0
        %v1560 = vadd.f32 0.0, %v1559
        %v1561 = vpop.f32.mrf.mxu0
        %v1562 = vpop.f32.mrf.mxu0
        %v1563 = vadd.f32 0.0, %v1562
        %v1564 = vpop.f32.mrf.mxu0
        %1565 = vmatprep.mubr.bf16.mxu0 0
        %1566 = vmatmul.mubr.bf16.gmra.mxu0 %v1146
        %v1567 = vpop.f32.mrf.mxu0
        %v1568 = vadd.f32 0.0, %v1567
        %v1569 = vpop.f32.mrf.mxu0
        %v1570 = vpop.f32.mrf.mxu0
        %v1571 = vadd.f32 0.0, %v1570
        %v1572 = vpop.f32.mrf.mxu0
        %1573 = vmatprep.mubr.bf16.mxu0 0
        %1574 = vmatmul.mubr.bf16.gmra.mxu0 %v1149
        %v1575 = vpop.f32.mrf.mxu0
        %v1576 = vadd.f32 0.0, %v1575
        %v1577 = vpop.f32.mrf.mxu0
        %v1578 = vpop.f32.mrf.mxu0
        %v1579 = vadd.f32 0.0, %v1578
        %v1580 = vpop.f32.mrf.mxu0
        %1581 = vmatprep.mubr.bf16.mxu0 0
        %1582 = vmatmul.mubr.bf16.gmra.mxu0 %v1152
        %v1583 = vpop.f32.mrf.mxu0
        %v1584 = vadd.f32 0.0, %v1583
        %v1585 = vpop.f32.mrf.mxu0
        %v1586 = vpop.f32.mrf.mxu0
        %v1587 = vadd.f32 0.0, %v1586
        %v1588 = vpop.f32.mrf.mxu0
        %1589 = vmatprep.mubr.bf16.mxu0 0
        %1590 = vmatmul.mubr.bf16.gmra.mxu0 %v1155
        %v1591 = vpop.f32.mrf.mxu0
        %v1592 = vadd.f32 0.0, %v1591
        %v1593 = vpop.f32.mrf.mxu0
        %v1594 = vpop.f32.mrf.mxu0
        %v1595 = vadd.f32 0.0, %v1594
        %v1596 = vpop.f32.mrf.mxu0
        %1597 = vmatprep.mubr.bf16.mxu0 0
        %1598 = vmatmul.mubr.bf16.gmra.mxu0 %v1158
        %v1599 = vpop.f32.mrf.mxu0
        %v1600 = vadd.f32 0.0, %v1599
        %v1601 = vpop.f32.mrf.mxu0
        %v1602 = vpop.f32.mrf.mxu0
        %v1603 = vadd.f32 0.0, %v1602
        %v1604 = vpop.f32.mrf.mxu0
        %1605 = vmatprep.mubr.bf16.mxu0 0
        %1606 = vmatmul.mubr.bf16.gmra.mxu0 %v1161
        %v1607 = vpop.f32.mrf.mxu0
        %v1608 = vadd.f32 0.0, %v1607
        %v1609 = vpop.f32.mrf.mxu0
        %v1610 = vpop.f32.mrf.mxu0
        %v1611 = vadd.f32 0.0, %v1610
        %v1612 = vpop.f32.mrf.mxu0
        %1613 = vmatprep.mubr.bf16.mxu0 0
        %1614 = vmatmul.mubr.bf16.gmra.mxu0 %v1164
        %v1615 = vpop.f32.mrf.mxu0
        %v1616 = vadd.f32 0.0, %v1615
        %v1617 = vpop.f32.mrf.mxu0
        %v1618 = vpop.f32.mrf.mxu0
        %v1619 = vadd.f32 0.0, %v1618
        %v1620 = vpop.f32.mrf.mxu0
        %1621 = vdwg.mxu0
        %v1622 = vmax.f32 %v1208, %v1312
        %v1623 = vmax.f32 %v1211, %v1315
        %v1624 = vmax.f32 %v1216, %v1320
        %v1625 = vmax.f32 %v1219, %v1323
        %v1626 = vmax.f32 %v1224, %v1328
        %v1627 = vmax.f32 %v1227, %v1331
        %v1628 = vmax.f32 %v1232, %v1336
        %v1629 = vmax.f32 %v1235, %v1339
        %v1630 = vmax.f32 %v1240, %v1344
        %v1631 = vmax.f32 %v1243, %v1347
        %v1632 = vmax.f32 %v1248, %v1352
        %v1633 = vmax.f32 %v1251, %v1355
        %v1634 = vmax.f32 %v1256, %v1360
        %v1635 = vmax.f32 %v1259, %v1363
        %v1636 = vmax.f32 %v1264, %v1368
        %v1637 = vmax.f32 %v1267, %v1371
        %v1638 = vmax.f32 %v1272, %v1376
        %v1639 = vmax.f32 %v1275, %v1379
        %v1640 = vmax.f32 %v1280, %v1384
        %v1641 = vmax.f32 %v1283, %v1387
        %v1642 = vmax.f32 %v1288, %v1392
        %v1643 = vmax.f32 %v1291, %v1395
        %v1644 = vmax.f32 %v1296, %v1400
        %v1645 = vmax.f32 %v1299, %v1403
        %v1646 = vmax.f32 %v1304, %v1408
        %v1647 = vmax.f32 %v1307, %v1411
        %v1648 = vmax.f32 %v1416, %v1520
        %v1649 = vmax.f32 %v1419, %v1523
        %v1650 = vmax.f32 %v1424, %v1528
        %v1651 = vmax.f32 %v1427, %v1531
        %v1652 = vmax.f32 %v1432, %v1536
        %v1653 = vmax.f32 %v1435, %v1539
        %v1654 = vmax.f32 %v1440, %v1544
        %v1655 = vmax.f32 %v1443, %v1547
        %v1656 = vmax.f32 %v1448, %v1552
        %v1657 = vmax.f32 %v1451, %v1555
        %v1658 = vmax.f32 %v1456, %v1560
        %v1659 = vmax.f32 %v1459, %v1563
        %v1660 = vmax.f32 %v1464, %v1568
        %v1661 = vmax.f32 %v1467, %v1571
        %v1662 = vmax.f32 %v1472, %v1576
        %v1663 = vmax.f32 %v1475, %v1579
        %v1664 = vmax.f32 %v1480, %v1584
        %v1665 = vmax.f32 %v1483, %v1587
        %v1666 = vmax.f32 %v1488, %v1592
        %v1667 = vmax.f32 %v1491, %v1595
        %v1668 = vmax.f32 %v1496, %v1600
        %v1669 = vmax.f32 %v1499, %v1603
        %v1670 = vmax.f32 %v1504, %v1608
        %v1671 = vmax.f32 %v1507, %v1611
        %v1672 = vmax.f32 %v1512, %v1616
        %v1673 = vmax.f32 %v1515, %v1619
        %v1674 = vmax.f32 %v1622, %v1648
        %v1675 = vmax.f32 %v1623, %v1649
        %v1676 = vmax.f32 %v1624, %v1650
        %v1677 = vmax.f32 %v1625, %v1651
        %v1678 = vmax.f32 %v1626, %v1652
        %v1679 = vmax.f32 %v1627, %v1653
        %v1680 = vmax.f32 %v1628, %v1654
        %v1681 = vmax.f32 %v1629, %v1655
        %v1682 = vmax.f32 %v1630, %v1656
        %v1683 = vmax.f32 %v1631, %v1657
        %v1684 = vmax.f32 %v1632, %v1658
        %v1685 = vmax.f32 %v1633, %v1659
        %v1686 = vmax.f32 %v1634, %v1660
        %v1687 = vmax.f32 %v1635, %v1661
        %v1688 = vmax.f32 %v1636, %v1662
        %v1689 = vmax.f32 %v1637, %v1663
        %v1690 = vmax.f32 %v1638, %v1664
        %v1691 = vmax.f32 %v1639, %v1665
        %v1692 = vmax.f32 %v1640, %v1666
        %v1693 = vmax.f32 %v1641, %v1667
        %v1694 = vmax.f32 %v1642, %v1668
        %v1695 = vmax.f32 %v1643, %v1669
        %v1696 = vmax.f32 %v1644, %v1670
        %v1697 = vmax.f32 %v1645, %v1671
        %v1698 = vmax.f32 %v1646, %v1672
        %v1699 = vmax.f32 %v1647, %v1673
        %v1700 = vld [vmem:[%s2] sm:$0x1]
        %v1702 = vlaneseq
        %v1703 = vshrl.u32 %v1702, 7
        %v1704 = vsub.s32 0, %v1703
        %v1705 = vrot.slane %v1700, %v1704
        %v1707 = vadd.f32 %v1674, %v1705
        %v1708 = vadd.f32 %v1675, %v1705
        %v1709 = vadd.f32 %v1676, %v1705
        %v1710 = vadd.f32 %v1677, %v1705
        %v1711 = vadd.f32 %v1678, %v1705
        %v1712 = vadd.f32 %v1679, %v1705
        %v1713 = vadd.f32 %v1680, %v1705
        %v1714 = vadd.f32 %v1681, %v1705
        %v1715 = vadd.f32 %v1682, %v1705
        %v1716 = vadd.f32 %v1683, %v1705
        %v1717 = vadd.f32 %v1684, %v1705
        %v1718 = vadd.f32 %v1685, %v1705
        %v1719 = vadd.f32 %v1686, %v1705
        %v1720 = vadd.f32 %v1687, %v1705
        %v1721 = vadd.f32 %v1688, %v1705
        %v1722 = vadd.f32 %v1689, %v1705
        %v1723 = vadd.f32 %v1690, %v1705
        %v1724 = vadd.f32 %v1691, %v1705
        %v1725 = vadd.f32 %v1692, %v1705
        %v1726 = vadd.f32 %v1693, %v1705
        %v1727 = vadd.f32 %v1694, %v1705
        %v1728 = vadd.f32 %v1695, %v1705
        %v1729 = vadd.f32 %v1696, %v1705
        %v1730 = vadd.f32 %v1697, %v1705
        %v1731 = vadd.f32 %v1698, %v1705
        %v1732 = vadd.f32 %v1699, %v1705
        %v1733 = vmax.f32 %v1707, 0.0
        %v1734 = vmax.f32 %v1708, 0.0
        %v1735 = vmax.f32 %v1709, 0.0
        %v1736 = vmax.f32 %v1710, 0.0
        %v1737 = vmax.f32 %v1711, 0.0
        %v1738 = vmax.f32 %v1712, 0.0
        %v1739 = vmax.f32 %v1713, 0.0
        %v1740 = vmax.f32 %v1714, 0.0
        %v1741 = vmax.f32 %v1715, 0.0
        %v1742 = vmax.f32 %v1716, 0.0
        %v1743 = vmax.f32 %v1717, 0.0
        %v1744 = vmax.f32 %v1718, 0.0
        %v1745 = vmax.f32 %v1719, 0.0
        %v1746 = vmax.f32 %v1720, 0.0
        %v1747 = vmax.f32 %v1721, 0.0
        %v1748 = vmax.f32 %v1722, 0.0
        %v1749 = vmax.f32 %v1723, 0.0
        %v1750 = vmax.f32 %v1724, 0.0
        %v1751 = vmax.f32 %v1725, 0.0
        %v1752 = vmax.f32 %v1726, 0.0
        %v1753 = vmax.f32 %v1727, 0.0
        %v1754 = vmax.f32 %v1728, 0.0
        %v1755 = vmax.f32 %v1729, 0.0
        %v1756 = vmax.f32 %v1730, 0.0
        %v1757 = vmax.f32 %v1731, 0.0
        %v1758 = vmax.f32 %v1732, 0.0
        %v1759 = vpack.c.bf16 %v1734, %v1733
        %v1760 = vpack.c.bf16 %v1736, %v1735
        %v1761 = vpack.c.bf16 %v1738, %v1737
        %v1762 = vpack.c.bf16 %v1740, %v1739
        %v1763 = vpack.c.bf16 %v1742, %v1741
        %v1764 = vpack.c.bf16 %v1744, %v1743
        %v1765 = vpack.c.bf16 %v1746, %v1745
        %v1766 = vpack.c.bf16 %v1748, %v1747
        %v1767 = vpack.c.bf16 %v1750, %v1749
        %v1768 = vpack.c.bf16 %v1752, %v1751
        %v1769 = vpack.c.bf16 %v1754, %v1753
        %v1770 = vpack.c.bf16 %v1756, %v1755
        %v1771 = vpack.c.bf16 %v1758, %v1757
        %v1785 = vunpack.c.l.b16 %v1759
        %v1786 = vunpack.c.h.b16 %v1759
        %v1787 = vunpack.c.l.b16 %v1760
        %v1788 = vunpack.c.h.b16 %v1760
        %v1789 = vunpack.c.l.b16 %v1761
        %v1790 = vunpack.c.h.b16 %v1761
        %v1791 = vunpack.c.l.b16 %v1762
        %v1792 = vunpack.c.h.b16 %v1762
        %v1793 = vunpack.c.l.b16 %v1763
        %v1794 = vunpack.c.h.b16 %v1763
        %v1795 = vunpack.c.l.b16 %v1764
        %v1796 = vunpack.c.h.b16 %v1764
        %v1797 = vunpack.c.l.b16 %v1765
        %v1798 = vunpack.c.h.b16 %v1765
        %v1799 = vunpack.c.l.b16 %v1766
        %v1800 = vunpack.c.h.b16 %v1766
        %v1801 = vunpack.c.l.b16 %v1767
        %v1802 = vunpack.c.h.b16 %v1767
        %v1803 = vunpack.c.l.b16 %v1768
        %v1804 = vunpack.c.h.b16 %v1768
        %v1805 = vunpack.c.l.b16 %v1769
        %v1806 = vunpack.c.h.b16 %v1769
        %v1807 = vunpack.c.l.b16 %v1770
        %v1808 = vunpack.c.h.b16 %v1770
        %v1809 = vunpack.c.l.b16 %v1771
        %v1810 = vunpack.c.h.b16 %v1771
        %v1811 = vpack.c.b16 %v1785, %v1785
        %v1812 = vpack.c.b16 %v1786, %v1786
        %v1813 = vpack.c.b16 %v1787, %v1787
        %v1814 = vpack.c.b16 %v1788, %v1788
        %v1815 = vpack.c.b16 %v1789, %v1789
        %v1816 = vpack.c.b16 %v1790, %v1790
        %v1817 = vpack.c.b16 %v1791, %v1791
        %v1818 = vpack.c.b16 %v1792, %v1792
        %v1819 = vpack.c.b16 %v1793, %v1793
        %v1820 = vpack.c.b16 %v1794, %v1794
        %v1821 = vpack.c.b16 %v1795, %v1795
        %v1822 = vpack.c.b16 %v1796, %v1796
        %v1823 = vpack.c.b16 %v1797, %v1797
        %v1824 = vpack.c.b16 %v1798, %v1798
        %v1825 = vpack.c.b16 %v1799, %v1799
        %v1826 = vpack.c.b16 %v1800, %v1800
        %v1827 = vpack.c.b16 %v1801, %v1801
        %v1828 = vpack.c.b16 %v1802, %v1802
        %v1829 = vpack.c.b16 %v1803, %v1803
        %v1830 = vpack.c.b16 %v1804, %v1804
        %v1831 = vpack.c.b16 %v1805, %v1805
        %v1832 = vpack.c.b16 %v1806, %v1806
        %v1833 = vpack.c.b16 %v1807, %v1807
        %v1834 = vpack.c.b16 %v1808, %v1808
        %v1835 = vpack.c.b16 %v1809, %v1809
        %v1836 = vpack.c.b16 %v1810, %v1810
        %1863 = vst [vmem:[%s627] sm:$0xf] %v1811
        %1864 = vst [vmem:[%s627 + $0x4] sm:$0xf] %v1812
        %1865 = vst [vmem:[%s627 + $0x8] sm:$0xf] %v1813
        %1866 = vst [vmem:[%s627 + $0xc] sm:$0xf] %v1814
        %1867 = vst [vmem:[%s627 + $0x10] sm:$0xf] %v1815
        %1868 = vst [vmem:[%s627 + $0x14] sm:$0xf] %v1816
        %1869 = vst [vmem:[%s627 + $0x18] sm:$0xf] %v1817
        %1870 = vst [vmem:[%s627 + $0x1c] sm:$0xf] %v1818
        %1871 = vst [vmem:[%s627 + $0x20] sm:$0xf] %v1819
        %1872 = vst [vmem:[%s627 + $0x24] sm:$0xf] %v1820
        %1873 = vst [vmem:[%s627 + $0x28] sm:$0xf] %v1821
        %1874 = vst [vmem:[%s627 + $0x2c] sm:$0xf] %v1822
        %1875 = vst [vmem:[%s627 + $0x30] sm:$0xf] %v1823
        %1876 = vst [vmem:[%s627 + $0x34] sm:$0xf] %v1824
        %1877 = vst [vmem:[%s627 + $0x38] sm:$0xf] %v1825
        %1878 = vst [vmem:[%s627 + $0x3c] sm:$0xf] %v1826
        %1879 = vst [vmem:[%s627 + $0x40] sm:$0xf] %v1827
        %1880 = vst [vmem:[%s627 + $0x44] sm:$0xf] %v1828
        %1881 = vst [vmem:[%s627 + $0x48] sm:$0xf] %v1829
        %1882 = vst [vmem:[%s627 + $0x4c] sm:$0xf] %v1830
        %1883 = vst [vmem:[%s627 + $0x50] sm:$0xf] %v1831
        %1884 = vst [vmem:[%s627 + $0x54] sm:$0xf] %v1832
        %1885 = vst [vmem:[%s627 + $0x58] sm:$0xf] %v1833
        %1886 = vst [vmem:[%s627 + $0x5c] sm:$0xf] %v1834
        %1887 = vst [vmem:[%s627 + $0x60] sm:$0xf] %v1835
        %1888 = vst [vmem:[%s627 + $0x64] sm:$0xf] %v1836
        %s1889 = smul.u32 26, %s14
        %p1890 = scmp.lt.s32.totalorder %s1889, 51
        %s1891 = scalar_select %p1890, %s1889, 51
        %s1892 = smul.addr %s1891, 4
        %s1893 = scalar_lea.vmem %s3, %s1892
        // Predicated region
        $region74: #{cnn_forward.3} parent=68 // pred_check
          %p1894 = pneg %p100
        $region75: #{cnn_forward.3} parent=68 // pred_check_branch
          %1896 = sbr.rel (%p1894) target = $region77
        $region76: #{cnn_forward.3} parent=68 // pred_region
          %s1897 = smul.u32 26, %s14
        $region77: #{cnn_forward.3} parent=68 // pred_fallthru
          _
      $region69: #{cnn_forward.3} parent=5 // pred_fallthru
        _
      %p1898 = scmp.le.s32.totalorder 2, %s9
      // Predicated region
      $region78: #{cnn_forward.3} parent=5 // pred_check
        %p1899 = pneg %p1898
      $region79: #{cnn_forward.3} parent=5 // pred_check_branch
        %1901 = sbr.rel (%p1899) target = $region81
      $region80: #{cnn_forward.3} parent=5 // pred_region
        %s1902 = ssub.s32 %s9, 2
        // Predicated region
        $region82: #{cnn_forward.3} parent=80 // pred_check
          %p1903 = pneg %p106
        $region83: #{cnn_forward.3} parent=80 // pred_check_branch
          %1905 = sbr.rel (%p1903) target = $region85
        $region84: #{cnn_forward.3} parent=80 // pred_region
          %s1906 = smul.u32 26, %s15
          %p1907 = scmp.lt.s32.totalorder %s1906, 51
          %s1908 = scalar_select %p1907, %s1906, 51
          %s1909 = smul.addr %s1908, 4
          %s1910 = scalar_lea.vmem %s3, %s1909
        $region85: #{cnn_forward.3} parent=80 // pred_fallthru
          _
      $region81: #{cnn_forward.3} parent=5 // pred_fallthru
        _
    $region6: #{cnn_forward.3} parent=1 // loop_footer
      %s13 = sadd.s32 1, %s9
    $region7: #{cnn_forward.3} parent=1 // loop_footer_branch
      %8 = sbr.rel target = $region3
    $region8: #{cnn_forward.3} parent=1 // loop_exit
      _

// kernel: cnn_forward.4
$region0: #{cnn_forward.4}
  #allocation0 [shape = 'u32[]', space=smem, size = 0x4, offset = 0x4, fixed_abs, tag = 'smem constant byte address 0x4 - core index']
  #allocation1 [shape = 'u32[144,128]{1,0:T(1,128)}', space=vmem, size = 0x12000, scoped, tag = 'internal scratch']
  %s0 = inlined_call_operand.vmem [shape: bf16[4,112,400], index: 0, kind: input, shape index: {}]
  %s1 = inlined_call_operand.vmem [shape: bf16[400,128], index: 1, kind: input, shape index: {}]
  %s2 = inlined_call_operand.vmem [shape: f32[1,128], index: 2, kind: input, shape index: {}]
  %s3 = inlined_call_operand.vmem [shape: bf16[112,128], index: 3, kind: output, shape index: {}]
  %s4 = sld [smem:[#allocation0]]
  $region22: #{cnn_forward.4} parent=0
    _
  %s6 = ssub.s32 1, %s4
  %s7 = scalar_select 0, %s6, %s4
  // Predicated region
  $region2: #{cnn_forward.4} parent=0 // pred_check
    _
  $region3: #{cnn_forward.4} parent=0 // pred_check_branch
    %9 = sbr.rel (0) target = $region5
  $region4: #{cnn_forward.4} parent=0 // pred_region
    _
  $region5: #{cnn_forward.4} parent=0 // pred_fallthru
    _
  // Predicated region
  $region6: #{cnn_forward.4} parent=0 // pred_check
    _
  $region7: #{cnn_forward.4} parent=0 // pred_check_branch
    %11 = sbr.rel (0) target = $region9
  $region8: #{cnn_forward.4} parent=0 // pred_region
    _
  $region9: #{cnn_forward.4} parent=0 // pred_fallthru
    _
  // Predicated region
  $region10: #{cnn_forward.4} parent=0 // pred_check
    _
  $region11: #{cnn_forward.4} parent=0 // pred_check_branch
    %13 = sbr.rel (0) target = $region13
  $region12: #{cnn_forward.4} parent=0 // pred_region
    _
  $region13: #{cnn_forward.4} parent=0 // pred_fallthru
    _
  %v15 = vld [vmem:[%s0] sm:$0xff]
  %v16 = vld [vmem:[%s0 + $0x8] sm:$0xff]
  %v17 = vld [vmem:[%s0 + $0x10] sm:$0xff]
  %v18 = vld [vmem:[%s0 + $0x18] sm:$0xff]
  %v19 = vld [vmem:[%s0 + $0x20] sm:$0xff]
  %v20 = vld [vmem:[%s0 + $0x28] sm:$0xff]
  %v21 = vld [vmem:[%s0 + $0x30] sm:$0xff]
  %v22 = vld [vmem:[%s0 + $0x38] sm:$0xff]
  %v23 = vld [vmem:[%s0 + $0x40] sm:$0xff]
  %v24 = vld [vmem:[%s0 + $0x48] sm:$0xff]
  %v25 = vld [vmem:[%s0 + $0x50] sm:$0xff]
  %v26 = vld [vmem:[%s0 + $0x58] sm:$0xff]
  %v27 = vld [vmem:[%s0 + $0x60] sm:$0xff]
  %v28 = vld [vmem:[%s0 + $0x68] sm:$0xff]
  %v29 = vld [vmem:[%s0 + $0x70] sm:$0xff]
  %v30 = vld [vmem:[%s0 + $0x78] sm:$0xff]
  %v31 = vld [vmem:[%s0 + $0x80] sm:$0xff]
  %v32 = vld [vmem:[%s0 + $0x88] sm:$0xff]
  %v33 = vld [vmem:[%s0 + $0x90] sm:$0xff]
  %v34 = vld [vmem:[%s0 + $0x98] sm:$0xff]
  %v35 = vld [vmem:[%s0 + $0xa0] sm:$0xff]
  %v36 = vld [vmem:[%s0 + $0xa8] sm:$0xff]
  %v37 = vld [vmem:[%s0 + $0xb0] sm:$0xff]
  %v38 = vld [vmem:[%s0 + $0xb8] sm:$0xff]
  %v39 = vld [vmem:[%s0 + $0xc0] sm:$0xff]
  %v40 = vld [vmem:[%s0 + $0xc8] sm:$0xff]
  %v41 = vld [vmem:[%s0 + $0xd0] sm:$0xff]
  %v42 = vld [vmem:[%s0 + $0xd8] sm:$0xff]
  %v43 = vld [vmem:[%s0 + $0xe0] sm:$0xff]
  %v44 = vld [vmem:[%s0 + $0xe8] sm:$0xff]
  %v45 = vld [vmem:[%s0 + $0xf0] sm:$0xff]
  %v46 = vld [vmem:[%s0 + $0xf8] sm:$0xff]
  %v47 = vld [vmem:[%s0 + $0x100] sm:$0xff]
  %v48 = vld [vmem:[%s0 + $0x108] sm:$0xff]
  %v49 = vld [vmem:[%s0 + $0x110] sm:$0xff]
  %v50 = vld [vmem:[%s0 + $0x118] sm:$0xff]
  %v51 = vld [vmem:[%s0 + $0x120] sm:$0xff]
  %v52 = vld [vmem:[%s0 + $0x128] sm:$0xff]
  %v53 = vld [vmem:[%s0 + $0x130] sm:$0xff]
  %v54 = vld [vmem:[%s0 + $0x138] sm:$0xff]
  %v55 = vld [vmem:[%s0 + $0x140] sm:$0xff]
  %v56 = vld [vmem:[%s0 + $0x148] sm:$0xff]
  %v57 = vld [vmem:[%s0 + $0x150] sm:$0xff]
  %v58 = vld [vmem:[%s0 + $0x158] sm:$0xff]
  %v59 = vld [vmem:[%s0 + $0x160] sm:$0xff]
  %v60 = vld [vmem:[%s0 + $0x168] sm:$0xff]
  %v61 = vld [vmem:[%s0 + $0x170] sm:$0xff]
  %v62 = vld [vmem:[%s0 + $0x178] sm:$0xff]
  %v63 = vld [vmem:[%s0 + $0x180] sm:$0xff]
  %v64 = vld [vmem:[%s0 + $0x188] sm:$0xff]
  %v65 = vld [vmem:[%s0 + $0x190] sm:$0xff]
  %v66 = vld [vmem:[%s0 + $0x198] sm:$0xff]
  %v67 = vld [vmem:[%s0 + $0x1a0] sm:$0xff]
  %v68 = vld [vmem:[%s0 + $0x1a8] sm:$0xff]
  %v69 = vld [vmem:[%s0 + $0x1b0] sm:$0xff]
  %v70 = vld [vmem:[%s0 + $0x1b8] sm:$0xff]
  %v71 = vld [vmem:[%s0 + $0x1c0] sm:$0xff]
  %v72 = vld [vmem:[%s0 + $0x1c8] sm:$0xff]
  %v73 = vld [vmem:[%s0 + $0x1d0] sm:$0xff]
  %v74 = vld [vmem:[%s0 + $0x1d8] sm:$0xff]
  %v75 = vld [vmem:[%s0 + $0x1e0] sm:$0xff]
  %v76 = vld [vmem:[%s0 + $0x1e8] sm:$0xff]
  %v77 = vld [vmem:[%s0 + $0x1f0] sm:$0xff]
  %v78 = vld [vmem:[%s0 + $0x1f8] sm:$0xff]
  %v79 = vld [vmem:[%s0 + $0x200] sm:$0xff]
  %v80 = vld [vmem:[%s0 + $0x208] sm:$0xff]
  %v81 = vld [vmem:[%s0 + $0x210] sm:$0xff]
  %v82 = vld [vmem:[%s0 + $0x218] sm:$0xff]
  %v83 = vld [vmem:[%s0 + $0x220] sm:$0xff]
  %v84 = vld [vmem:[%s0 + $0x228] sm:$0xff]
  %v85 = vld [vmem:[%s0 + $0x230] sm:$0xff]
  %v86 = vld [vmem:[%s0 + $0x238] sm:$0xff]
  %v87 = vld [vmem:[%s0 + $0x240] sm:$0xff]
  %v88 = vld [vmem:[%s0 + $0x248] sm:$0xff]
  %v89 = vld [vmem:[%s0 + $0x250] sm:$0xff]
  %v90 = vld [vmem:[%s0 + $0x258] sm:$0xff]
  %v91 = vld [vmem:[%s0 + $0x260] sm:$0xff]
  %v92 = vld [vmem:[%s0 + $0x268] sm:$0xff]
  %v93 = vld [vmem:[%s0 + $0x270] sm:$0xff]
  %v94 = vld [vmem:[%s0 + $0x278] sm:$0xff]
  %v95 = vld [vmem:[%s0 + $0x280] sm:$0xff]
  %v96 = vld [vmem:[%s0 + $0x288] sm:$0xff]
  %v97 = vld [vmem:[%s0 + $0x290] sm:$0xff]
  %v98 = vld [vmem:[%s0 + $0x298] sm:$0xff]
  %v99 = vld [vmem:[%s0 + $0x2a0] sm:$0xff]
  %v100 = vld [vmem:[%s0 + $0x2a8] sm:$0xff]
  %v101 = vld [vmem:[%s0 + $0x2b0] sm:$0xff]
  %v102 = vld [vmem:[%s0 + $0x2b8] sm:$0xff]
  %v103 = vld [vmem:[%s0 + $0x2c0] sm:$0xff]
  %v104 = vld [vmem:[%s0 + $0x2c8] sm:$0xff]
  %v105 = vld [vmem:[%s0 + $0x2d0] sm:$0xff]
  %v106 = vld [vmem:[%s0 + $0x2d8] sm:$0xff]
  %v107 = vld [vmem:[%s0 + $0x2e0] sm:$0xff]
  %v108 = vld [vmem:[%s0 + $0x2e8] sm:$0xff]
  %v109 = vld [vmem:[%s0 + $0x2f0] sm:$0xff]
  %v110 = vld [vmem:[%s0 + $0x2f8] sm:$0xff]
  %v111 = vld [vmem:[%s0 + $0x300] sm:$0xff]
  %v112 = vld [vmem:[%s0 + $0x308] sm:$0xff]
  %v113 = vld [vmem:[%s0 + $0x310] sm:$0xff]
  %v114 = vld [vmem:[%s0 + $0x318] sm:$0xff]
  %v115 = vld [vmem:[%s0 + $0x320] sm:$0xff]
  %v116 = vld [vmem:[%s0 + $0x328] sm:$0xff]
  %v117 = vld [vmem:[%s0 + $0x330] sm:$0xff]
  %v118 = vld [vmem:[%s0 + $0x338] sm:$0xff]
  %v119 = vld [vmem:[%s0 + $0x340] sm:$0xff]
  %v120 = vld [vmem:[%s0 + $0x348] sm:$0xff]
  %v121 = vld [vmem:[%s0 + $0x350] sm:$0xff]
  %v122 = vld [vmem:[%s0 + $0x358] sm:$0xff]
  %v123 = vld [vmem:[%s0 + $0x360] sm:$0xff]
  %v124 = vld [vmem:[%s0 + $0x368] sm:$0xff]
  %v125 = vld [vmem:[%s0 + $0x370] sm:$0xff]
  %v126 = vld [vmem:[%s0 + $0x378] sm:$0xff]
  %v127 = vld [vmem:[%s1] sm:$0xf]
  %v128 = vld [vmem:[%s1 + $0x4] sm:$0xf]
  %v129 = vld [vmem:[%s1 + $0x8] sm:$0xf]
  %v130 = vld [vmem:[%s1 + $0xc] sm:$0xf]
  %v131 = vld [vmem:[%s1 + $0x10] sm:$0xf]
  %v132 = vld [vmem:[%s1 + $0x14] sm:$0xf]
  %v133 = vld [vmem:[%s1 + $0x18] sm:$0xf]
  %v134 = vld [vmem:[%s1 + $0x1c] sm:$0xf]
  %v135 = vld [vmem:[%s1 + $0x20] sm:$0xf]
  %v136 = vld [vmem:[%s1 + $0x24] sm:$0xf]
  %v137 = vld [vmem:[%s1 + $0x28] sm:$0xf]
  %v138 = vld [vmem:[%s1 + $0x2c] sm:$0xf]
  %v139 = vld [vmem:[%s1 + $0x30] sm:$0xf]
  %v140 = vld [vmem:[%s1 + $0x34] sm:$0xf]
  %v141 = vld [vmem:[%s1 + $0x38] sm:$0xf]
  %v142 = vld [vmem:[%s1 + $0x3c] sm:$0xf]
  %v143 = vld [vmem:[%s1 + $0x40] sm:$0xf]
  %v144 = vld [vmem:[%s1 + $0x44] sm:$0xf]
  %v145 = vld [vmem:[%s1 + $0x48] sm:$0xf]
  %v146 = vld [vmem:[%s1 + $0x4c] sm:$0xf]
  %v147 = vld [vmem:[%s1 + $0x50] sm:$0xf]
  %v148 = vld [vmem:[%s1 + $0x54] sm:$0xf]
  %v149 = vld [vmem:[%s1 + $0x58] sm:$0xf]
  %v150 = vld [vmem:[%s1 + $0x5c] sm:$0xf]
  %v151 = vld [vmem:[%s1 + $0x60] sm:$0xf]
  %v152 = vld [vmem:[%s1 + $0x64] sm:$0xf]
  %v153 = vld [vmem:[%s1 + $0x68] sm:$0xf]
  %v154 = vld [vmem:[%s1 + $0x6c] sm:$0xf]
  %v155 = vld [vmem:[%s1 + $0x70] sm:$0xf]
  %v156 = vld [vmem:[%s1 + $0x74] sm:$0xf]
  %v157 = vld [vmem:[%s1 + $0x78] sm:$0xf]
  %v158 = vld [vmem:[%s1 + $0x7c] sm:$0xf]
  %v159 = vld [vmem:[%s1 + $0x80] sm:$0xf]
  %v160 = vld [vmem:[%s1 + $0x84] sm:$0xf]
  %v161 = vld [vmem:[%s1 + $0x88] sm:$0xf]
  %v162 = vld [vmem:[%s1 + $0x8c] sm:$0xf]
  %v163 = vld [vmem:[%s1 + $0x90] sm:$0xf]
  %v164 = vld [vmem:[%s1 + $0x94] sm:$0xf]
  %v165 = vld [vmem:[%s1 + $0x98] sm:$0xf]
  %v166 = vld [vmem:[%s1 + $0x9c] sm:$0xf]
  %v167 = vld [vmem:[%s1 + $0xa0] sm:$0xf]
  %v168 = vld [vmem:[%s1 + $0xa4] sm:$0xf]
  %v169 = vld [vmem:[%s1 + $0xa8] sm:$0xf]
  %v170 = vld [vmem:[%s1 + $0xac] sm:$0xf]
  %v171 = vld [vmem:[%s1 + $0xb0] sm:$0xf]
  %v172 = vld [vmem:[%s1 + $0xb4] sm:$0xf]
  %v173 = vld [vmem:[%s1 + $0xb8] sm:$0xf]
  %v174 = vld [vmem:[%s1 + $0xbc] sm:$0xf]
  %v175 = vld [vmem:[%s1 + $0xc0] sm:$0xf]
  %v176 = vld [vmem:[%s1 + $0xc4] sm:$0xf]
  %v289 = vunpack.c.l.b16 %v15
  %v290 = vunpack.c.h.b16 %v15
  %v291 = vunpack.c.l.b16 %v16
  %v292 = vunpack.c.h.b16 %v16
  %v293 = vunpack.c.l.b16 %v17
  %v294 = vunpack.c.h.b16 %v17
  %v295 = vunpack.c.l.b16 %v18
  %v296 = vunpack.c.h.b16 %v18
  %v297 = vunpack.c.l.b16 %v19
  %v298 = vunpack.c.h.b16 %v19
  %v299 = vunpack.c.l.b16 %v20
  %v300 = vunpack.c.h.b16 %v20
  %v301 = vunpack.c.l.b16 %v21
  %v302 = vunpack.c.h.b16 %v21
  %v303 = vunpack.c.l.b16 %v22
  %v304 = vunpack.c.h.b16 %v22
  %v305 = vunpack.c.l.b16 %v23
  %v306 = vunpack.c.h.b16 %v23
  %v307 = vunpack.c.l.b16 %v24
  %v308 = vunpack.c.h.b16 %v24
  %v309 = vunpack.c.l.b16 %v25
  %v310 = vunpack.c.h.b16 %v25
  %v311 = vunpack.c.l.b16 %v26
  %v312 = vunpack.c.h.b16 %v26
  %v313 = vunpack.c.l.b16 %v27
  %v314 = vunpack.c.h.b16 %v27
  %v315 = vunpack.c.l.b16 %v28
  %v316 = vunpack.c.h.b16 %v28
  %v317 = vunpack.c.l.b16 %v29
  %v318 = vunpack.c.h.b16 %v29
  %v319 = vunpack.c.l.b16 %v30
  %v320 = vunpack.c.h.b16 %v30
  %v321 = vunpack.c.l.b16 %v31
  %v322 = vunpack.c.h.b16 %v31
  %v323 = vunpack.c.l.b16 %v32
  %v324 = vunpack.c.h.b16 %v32
  %v325 = vunpack.c.l.b16 %v33
  %v326 = vunpack.c.h.b16 %v33
  %v327 = vunpack.c.l.b16 %v34
  %v328 = vunpack.c.h.b16 %v34
  %v329 = vunpack.c.l.b16 %v35
  %v330 = vunpack.c.h.b16 %v35
  %v331 = vunpack.c.l.b16 %v36
  %v332 = vunpack.c.h.b16 %v36
  %v333 = vunpack.c.l.b16 %v37
  %v334 = vunpack.c.h.b16 %v37
  %v335 = vunpack.c.l.b16 %v38
  %v336 = vunpack.c.h.b16 %v38
  %v337 = vunpack.c.l.b16 %v39
  %v338 = vunpack.c.h.b16 %v39
  %v339 = vunpack.c.l.b16 %v40
  %v340 = vunpack.c.h.b16 %v40
  %v341 = vunpack.c.l.b16 %v41
  %v342 = vunpack.c.h.b16 %v41
  %v343 = vunpack.c.l.b16 %v42
  %v344 = vunpack.c.h.b16 %v42
  %v345 = vunpack.c.l.b16 %v43
  %v346 = vunpack.c.h.b16 %v43
  %v347 = vunpack.c.l.b16 %v44
  %v348 = vunpack.c.h.b16 %v44
  %v349 = vunpack.c.l.b16 %v45
  %v350 = vunpack.c.h.b16 %v45
  %v351 = vunpack.c.l.b16 %v46
  %v352 = vunpack.c.h.b16 %v46
  %v353 = vunpack.c.l.b16 %v47
  %v354 = vunpack.c.h.b16 %v47
  %v355 = vunpack.c.l.b16 %v48
  %v356 = vunpack.c.h.b16 %v48
  %v357 = vunpack.c.l.b16 %v49
  %v358 = vunpack.c.h.b16 %v49
  %v359 = vunpack.c.l.b16 %v50
  %v360 = vunpack.c.h.b16 %v50
  %v361 = vunpack.c.l.b16 %v51
  %v362 = vunpack.c.h.b16 %v51
  %v363 = vunpack.c.l.b16 %v52
  %v364 = vunpack.c.h.b16 %v52
  %v365 = vunpack.c.l.b16 %v53
  %v366 = vunpack.c.h.b16 %v53
  %v367 = vunpack.c.l.b16 %v54
  %v368 = vunpack.c.h.b16 %v54
  %v369 = vunpack.c.l.b16 %v55
  %v370 = vunpack.c.h.b16 %v55
  %v371 = vunpack.c.l.b16 %v56
  %v372 = vunpack.c.h.b16 %v56
  %v373 = vunpack.c.l.b16 %v57
  %v374 = vunpack.c.h.b16 %v57
  %v375 = vunpack.c.l.b16 %v58
  %v376 = vunpack.c.h.b16 %v58
  %v377 = vunpack.c.l.b16 %v59
  %v378 = vunpack.c.h.b16 %v59
  %v379 = vunpack.c.l.b16 %v60
  %v380 = vunpack.c.h.b16 %v60
  %v381 = vunpack.c.l.b16 %v61
  %v382 = vunpack.c.h.b16 %v61
  %v383 = vunpack.c.l.b16 %v62
  %v384 = vunpack.c.h.b16 %v62
  %v385 = vunpack.c.l.b16 %v63
  %v386 = vunpack.c.h.b16 %v63
  %v387 = vunpack.c.l.b16 %v64
  %v388 = vunpack.c.h.b16 %v64
  %v389 = vunpack.c.l.b16 %v65
  %v390 = vunpack.c.h.b16 %v65
  %v391 = vunpack.c.l.b16 %v66
  %v392 = vunpack.c.h.b16 %v66
  %v393 = vunpack.c.l.b16 %v67
  %v394 = vunpack.c.h.b16 %v67
  %v395 = vunpack.c.l.b16 %v68
  %v396 = vunpack.c.h.b16 %v68
  %v397 = vunpack.c.l.b16 %v69
  %v398 = vunpack.c.h.b16 %v69
  %v399 = vunpack.c.l.b16 %v70
  %v400 = vunpack.c.h.b16 %v70
  %v401 = vunpack.c.l.b16 %v71
  %v402 = vunpack.c.h.b16 %v71
  %v403 = vunpack.c.l.b16 %v72
  %v404 = vunpack.c.h.b16 %v72
  %v405 = vunpack.c.l.b16 %v73
  %v406 = vunpack.c.h.b16 %v73
  %v407 = vunpack.c.l.b16 %v74
  %v408 = vunpack.c.h.b16 %v74
  %v409 = vunpack.c.l.b16 %v75
  %v410 = vunpack.c.h.b16 %v75
  %v411 = vunpack.c.l.b16 %v76
  %v412 = vunpack.c.h.b16 %v76
  %v413 = vunpack.c.l.b16 %v77
  %v414 = vunpack.c.h.b16 %v77
  %v415 = vunpack.c.l.b16 %v78
  %v416 = vunpack.c.h.b16 %v78
  %v417 = vunpack.c.l.b16 %v79
  %v418 = vunpack.c.h.b16 %v79
  %v419 = vunpack.c.l.b16 %v80
  %v420 = vunpack.c.h.b16 %v80
  %v421 = vunpack.c.l.b16 %v81
  %v422 = vunpack.c.h.b16 %v81
  %v423 = vunpack.c.l.b16 %v82
  %v424 = vunpack.c.h.b16 %v82
  %v425 = vunpack.c.l.b16 %v83
  %v426 = vunpack.c.h.b16 %v83
  %v427 = vunpack.c.l.b16 %v84
  %v428 = vunpack.c.h.b16 %v84
  %v429 = vunpack.c.l.b16 %v85
  %v430 = vunpack.c.h.b16 %v85
  %v431 = vunpack.c.l.b16 %v86
  %v432 = vunpack.c.h.b16 %v86
  %v433 = vunpack.c.l.b16 %v87
  %v434 = vunpack.c.h.b16 %v87
  %v435 = vunpack.c.l.b16 %v88
  %v436 = vunpack.c.h.b16 %v88
  %v437 = vunpack.c.l.b16 %v89
  %v438 = vunpack.c.h.b16 %v89
  %v439 = vunpack.c.l.b16 %v90
  %v440 = vunpack.c.h.b16 %v90
  %v441 = vunpack.c.l.b16 %v91
  %v442 = vunpack.c.h.b16 %v91
  %v443 = vunpack.c.l.b16 %v92
  %v444 = vunpack.c.h.b16 %v92
  %v445 = vunpack.c.l.b16 %v93
  %v446 = vunpack.c.h.b16 %v93
  %v447 = vunpack.c.l.b16 %v94
  %v448 = vunpack.c.h.b16 %v94
  %v449 = vunpack.c.l.b16 %v95
  %v450 = vunpack.c.h.b16 %v95
  %v451 = vunpack.c.l.b16 %v96
  %v452 = vunpack.c.h.b16 %v96
  %v453 = vunpack.c.l.b16 %v97
  %v454 = vunpack.c.h.b16 %v97
  %v455 = vunpack.c.l.b16 %v98
  %v456 = vunpack.c.h.b16 %v98
  %v457 = vunpack.c.l.b16 %v99
  %v458 = vunpack.c.h.b16 %v99
  %v459 = vunpack.c.l.b16 %v100
  %v460 = vunpack.c.h.b16 %v100
  %v461 = vunpack.c.l.b16 %v101
  %v462 = vunpack.c.h.b16 %v101
  %v463 = vunpack.c.l.b16 %v102
  %v464 = vunpack.c.h.b16 %v102
  %v465 = vunpack.c.l.b16 %v103
  %v466 = vunpack.c.h.b16 %v103
  %v467 = vunpack.c.l.b16 %v104
  %v468 = vunpack.c.h.b16 %v104
  %v469 = vunpack.c.l.b16 %v105
  %v470 = vunpack.c.h.b16 %v105
  %v471 = vunpack.c.l.b16 %v106
  %v472 = vunpack.c.h.b16 %v106
  %v473 = vunpack.c.l.b16 %v107
  %v474 = vunpack.c.h.b16 %v107
  %v475 = vunpack.c.l.b16 %v108
  %v476 = vunpack.c.h.b16 %v108
  %v477 = vunpack.c.l.b16 %v109
  %v478 = vunpack.c.h.b16 %v109
  %v479 = vunpack.c.l.b16 %v110
  %v480 = vunpack.c.h.b16 %v110
  %v481 = vunpack.c.l.b16 %v111
  %v482 = vunpack.c.h.b16 %v111
  %v483 = vunpack.c.l.b16 %v112
  %v484 = vunpack.c.h.b16 %v112
  %v485 = vunpack.c.l.b16 %v113
  %v486 = vunpack.c.h.b16 %v113
  %v487 = vunpack.c.l.b16 %v114
  %v488 = vunpack.c.h.b16 %v114
  %v489 = vunpack.c.l.b16 %v115
  %v490 = vunpack.c.h.b16 %v115
  %v491 = vunpack.c.l.b16 %v116
  %v492 = vunpack.c.h.b16 %v116
  %v493 = vunpack.c.l.b16 %v117
  %v494 = vunpack.c.h.b16 %v117
  %v495 = vunpack.c.l.b16 %v118
  %v496 = vunpack.c.h.b16 %v118
  %v497 = vunpack.c.l.b16 %v119
  %v498 = vunpack.c.h.b16 %v119
  %v499 = vunpack.c.l.b16 %v120
  %v500 = vunpack.c.h.b16 %v120
  %v501 = vunpack.c.l.b16 %v121
  %v502 = vunpack.c.h.b16 %v121
  %v503 = vunpack.c.l.b16 %v122
  %v504 = vunpack.c.h.b16 %v122
  %v505 = vunpack.c.l.b16 %v123
  %v506 = vunpack.c.h.b16 %v123
  %v507 = vunpack.c.l.b16 %v124
  %v508 = vunpack.c.h.b16 %v124
  %v509 = vunpack.c.l.b16 %v125
  %v510 = vunpack.c.h.b16 %v125
  %v511 = vunpack.c.l.b16 %v126
  %v512 = vunpack.c.h.b16 %v126
  %v513 = vpack.c.b16 %v293, %v289
  %v514 = vpack.c.b16 %v294, %v290
  %v515 = vpack.c.b16 %v295, %v291
  %v516 = vpack.c.b16 %v296, %v292
  %v517 = vpack.c.b16 %v301, %v297
  %v518 = vpack.c.b16 %v302, %v298
  %v519 = vpack.c.b16 %v303, %v299
  %v520 = vpack.c.b16 %v304, %v300
  %v521 = vpack.c.b16 %v309, %v305
  %v522 = vpack.c.b16 %v310, %v306
  %v523 = vpack.c.b16 %v311, %v307
  %v524 = vpack.c.b16 %v312, %v308
  %v525 = vpack.c.b16 %v317, %v313
  %v526 = vpack.c.b16 %v318, %v314
  %v527 = vpack.c.b16 %v319, %v315
  %v528 = vpack.c.b16 %v320, %v316
  %v529 = vpack.c.b16 %v325, %v321
  %v530 = vpack.c.b16 %v326, %v322
  %v531 = vpack.c.b16 %v327, %v323
  %v532 = vpack.c.b16 %v328, %v324
  %v533 = vpack.c.b16 %v333, %v329
  %v534 = vpack.c.b16 %v334, %v330
  %v535 = vpack.c.b16 %v335, %v331
  %v536 = vpack.c.b16 %v336, %v332
  %v537 = vpack.c.b16 %v341, %v337
  %v538 = vpack.c.b16 %v342, %v338
  %v539 = vpack.c.b16 %v343, %v339
  %v540 = vpack.c.b16 %v344, %v340
  %v541 = vpack.c.b16 %v349, %v345
  %v542 = vpack.c.b16 %v350, %v346
  %v543 = vpack.c.b16 %v351, %v347
  %v544 = vpack.c.b16 %v352, %v348
  %v545 = vpack.c.b16 %v357, %v353
  %v546 = vpack.c.b16 %v358, %v354
  %v547 = vpack.c.b16 %v359, %v355
  %v548 = vpack.c.b16 %v360, %v356
  %v549 = vpack.c.b16 %v365, %v361
  %v550 = vpack.c.b16 %v366, %v362
  %v551 = vpack.c.b16 %v367, %v363
  %v552 = vpack.c.b16 %v368, %v364
  %v553 = vpack.c.b16 %v373, %v369
  %v554 = vpack.c.b16 %v374, %v370
  %v555 = vpack.c.b16 %v375, %v371
  %v556 = vpack.c.b16 %v376, %v372
  %v557 = vpack.c.b16 %v381, %v377
  %v558 = vpack.c.b16 %v382, %v378
  %v559 = vpack.c.b16 %v383, %v379
  %v560 = vpack.c.b16 %v384, %v380
  %v561 = vpack.c.b16 %v389, %v385
  %v562 = vpack.c.b16 %v390, %v386
  %v563 = vpack.c.b16 %v391, %v387
  %v564 = vpack.c.b16 %v392, %v388
  %v565 = vpack.c.b16 %v397, %v393
  %v566 = vpack.c.b16 %v398, %v394
  %v567 = vpack.c.b16 %v399, %v395
  %v568 = vpack.c.b16 %v400, %v396
  %v569 = vpack.c.b16 %v405, %v401
  %v570 = vpack.c.b16 %v406, %v402
  %v571 = vpack.c.b16 %v407, %v403
  %v572 = vpack.c.b16 %v408, %v404
  %v573 = vpack.c.b16 %v413, %v409
  %v574 = vpack.c.b16 %v414, %v410
  %v575 = vpack.c.b16 %v415, %v411
  %v576 = vpack.c.b16 %v416, %v412
  %v577 = vpack.c.b16 %v421, %v417
  %v578 = vpack.c.b16 %v422, %v418
  %v579 = vpack.c.b16 %v423, %v419
  %v580 = vpack.c.b16 %v424, %v420
  %v581 = vpack.c.b16 %v429, %v425
  %v582 = vpack.c.b16 %v430, %v426
  %v583 = vpack.c.b16 %v431, %v427
  %v584 = vpack.c.b16 %v432, %v428
  %v585 = vpack.c.b16 %v437, %v433
  %v586 = vpack.c.b16 %v438, %v434
  %v587 = vpack.c.b16 %v439, %v435
  %v588 = vpack.c.b16 %v440, %v436
  %v589 = vpack.c.b16 %v445, %v441
  %v590 = vpack.c.b16 %v446, %v442
  %v591 = vpack.c.b16 %v447, %v443
  %v592 = vpack.c.b16 %v448, %v444
  %v593 = vpack.c.b16 %v453, %v449
  %v594 = vpack.c.b16 %v454, %v450
  %v595 = vpack.c.b16 %v455, %v451
  %v596 = vpack.c.b16 %v456, %v452
  %v597 = vpack.c.b16 %v461, %v457
  %v598 = vpack.c.b16 %v462, %v458
  %v599 = vpack.c.b16 %v463, %v459
  %v600 = vpack.c.b16 %v464, %v460
  %v601 = vpack.c.b16 %v469, %v465
  %v602 = vpack.c.b16 %v470, %v466
  %v603 = vpack.c.b16 %v471, %v467
  %v604 = vpack.c.b16 %v472, %v468
  %v605 = vpack.c.b16 %v477, %v473
  %v606 = vpack.c.b16 %v478, %v474
  %v607 = vpack.c.b16 %v479, %v475
  %v608 = vpack.c.b16 %v480, %v476
  %v609 = vpack.c.b16 %v485, %v481
  %v610 = vpack.c.b16 %v486, %v482
  %v611 = vpack.c.b16 %v487, %v483
  %v612 = vpack.c.b16 %v488, %v484
  %v613 = vpack.c.b16 %v493, %v489
  %v614 = vpack.c.b16 %v494, %v490
  %v615 = vpack.c.b16 %v495, %v491
  %v616 = vpack.c.b16 %v496, %v492
  %v617 = vpack.c.b16 %v501, %v497
  %v618 = vpack.c.b16 %v502, %v498
  %v619 = vpack.c.b16 %v503, %v499
  %v620 = vpack.c.b16 %v504, %v500
  %v621 = vpack.c.b16 %v509, %v505
  %v622 = vpack.c.b16 %v510, %v506
  %v623 = vpack.c.b16 %v511, %v507
  %v624 = vpack.c.b16 %v512, %v508
  %v759 = vunpack.c.l.b16 %v127
  %v760 = vunpack.c.l.b16 %v128
  %v761 = vunpack.c.l.b16 %v129
  %v762 = vunpack.c.l.b16 %v130
  %v763 = vunpack.c.l.b16 %v131
  %v764 = vunpack.c.l.b16 %v132
  %v765 = vunpack.c.l.b16 %v133
  %v766 = vunpack.c.l.b16 %v134
  %v767 = vunpack.c.l.b16 %v135
  %v768 = vunpack.c.l.b16 %v136
  %v769 = vunpack.c.l.b16 %v137
  %v770 = vunpack.c.l.b16 %v138
  %v771 = vunpack.c.l.b16 %v139
  %v772 = vunpack.c.l.b16 %v140
  %v773 = vunpack.c.l.b16 %v141
  %v774 = vunpack.c.l.b16 %v142
  %v775 = vunpack.c.l.b16 %v143
  %v776 = vunpack.c.l.b16 %v144
  %v777 = vunpack.c.l.b16 %v145
  %v778 = vunpack.c.l.b16 %v146
  %v779 = vunpack.c.l.b16 %v147
  %v780 = vunpack.c.l.b16 %v148
  %v781 = vunpack.c.l.b16 %v149
  %v782 = vunpack.c.l.b16 %v150
  %v783 = vunpack.c.l.b16 %v151
  %v784 = vunpack.c.l.b16 %v152
  %v785 = vunpack.c.l.b16 %v153
  %v786 = vunpack.c.l.b16 %v154
  %v787 = vunpack.c.l.b16 %v155
  %v788 = vunpack.c.l.b16 %v156
  %v789 = vunpack.c.l.b16 %v157
  %v790 = vunpack.c.l.b16 %v158
  %v791 = vunpack.c.l.b16 %v159
  %v792 = vunpack.c.l.b16 %v160
  %v793 = vunpack.c.l.b16 %v161
  %v794 = vunpack.c.l.b16 %v162
  %v795 = vunpack.c.l.b16 %v163
  %v796 = vunpack.c.l.b16 %v164
  %v797 = vunpack.c.l.b16 %v165
  %v798 = vunpack.c.l.b16 %v166
  %v799 = vunpack.c.l.b16 %v167
  %v800 = vunpack.c.l.b16 %v168
  %v801 = vunpack.c.l.b16 %v169
  %v802 = vunpack.c.l.b16 %v170
  %v803 = vunpack.c.l.b16 %v171
  %v804 = vunpack.c.l.b16 %v172
  %v805 = vunpack.c.l.b16 %v173
  %v806 = vunpack.c.l.b16 %v174
  %v807 = vunpack.c.l.b16 %v175
  %v808 = vunpack.c.l.b16 %v176
  %v809 = vpack.c.b16 %v760, %v759
  %v810 = vpack.c.b16 %v762, %v761
  %v811 = vpack.c.b16 %v764, %v763
  %v812 = vpack.c.b16 %v766, %v765
  %v813 = vpack.c.b16 %v768, %v767
  %v814 = vpack.c.b16 %v770, %v769
  %v815 = vpack.c.b16 %v772, %v771
  %v816 = vpack.c.b16 %v774, %v773
  %v817 = vpack.c.b16 %v776, %v775
  %v818 = vpack.c.b16 %v778, %v777
  %v819 = vpack.c.b16 %v780, %v779
  %v820 = vpack.c.b16 %v782, %v781
  %v821 = vpack.c.b16 %v784, %v783
  %v822 = vpack.c.b16 %v786, %v785
  %v823 = vpack.c.b16 %v788, %v787
  %v824 = vpack.c.b16 %v790, %v789
  %v825 = vpack.c.b16 %v792, %v791
  %v826 = vpack.c.b16 %v794, %v793
  %v827 = vpack.c.b16 %v796, %v795
  %v828 = vpack.c.b16 %v798, %v797
  %v829 = vpack.c.b16 %v800, %v799
  %v830 = vpack.c.b16 %v802, %v801
  %v831 = vpack.c.b16 %v804, %v803
  %v832 = vpack.c.b16 %v806, %v805
  %v833 = vpack.c.b16 %v808, %v807
  %vm859 = vcmask 130048
  %v861 = vsel %vm859, %v516, 0
  %v864 = vsel %vm859, %v520, 0
  %v867 = vsel %vm859, %v524, 0
  %v870 = vsel %vm859, %v528, 0
  %v873 = vsel %vm859, %v532, 0
  %v876 = vsel %vm859, %v536, 0
  %v879 = vsel %vm859, %v540, 0
  %v882 = vsel %vm859, %v544, 0
  %v885 = vsel %vm859, %v548, 0
  %v888 = vsel %vm859, %v552, 0
  %v891 = vsel %vm859, %v556, 0
  %v894 = vsel %vm859, %v560, 0
  %v897 = vsel %vm859, %v564, 0
  %v900 = vsel %vm859, %v568, 0
  %v903 = vsel %vm859, %v572, 0
  %v906 = vsel %vm859, %v576, 0
  %v909 = vsel %vm859, %v580, 0
  %v912 = vsel %vm859, %v584, 0
  %v915 = vsel %vm859, %v588, 0
  %v918 = vsel %vm859, %v592, 0
  %v921 = vsel %vm859, %v596, 0
  %v924 = vsel %vm859, %v600, 0
  %v927 = vsel %vm859, %v604, 0
  %v930 = vsel %vm859, %v608, 0
  %v933 = vsel %vm859, %v612, 0
  %v936 = vsel %vm859, %v616, 0
  %v939 = vsel %vm859, %v620, 0
  %v942 = vsel %vm859, %v624, 0
  %944 = vmatprep.subr.bf16.mxu0 0
  %945 = vmatpush1.bf16.msra.mxu0 %v816
  %946 = vmatprep.subr.bf16.mxu0 0
  %947 = vmatpush1.bf16.msra.mxu0 %v815
  %948 = vmatprep.subr.bf16.mxu0 0
  %949 = vmatpush1.bf16.msra.mxu0 %v814
  %950 = vmatprep.subr.bf16.mxu0 0
  %951 = vmatpush1.bf16.msra.mxu0 %v813
  %952 = vmatprep.subr.bf16.mxu0 0
  %953 = vmatpush1.bf16.msra.mxu0 %v812
  %954 = vmatprep.subr.bf16.mxu0 0
  %955 = vmatpush1.bf16.msra.mxu0 %v811
  %956 = vmatprep.subr.bf16.mxu0 0
  %957 = vmatpush1.bf16.msra.mxu0 %v810
  %958 = vmatprep.subr.bf16.mxu0 0
  %959 = vmatpush1.bf16.msra.mxu0 %v809
  %960 = vmatprep.subr.bf16.mxu0 0
  %961 = vmatpush2.bf16.msra.mxu0 %v824
  %962 = vmatprep.subr.bf16.mxu0 0
  %963 = vmatpush2.bf16.msra.mxu0 %v823
  %964 = vmatprep.subr.bf16.mxu0 0
  %965 = vmatpush2.bf16.msra.mxu0 %v822
  %966 = vmatprep.subr.bf16.mxu0 0
  %967 = vmatpush2.bf16.msra.mxu0 %v821
  %968 = vmatprep.subr.bf16.mxu0 0
  %969 = vmatpush2.bf16.msra.mxu0 %v820
  %970 = vmatprep.subr.bf16.mxu0 0
  %971 = vmatpush2.bf16.msra.mxu0 %v819
  %972 = vmatprep.subr.bf16.mxu0 0
  %973 = vmatpush2.bf16.msra.mxu0 %v818
  %974 = vmatprep.subr.bf16.mxu0 0
  %975 = vmatpush2.bf16.msra.mxu0 %v817
  %976 = vmatprep.mubr.bf16.mxu0 %v514
  %977 = vmatmul.mubr.bf16.gmra.mxu0 %v513
  %v978 = vpop.f32.mrf.mxu0
  %v979 = vadd.f32 0.0, %v978
  %v980 = vpop.f32.mrf.mxu0
  %v981 = vpop.f32.mrf.mxu0
  %v982 = vadd.f32 0.0, %v981
  %v983 = vpop.f32.mrf.mxu0
  %984 = vmatprep.mubr.bf16.mxu0 %v518
  %985 = vmatmul.mubr.bf16.gmra.mxu0 %v517
  %v986 = vpop.f32.mrf.mxu0
  %v987 = vadd.f32 0.0, %v986
  %v988 = vpop.f32.mrf.mxu0
  %v989 = vpop.f32.mrf.mxu0
  %v990 = vadd.f32 0.0, %v989
  %v991 = vpop.f32.mrf.mxu0
  %992 = vmatprep.mubr.bf16.mxu0 %v522
  %993 = vmatmul.mubr.bf16.gmra.mxu0 %v521
  %v994 = vpop.f32.mrf.mxu0
  %v995 = vadd.f32 0.0, %v994
  %v996 = vpop.f32.mrf.mxu0
  %v997 = vpop.f32.mrf.mxu0
  %v998 = vadd.f32 0.0, %v997
  %v999 = vpop.f32.mrf.mxu0
  %1000 = vmatprep.mubr.bf16.mxu0 %v526
  %1001 = vmatmul.mubr.bf16.gmra.mxu0 %v525
  %v1002 = vpop.f32.mrf.mxu0
  %v1003 = vadd.f32 0.0, %v1002
  %v1004 = vpop.f32.mrf.mxu0
  %v1005 = vpop.f32.mrf.mxu0
  %v1006 = vadd.f32 0.0, %v1005
  %v1007 = vpop.f32.mrf.mxu0
  %1008 = vmatprep.mubr.bf16.mxu0 %v530
  %1009 = vmatmul.mubr.bf16.gmra.mxu0 %v529
  %v1010 = vpop.f32.mrf.mxu0
  %v1011 = vadd.f32 0.0, %v1010
  %v1012 = vpop.f32.mrf.mxu0
  %v1013 = vpop.f32.mrf.mxu0
  %v1014 = vadd.f32 0.0, %v1013
  %v1015 = vpop.f32.mrf.mxu0
  %1016 = vmatprep.mubr.bf16.mxu0 %v534
  %1017 = vmatmul.mubr.bf16.gmra.mxu0 %v533
  %v1018 = vpop.f32.mrf.mxu0
  %v1019 = vadd.f32 0.0, %v1018
  %v1020 = vpop.f32.mrf.mxu0
  %v1021 = vpop.f32.mrf.mxu0
  %v1022 = vadd.f32 0.0, %v1021
  %v1023 = vpop.f32.mrf.mxu0
  %1024 = vmatprep.mubr.bf16.mxu0 %v538
  %1025 = vmatmul.mubr.bf16.gmra.mxu0 %v537
  %v1026 = vpop.f32.mrf.mxu0
  %v1027 = vadd.f32 0.0, %v1026
  %v1028 = vpop.f32.mrf.mxu0
  %v1029 = vpop.f32.mrf.mxu0
  %v1030 = vadd.f32 0.0, %v1029
  %v1031 = vpop.f32.mrf.mxu0
  %1032 = vmatprep.mubr.bf16.mxu0 %v542
  %1033 = vmatmul.mubr.bf16.gmra.mxu0 %v541
  %v1034 = vpop.f32.mrf.mxu0
  %v1035 = vadd.f32 0.0, %v1034
  %v1036 = vpop.f32.mrf.mxu0
  %v1037 = vpop.f32.mrf.mxu0
  %v1038 = vadd.f32 0.0, %v1037
  %v1039 = vpop.f32.mrf.mxu0
  %1040 = vmatprep.mubr.bf16.mxu0 %v546
  %1041 = vmatmul.mubr.bf16.gmra.mxu0 %v545
  %v1042 = vpop.f32.mrf.mxu0
  %v1043 = vadd.f32 0.0, %v1042
  %v1044 = vpop.f32.mrf.mxu0
  %v1045 = vpop.f32.mrf.mxu0
  %v1046 = vadd.f32 0.0, %v1045
  %v1047 = vpop.f32.mrf.mxu0
  %1048 = vmatprep.mubr.bf16.mxu0 %v550
  %1049 = vmatmul.mubr.bf16.gmra.mxu0 %v549
  %v1050 = vpop.f32.mrf.mxu0
  %v1051 = vadd.f32 0.0, %v1050
  %v1052 = vpop.f32.mrf.mxu0
  %v1053 = vpop.f32.mrf.mxu0
  %v1054 = vadd.f32 0.0, %v1053
  %v1055 = vpop.f32.mrf.mxu0
  %1056 = vmatprep.mubr.bf16.mxu0 %v554
  %1057 = vmatmul.mubr.bf16.gmra.mxu0 %v553
  %v1058 = vpop.f32.mrf.mxu0
  %v1059 = vadd.f32 0.0, %v1058
  %v1060 = vpop.f32.mrf.mxu0
  %v1061 = vpop.f32.mrf.mxu0
  %v1062 = vadd.f32 0.0, %v1061
  %v1063 = vpop.f32.mrf.mxu0
  %1064 = vmatprep.mubr.bf16.mxu0 %v558
  %1065 = vmatmul.mubr.bf16.gmra.mxu0 %v557
  %v1066 = vpop.f32.mrf.mxu0
  %v1067 = vadd.f32 0.0, %v1066
  %v1068 = vpop.f32.mrf.mxu0
  %v1069 = vpop.f32.mrf.mxu0
  %v1070 = vadd.f32 0.0, %v1069
  %v1071 = vpop.f32.mrf.mxu0
  %1072 = vmatprep.mubr.bf16.mxu0 %v562
  %1073 = vmatmul.mubr.bf16.gmra.mxu0 %v561
  %v1074 = vpop.f32.mrf.mxu0
  %v1075 = vadd.f32 0.0, %v1074
  %v1076 = vpop.f32.mrf.mxu0
  %v1077 = vpop.f32.mrf.mxu0
  %v1078 = vadd.f32 0.0, %v1077
  %v1079 = vpop.f32.mrf.mxu0
  %1080 = vmatprep.mubr.bf16.mxu0 %v566
  %1081 = vmatmul.mubr.bf16.gmra.mxu0 %v565
  %v1082 = vpop.f32.mrf.mxu0
  %v1083 = vadd.f32 0.0, %v1082
  %v1084 = vpop.f32.mrf.mxu0
  %v1085 = vpop.f32.mrf.mxu0
  %v1086 = vadd.f32 0.0, %v1085
  %v1087 = vpop.f32.mrf.mxu0
  %1088 = vmatprep.mubr.bf16.mxu0 %v570
  %1089 = vmatmul.mubr.bf16.gmra.mxu0 %v569
  %v1090 = vpop.f32.mrf.mxu0
  %v1091 = vadd.f32 0.0, %v1090
  %v1092 = vpop.f32.mrf.mxu0
  %v1093 = vpop.f32.mrf.mxu0
  %v1094 = vadd.f32 0.0, %v1093
  %v1095 = vpop.f32.mrf.mxu0
  %1096 = vmatprep.mubr.bf16.mxu0 %v574
  %1097 = vmatmul.mubr.bf16.gmra.mxu0 %v573
  %v1098 = vpop.f32.mrf.mxu0
  %v1099 = vadd.f32 0.0, %v1098
  %v1100 = vpop.f32.mrf.mxu0
  %v1101 = vpop.f32.mrf.mxu0
  %v1102 = vadd.f32 0.0, %v1101
  %v1103 = vpop.f32.mrf.mxu0
  %1104 = vmatprep.mubr.bf16.mxu0 %v578
  %1105 = vmatmul.mubr.bf16.gmra.mxu0 %v577
  %v1106 = vpop.f32.mrf.mxu0
  %v1107 = vadd.f32 0.0, %v1106
  %v1108 = vpop.f32.mrf.mxu0
  %v1109 = vpop.f32.mrf.mxu0
  %v1110 = vadd.f32 0.0, %v1109
  %v1111 = vpop.f32.mrf.mxu0
  %1112 = vmatprep.mubr.bf16.mxu0 %v582
  %1113 = vmatmul.mubr.bf16.gmra.mxu0 %v581
  %v1114 = vpop.f32.mrf.mxu0
  %v1115 = vadd.f32 0.0, %v1114
  %v1116 = vpop.f32.mrf.mxu0
  %v1117 = vpop.f32.mrf.mxu0
  %v1118 = vadd.f32 0.0, %v1117
  %v1119 = vpop.f32.mrf.mxu0
  %1120 = vmatprep.mubr.bf16.mxu0 %v586
  %1121 = vmatmul.mubr.bf16.gmra.mxu0 %v585
  %v1122 = vpop.f32.mrf.mxu0
  %v1123 = vadd.f32 0.0, %v1122
  %v1124 = vpop.f32.mrf.mxu0
  %v1125 = vpop.f32.mrf.mxu0
  %v1126 = vadd.f32 0.0, %v1125
  %v1127 = vpop.f32.mrf.mxu0
  %1128 = vmatprep.mubr.bf16.mxu0 %v590
  %1129 = vmatmul.mubr.bf16.gmra.mxu0 %v589
  %v1130 = vpop.f32.mrf.mxu0
  %v1131 = vadd.f32 0.0, %v1130
  %v1132 = vpop.f32.mrf.mxu0
  %v1133 = vpop.f32.mrf.mxu0
  %v1134 = vadd.f32 0.0, %v1133
  %v1135 = vpop.f32.mrf.mxu0
  %1136 = vmatprep.mubr.bf16.mxu0 %v594
  %1137 = vmatmul.mubr.bf16.gmra.mxu0 %v593
  %v1138 = vpop.f32.mrf.mxu0
  %v1139 = vadd.f32 0.0, %v1138
  %v1140 = vpop.f32.mrf.mxu0
  %v1141 = vpop.f32.mrf.mxu0
  %v1142 = vadd.f32 0.0, %v1141
  %v1143 = vpop.f32.mrf.mxu0
  %1144 = vmatprep.mubr.bf16.mxu0 %v598
  %1145 = vmatmul.mubr.bf16.gmra.mxu0 %v597
  %v1146 = vpop.f32.mrf.mxu0
  %v1147 = vadd.f32 0.0, %v1146
  %v1148 = vpop.f32.mrf.mxu0
  %v1149 = vpop.f32.mrf.mxu0
  %v1150 = vadd.f32 0.0, %v1149
  %v1151 = vpop.f32.mrf.mxu0
  %1152 = vmatprep.mubr.bf16.mxu0 %v602
  %1153 = vmatmul.mubr.bf16.gmra.mxu0 %v601
  %v1154 = vpop.f32.mrf.mxu0
  %v1155 = vadd.f32 0.0, %v1154
  %v1156 = vpop.f32.mrf.mxu0
  %v1157 = vpop.f32.mrf.mxu0
  %v1158 = vadd.f32 0.0, %v1157
  %v1159 = vpop.f32.mrf.mxu0
  %1160 = vmatprep.mubr.bf16.mxu0 %v606
  %1161 = vmatmul.mubr.bf16.gmra.mxu0 %v605
  %v1162 = vpop.f32.mrf.mxu0
  %v1163 = vadd.f32 0.0, %v1162
  %v1164 = vpop.f32.mrf.mxu0
  %v1165 = vpop.f32.mrf.mxu0
  %v1166 = vadd.f32 0.0, %v1165
  %v1167 = vpop.f32.mrf.mxu0
  %1168 = vmatprep.mubr.bf16.mxu0 %v610
  %1169 = vmatmul.mubr.bf16.gmra.mxu0 %v609
  %v1170 = vpop.f32.mrf.mxu0
  %v1171 = vadd.f32 0.0, %v1170
  %v1172 = vpop.f32.mrf.mxu0
  %v1173 = vpop.f32.mrf.mxu0
  %v1174 = vadd.f32 0.0, %v1173
  %v1175 = vpop.f32.mrf.mxu0
  %1176 = vmatprep.mubr.bf16.mxu0 %v614
  %1177 = vmatmul.mubr.bf16.gmra.mxu0 %v613
  %v1178 = vpop.f32.mrf.mxu0
  %v1179 = vadd.f32 0.0, %v1178
  %v1180 = vpop.f32.mrf.mxu0
  %v1181 = vpop.f32.mrf.mxu0
  %v1182 = vadd.f32 0.0, %v1181
  %v1183 = vpop.f32.mrf.mxu0
  %1184 = vmatprep.mubr.bf16.mxu0 %v618
  %1185 = vmatmul.mubr.bf16.gmra.mxu0 %v617
  %v1186 = vpop.f32.mrf.mxu0
  %v1187 = vadd.f32 0.0, %v1186
  %v1188 = vpop.f32.mrf.mxu0
  %v1189 = vpop.f32.mrf.mxu0
  %v1190 = vadd.f32 0.0, %v1189
  %v1191 = vpop.f32.mrf.mxu0
  %1192 = vmatprep.mubr.bf16.mxu0 %v622
  %1193 = vmatmul.mubr.bf16.gmra.mxu0 %v621
  %v1194 = vpop.f32.mrf.mxu0
  %v1195 = vadd.f32 0.0, %v1194
  %v1196 = vpop.f32.mrf.mxu0
  %v1197 = vpop.f32.mrf.mxu0
  %v1198 = vadd.f32 0.0, %v1197
  %v1199 = vpop.f32.mrf.mxu0
  %1200 = vdwg.mxu0
  %1201 = vmatprep.subr.bf16.mxu0 0
  %1202 = vmatpush1.bf16.msra.mxu0 %v832
  %1203 = vmatprep.subr.bf16.mxu0 0
  %1204 = vmatpush1.bf16.msra.mxu0 %v831
  %1205 = vmatprep.subr.bf16.mxu0 0
  %1206 = vmatpush1.bf16.msra.mxu0 %v830
  %1207 = vmatprep.subr.bf16.mxu0 0
  %1208 = vmatpush1.bf16.msra.mxu0 %v829
  %1209 = vmatprep.subr.bf16.mxu0 0
  %1210 = vmatpush1.bf16.msra.mxu0 %v828
  %1211 = vmatprep.subr.bf16.mxu0 0
  %1212 = vmatpush1.bf16.msra.mxu0 %v827
  %1213 = vmatprep.subr.bf16.mxu0 0
  %1214 = vmatpush1.bf16.msra.mxu0 %v826
  %1215 = vmatprep.subr.bf16.mxu0 0
  %1216 = vmatpush1.bf16.msra.mxu0 %v825
  %1217 = vmatprep.subr.bf16.mxu0 0
  %1218 = vmatpush2.bf16.msra.mxu0 0
  %1219 = vmatprep.subr.bf16.mxu0 0
  %1220 = vmatpush2.bf16.msra.mxu0 0
  %1221 = vmatprep.subr.bf16.mxu0 0
  %1222 = vmatpush2.bf16.msra.mxu0 0
  %1223 = vmatprep.subr.bf16.mxu0 0
  %1224 = vmatpush2.bf16.msra.mxu0 0
  %1225 = vmatprep.subr.bf16.mxu0 0
  %1226 = vmatpush2.bf16.msra.mxu0 0
  %1227 = vmatprep.subr.bf16.mxu0 0
  %1228 = vmatpush2.bf16.msra.mxu0 0
  %1229 = vmatprep.subr.bf16.mxu0 0
  %1230 = vmatpush2.bf16.msra.mxu0 0
  %1231 = vmatprep.subr.bf16.mxu0 0
  %1232 = vmatpush2.bf16.msra.mxu0 %v833
  %1233 = vmatprep.mubr.bf16.mxu0 %v861
  %1234 = vmatmul.mubr.bf16.gmra.mxu0 %v515
  %v1235 = vpop.f32.mrf.mxu0
  %v1236 = vadd.f32 %v979, %v1235
  %v1237 = vpop.f32.mrf.mxu0
  %v1238 = vpop.f32.mrf.mxu0
  %v1239 = vadd.f32 %v982, %v1238
  %v1240 = vpop.f32.mrf.mxu0
  %1241 = vmatprep.mubr.bf16.mxu0 %v864
  %1242 = vmatmul.mubr.bf16.gmra.mxu0 %v519
  %v1243 = vpop.f32.mrf.mxu0
  %v1244 = vadd.f32 %v987, %v1243
  %v1245 = vpop.f32.mrf.mxu0
  %v1246 = vpop.f32.mrf.mxu0
  %v1247 = vadd.f32 %v990, %v1246
  %v1248 = vpop.f32.mrf.mxu0
  %1249 = vmatprep.mubr.bf16.mxu0 %v867
  %1250 = vmatmul.mubr.bf16.gmra.mxu0 %v523
  %v1251 = vpop.f32.mrf.mxu0
  %v1252 = vadd.f32 %v995, %v1251
  %v1253 = vpop.f32.mrf.mxu0
  %v1254 = vpop.f32.mrf.mxu0
  %v1255 = vadd.f32 %v998, %v1254
  %v1256 = vpop.f32.mrf.mxu0
  %1257 = vmatprep.mubr.bf16.mxu0 %v870
  %1258 = vmatmul.mubr.bf16.gmra.mxu0 %v527
  %v1259 = vpop.f32.mrf.mxu0
  %v1260 = vadd.f32 %v1003, %v1259
  %v1261 = vpop.f32.mrf.mxu0
  %v1262 = vpop.f32.mrf.mxu0
  %v1263 = vadd.f32 %v1006, %v1262
  %v1264 = vpop.f32.mrf.mxu0
  %1265 = vmatprep.mubr.bf16.mxu0 %v873
  %1266 = vmatmul.mubr.bf16.gmra.mxu0 %v531
  %v1267 = vpop.f32.mrf.mxu0
  %v1268 = vadd.f32 %v1011, %v1267
  %v1269 = vpop.f32.mrf.mxu0
  %v1270 = vpop.f32.mrf.mxu0
  %v1271 = vadd.f32 %v1014, %v1270
  %v1272 = vpop.f32.mrf.mxu0
  %1273 = vmatprep.mubr.bf16.mxu0 %v876
  %1274 = vmatmul.mubr.bf16.gmra.mxu0 %v535
  %v1275 = vpop.f32.mrf.mxu0
  %v1276 = vadd.f32 %v1019, %v1275
  %v1277 = vpop.f32.mrf.mxu0
  %v1278 = vpop.f32.mrf.mxu0
  %v1279 = vadd.f32 %v1022, %v1278
  %v1280 = vpop.f32.mrf.mxu0
  %1281 = vmatprep.mubr.bf16.mxu0 %v879
  %1282 = vmatmul.mubr.bf16.gmra.mxu0 %v539
  %v1283 = vpop.f32.mrf.mxu0
  %v1284 = vadd.f32 %v1027, %v1283
  %v1285 = vpop.f32.mrf.mxu0
  %v1286 = vpop.f32.mrf.mxu0
  %v1287 = vadd.f32 %v1030, %v1286
  %v1288 = vpop.f32.mrf.mxu0
  %1289 = vmatprep.mubr.bf16.mxu0 %v882
  %1290 = vmatmul.mubr.bf16.gmra.mxu0 %v543
  %v1291 = vpop.f32.mrf.mxu0
  %v1292 = vadd.f32 %v1035, %v1291
  %v1293 = vpop.f32.mrf.mxu0
  %v1294 = vpop.f32.mrf.mxu0
  %v1295 = vadd.f32 %v1038, %v1294
  %v1296 = vpop.f32.mrf.mxu0
  %1297 = vmatprep.mubr.bf16.mxu0 %v885
  %1298 = vmatmul.mubr.bf16.gmra.mxu0 %v547
  %v1299 = vpop.f32.mrf.mxu0
  %v1300 = vadd.f32 %v1043, %v1299
  %v1301 = vpop.f32.mrf.mxu0
  %v1302 = vpop.f32.mrf.mxu0
  %v1303 = vadd.f32 %v1046, %v1302
  %v1304 = vpop.f32.mrf.mxu0
  %1305 = vmatprep.mubr.bf16.mxu0 %v888
  %1306 = vmatmul.mubr.bf16.gmra.mxu0 %v551
  %v1307 = vpop.f32.mrf.mxu0
  %v1308 = vadd.f32 %v1051, %v1307
  %v1309 = vpop.f32.mrf.mxu0
  %v1310 = vpop.f32.mrf.mxu0
  %v1311 = vadd.f32 %v1054, %v1310
  %v1312 = vpop.f32.mrf.mxu0
  %1313 = vmatprep.mubr.bf16.mxu0 %v891
  %1314 = vmatmul.mubr.bf16.gmra.mxu0 %v555
  %v1315 = vpop.f32.mrf.mxu0
  %v1316 = vadd.f32 %v1059, %v1315
  %v1317 = vpop.f32.mrf.mxu0
  %v1318 = vpop.f32.mrf.mxu0
  %v1319 = vadd.f32 %v1062, %v1318
  %v1320 = vpop.f32.mrf.mxu0
  %1321 = vmatprep.mubr.bf16.mxu0 %v894
  %1322 = vmatmul.mubr.bf16.gmra.mxu0 %v559
  %v1323 = vpop.f32.mrf.mxu0
  %v1324 = vadd.f32 %v1067, %v1323
  %v1325 = vpop.f32.mrf.mxu0
  %v1326 = vpop.f32.mrf.mxu0
  %v1327 = vadd.f32 %v1070, %v1326
  %v1328 = vpop.f32.mrf.mxu0
  %1329 = vmatprep.mubr.bf16.mxu0 %v897
  %1330 = vmatmul.mubr.bf16.gmra.mxu0 %v563
  %v1331 = vpop.f32.mrf.mxu0
  %v1332 = vadd.f32 %v1075, %v1331
  %v1333 = vpop.f32.mrf.mxu0
  %v1334 = vpop.f32.mrf.mxu0
  %v1335 = vadd.f32 %v1078, %v1334
  %v1336 = vpop.f32.mrf.mxu0
  %1337 = vmatprep.mubr.bf16.mxu0 %v900
  %1338 = vmatmul.mubr.bf16.gmra.mxu0 %v567
  %v1339 = vpop.f32.mrf.mxu0
  %v1340 = vadd.f32 %v1083, %v1339
  %v1341 = vpop.f32.mrf.mxu0
  %v1342 = vpop.f32.mrf.mxu0
  %v1343 = vadd.f32 %v1086, %v1342
  %v1344 = vpop.f32.mrf.mxu0
  %1345 = vmatprep.mubr.bf16.mxu0 %v903
  %1346 = vmatmul.mubr.bf16.gmra.mxu0 %v571
  %v1347 = vpop.f32.mrf.mxu0
  %v1348 = vadd.f32 %v1091, %v1347
  %v1349 = vpop.f32.mrf.mxu0
  %v1350 = vpop.f32.mrf.mxu0
  %v1351 = vadd.f32 %v1094, %v1350
  %v1352 = vpop.f32.mrf.mxu0
  %1353 = vmatprep.mubr.bf16.mxu0 %v906
  %1354 = vmatmul.mubr.bf16.gmra.mxu0 %v575
  %v1355 = vpop.f32.mrf.mxu0
  %v1356 = vadd.f32 %v1099, %v1355
  %v1357 = vpop.f32.mrf.mxu0
  %v1358 = vpop.f32.mrf.mxu0
  %v1359 = vadd.f32 %v1102, %v1358
  %v1360 = vpop.f32.mrf.mxu0
  %1361 = vmatprep.mubr.bf16.mxu0 %v909
  %1362 = vmatmul.mubr.bf16.gmra.mxu0 %v579
  %v1363 = vpop.f32.mrf.mxu0
  %v1364 = vadd.f32 %v1107, %v1363
  %v1365 = vpop.f32.mrf.mxu0
  %v1366 = vpop.f32.mrf.mxu0
  %v1367 = vadd.f32 %v1110, %v1366
  %v1368 = vpop.f32.mrf.mxu0
  %1369 = vmatprep.mubr.bf16.mxu0 %v912
  %1370 = vmatmul.mubr.bf16.gmra.mxu0 %v583
  %v1371 = vpop.f32.mrf.mxu0
  %v1372 = vadd.f32 %v1115, %v1371
  %v1373 = vpop.f32.mrf.mxu0
  %v1374 = vpop.f32.mrf.mxu0
  %v1375 = vadd.f32 %v1118, %v1374
  %v1376 = vpop.f32.mrf.mxu0
  %1377 = vmatprep.mubr.bf16.mxu0 %v915
  %1378 = vmatmul.mubr.bf16.gmra.mxu0 %v587
  %v1379 = vpop.f32.mrf.mxu0
  %v1380 = vadd.f32 %v1123, %v1379
  %v1381 = vpop.f32.mrf.mxu0
  %v1382 = vpop.f32.mrf.mxu0
  %v1383 = vadd.f32 %v1126, %v1382
  %v1384 = vpop.f32.mrf.mxu0
  %1385 = vmatprep.mubr.bf16.mxu0 %v918
  %1386 = vmatmul.mubr.bf16.gmra.mxu0 %v591
  %v1387 = vpop.f32.mrf.mxu0
  %v1388 = vadd.f32 %v1131, %v1387
  %v1389 = vpop.f32.mrf.mxu0
  %v1390 = vpop.f32.mrf.mxu0
  %v1391 = vadd.f32 %v1134, %v1390
  %v1392 = vpop.f32.mrf.mxu0
  %1393 = vmatprep.mubr.bf16.mxu0 %v921
  %1394 = vmatmul.mubr.bf16.gmra.mxu0 %v595
  %v1395 = vpop.f32.mrf.mxu0
  %v1396 = vadd.f32 %v1139, %v1395
  %v1397 = vpop.f32.mrf.mxu0
  %v1398 = vpop.f32.mrf.mxu0
  %v1399 = vadd.f32 %v1142, %v1398
  %v1400 = vpop.f32.mrf.mxu0
  %1401 = vmatprep.mubr.bf16.mxu0 %v924
  %1402 = vmatmul.mubr.bf16.gmra.mxu0 %v599
  %v1403 = vpop.f32.mrf.mxu0
  %v1404 = vadd.f32 %v1147, %v1403
  %v1405 = vpop.f32.mrf.mxu0
  %v1406 = vpop.f32.mrf.mxu0
  %v1407 = vadd.f32 %v1150, %v1406
  %v1408 = vpop.f32.mrf.mxu0
  %1409 = vmatprep.mubr.bf16.mxu0 %v927
  %1410 = vmatmul.mubr.bf16.gmra.mxu0 %v603
  %v1411 = vpop.f32.mrf.mxu0
  %v1412 = vadd.f32 %v1155, %v1411
  %v1413 = vpop.f32.mrf.mxu0
  %v1414 = vpop.f32.mrf.mxu0
  %v1415 = vadd.f32 %v1158, %v1414
  %v1416 = vpop.f32.mrf.mxu0
  %1417 = vmatprep.mubr.bf16.mxu0 %v930
  %1418 = vmatmul.mubr.bf16.gmra.mxu0 %v607
  %v1419 = vpop.f32.mrf.mxu0
  %v1420 = vadd.f32 %v1163, %v1419
  %v1421 = vpop.f32.mrf.mxu0
  %v1422 = vpop.f32.mrf.mxu0
  %v1423 = vadd.f32 %v1166, %v1422
  %v1424 = vpop.f32.mrf.mxu0
  %1425 = vmatprep.mubr.bf16.mxu0 %v933
  %1426 = vmatmul.mubr.bf16.gmra.mxu0 %v611
  %v1427 = vpop.f32.mrf.mxu0
  %v1428 = vadd.f32 %v1171, %v1427
  %v1429 = vpop.f32.mrf.mxu0
  %v1430 = vpop.f32.mrf.mxu0
  %v1431 = vadd.f32 %v1174, %v1430
  %v1432 = vpop.f32.mrf.mxu0
  %1433 = vmatprep.mubr.bf16.mxu0 %v936
  %1434 = vmatmul.mubr.bf16.gmra.mxu0 %v615
  %v1435 = vpop.f32.mrf.mxu0
  %v1436 = vadd.f32 %v1179, %v1435
  %v1437 = vpop.f32.mrf.mxu0
  %v1438 = vpop.f32.mrf.mxu0
  %v1439 = vadd.f32 %v1182, %v1438
  %v1440 = vpop.f32.mrf.mxu0
  %1441 = vmatprep.mubr.bf16.mxu0 %v939
  %1442 = vmatmul.mubr.bf16.gmra.mxu0 %v619
  %v1443 = vpop.f32.mrf.mxu0
  %v1444 = vadd.f32 %v1187, %v1443
  %v1445 = vpop.f32.mrf.mxu0
  %v1446 = vpop.f32.mrf.mxu0
  %v1447 = vadd.f32 %v1190, %v1446
  %v1448 = vpop.f32.mrf.mxu0
  %1449 = vmatprep.mubr.bf16.mxu0 %v942
  %1450 = vmatmul.mubr.bf16.gmra.mxu0 %v623
  %v1451 = vpop.f32.mrf.mxu0
  %v1452 = vadd.f32 %v1195, %v1451
  %v1453 = vpop.f32.mrf.mxu0
  %v1454 = vpop.f32.mrf.mxu0
  %v1455 = vadd.f32 %v1198, %v1454
  %v1456 = vpop.f32.mrf.mxu0
  %1457 = vdwg.mxu0
  %v1458 = vmax.f32 %v1236, %v1292
  %v1459 = vmax.f32 %v1239, %v1295
  %v1460 = vmax.f32 %v1244, %v1300
  %v1461 = vmax.f32 %v1247, %v1303
  %v1462 = vmax.f32 %v1252, %v1308
  %v1463 = vmax.f32 %v1255, %v1311
  %v1464 = vmax.f32 %v1260, %v1316
  %v1465 = vmax.f32 %v1263, %v1319
  %v1466 = vmax.f32 %v1268, %v1324
  %v1467 = vmax.f32 %v1271, %v1327
  %v1468 = vmax.f32 %v1276, %v1332
  %v1469 = vmax.f32 %v1279, %v1335
  %v1470 = vmax.f32 %v1284, %v1340
  %v1471 = vmax.f32 %v1287, %v1343
  %v1472 = vmax.f32 %v1348, %v1404
  %v1473 = vmax.f32 %v1351, %v1407
  %v1474 = vmax.f32 %v1356, %v1412
  %v1475 = vmax.f32 %v1359, %v1415
  %v1476 = vmax.f32 %v1364, %v1420
  %v1477 = vmax.f32 %v1367, %v1423
  %v1478 = vmax.f32 %v1372, %v1428
  %v1479 = vmax.f32 %v1375, %v1431
  %v1480 = vmax.f32 %v1380, %v1436
  %v1481 = vmax.f32 %v1383, %v1439
  %v1482 = vmax.f32 %v1388, %v1444
  %v1483 = vmax.f32 %v1391, %v1447
  %v1484 = vmax.f32 %v1396, %v1452
  %v1485 = vmax.f32 %v1399, %v1455
  %v1486 = vmax.f32 %v1458, %v1472
  %v1487 = vmax.f32 %v1459, %v1473
  %v1488 = vmax.f32 %v1460, %v1474
  %v1489 = vmax.f32 %v1461, %v1475
  %v1490 = vmax.f32 %v1462, %v1476
  %v1491 = vmax.f32 %v1463, %v1477
  %v1492 = vmax.f32 %v1464, %v1478
  %v1493 = vmax.f32 %v1465, %v1479
  %v1494 = vmax.f32 %v1466, %v1480
  %v1495 = vmax.f32 %v1467, %v1481
  %v1496 = vmax.f32 %v1468, %v1482
  %v1497 = vmax.f32 %v1469, %v1483
  %v1498 = vmax.f32 %v1470, %v1484
  %v1499 = vmax.f32 %v1471, %v1485
  %v1500 = vld [vmem:[%s2] sm:$0x1]
  %v1502 = vlaneseq
  %v1503 = vshrl.u32 %v1502, 7
  %v1504 = vsub.s32 0, %v1503
  %v1505 = vrot.slane %v1500, %v1504
  %v1507 = vadd.f32 %v1486, %v1505
  %v1508 = vadd.f32 %v1487, %v1505
  %v1509 = vadd.f32 %v1488, %v1505
  %v1510 = vadd.f32 %v1489, %v1505
  %v1511 = vadd.f32 %v1490, %v1505
  %v1512 = vadd.f32 %v1491, %v1505
  %v1513 = vadd.f32 %v1492, %v1505
  %v1514 = vadd.f32 %v1493, %v1505
  %v1515 = vadd.f32 %v1494, %v1505
  %v1516 = vadd.f32 %v1495, %v1505
  %v1517 = vadd.f32 %v1496, %v1505
  %v1518 = vadd.f32 %v1497, %v1505
  %v1519 = vadd.f32 %v1498, %v1505
  %v1520 = vadd.f32 %v1499, %v1505
  %v1521 = vmax.f32 %v1507, 0.0
  %v1522 = vmax.f32 %v1508, 0.0
  %v1523 = vmax.f32 %v1509, 0.0
  %v1524 = vmax.f32 %v1510, 0.0
  %v1525 = vmax.f32 %v1511, 0.0
  %v1526 = vmax.f32 %v1512, 0.0
  %v1527 = vmax.f32 %v1513, 0.0
  %v1528 = vmax.f32 %v1514, 0.0
  %v1529 = vmax.f32 %v1515, 0.0
  %v1530 = vmax.f32 %v1516, 0.0
  %v1531 = vmax.f32 %v1517, 0.0
  %v1532 = vmax.f32 %v1518, 0.0
  %v1533 = vmax.f32 %v1519, 0.0
  %v1534 = vmax.f32 %v1520, 0.0
  %v1535 = vpack.c.bf16 %v1522, %v1521
  %v1536 = vpack.c.bf16 %v1524, %v1523
  %v1537 = vpack.c.bf16 %v1526, %v1525
  %v1538 = vpack.c.bf16 %v1528, %v1527
  %v1539 = vpack.c.bf16 %v1530, %v1529
  %v1540 = vpack.c.bf16 %v1532, %v1531
  %v1541 = vpack.c.bf16 %v1534, %v1533
  %v1549 = vunpack.c.l.b16 %v1535
  %v1550 = vunpack.c.h.b16 %v1535
  %v1551 = vunpack.c.l.b16 %v1536
  %v1552 = vunpack.c.h.b16 %v1536
  %v1553 = vunpack.c.l.b16 %v1537
  %v1554 = vunpack.c.h.b16 %v1537
  %v1555 = vunpack.c.l.b16 %v1538
  %v1556 = vunpack.c.h.b16 %v1538
  %v1557 = vunpack.c.l.b16 %v1539
  %v1558 = vunpack.c.h.b16 %v1539
  %v1559 = vunpack.c.l.b16 %v1540
  %v1560 = vunpack.c.h.b16 %v1540
  %v1561 = vunpack.c.l.b16 %v1541
  %v1562 = vunpack.c.h.b16 %v1541
  %v1563 = vpack.c.b16 %v1549, %v1549
  %v1564 = vpack.c.b16 %v1550, %v1550
  %v1565 = vpack.c.b16 %v1551, %v1551
  %v1566 = vpack.c.b16 %v1552, %v1552
  %v1567 = vpack.c.b16 %v1553, %v1553
  %v1568 = vpack.c.b16 %v1554, %v1554
  %v1569 = vpack.c.b16 %v1555, %v1555
  %v1570 = vpack.c.b16 %v1556, %v1556
  %v1571 = vpack.c.b16 %v1557, %v1557
  %v1572 = vpack.c.b16 %v1558, %v1558
  %v1573 = vpack.c.b16 %v1559, %v1559
  %v1574 = vpack.c.b16 %v1560, %v1560
  %v1575 = vpack.c.b16 %v1561, %v1561
  %v1576 = vpack.c.b16 %v1562, %v1562
  %1591 = vst [vmem:[%s3] sm:$0xf] %v1563
  %1592 = vst [vmem:[%s3 + $0x4] sm:$0xf] %v1564
  %1593 = vst [vmem:[%s3 + $0x8] sm:$0xf] %v1565
  %1594 = vst [vmem:[%s3 + $0xc] sm:$0xf] %v1566
  %1595 = vst [vmem:[%s3 + $0x10] sm:$0xf] %v1567
  %1596 = vst [vmem:[%s3 + $0x14] sm:$0xf] %v1568
  %1597 = vst [vmem:[%s3 + $0x18] sm:$0xf] %v1569
  %1598 = vst [vmem:[%s3 + $0x1c] sm:$0xf] %v1570
  %1599 = vst [vmem:[%s3 + $0x20] sm:$0xf] %v1571
  %1600 = vst [vmem:[%s3 + $0x24] sm:$0xf] %v1572
  %1601 = vst [vmem:[%s3 + $0x28] sm:$0xf] %v1573
  %1602 = vst [vmem:[%s3 + $0x2c] sm:$0xf] %v1574
  %1603 = vst [vmem:[%s3 + $0x30] sm:$0xf] %v1575
  %1604 = vst [vmem:[%s3 + $0x34] sm:$0xf] %v1576
  // Predicated region
  $region14: #{cnn_forward.4} parent=0 // pred_check
    _
  $region15: #{cnn_forward.4} parent=0 // pred_check_branch
    %1606 = sbr.rel (0) target = $region17
  $region16: #{cnn_forward.4} parent=0 // pred_region
    _
  $region17: #{cnn_forward.4} parent=0 // pred_fallthru
    _
  // Predicated region
  $region18: #{cnn_forward.4} parent=0 // pred_check
    _
  $region19: #{cnn_forward.4} parent=0 // pred_check_branch
    %1608 = sbr.rel (0) target = $region21
  $region20: #{cnn_forward.4} parent=0 // pred_region
    _
  $region21: #{cnn_forward.4} parent=0 // pred_fallthru
    _

// kernel: cnn_forward.5
$region0: #{cnn_forward.5}
  #allocation0 [shape = 'u32[]', space=smem, size = 0x4, offset = 0x4, fixed_abs, tag = 'smem constant byte address 0x4 - core index']
  #allocation1 [shape = 'u32[144,128]{1,0:T(1,128)}', space=vmem, size = 0x12000, scoped, tag = 'internal scratch']
  %s0 = inlined_call_operand.vmem [shape: bf16[16,1568], index: 0, kind: input, shape index: {}]
  %s1 = inlined_call_operand.vmem [shape: bf16[1568,128], index: 1, kind: input, shape index: {}]
  %s2 = inlined_call_operand.vmem [shape: f32[1,128], index: 2, kind: input, shape index: {}]
  %s3 = inlined_call_operand.vmem [shape: f32[16,128], index: 3, kind: output, shape index: {}]
  %s4 = sld [smem:[#allocation0]]
  $region22: #{cnn_forward.5} parent=0
    _
  %s6 = ssub.s32 1, %s4
  %s7 = scalar_select 0, %s6, %s4
  // Predicated region
  $region2: #{cnn_forward.5} parent=0 // pred_check
    _
  $region3: #{cnn_forward.5} parent=0 // pred_check_branch
    %9 = sbr.rel (0) target = $region5
  $region4: #{cnn_forward.5} parent=0 // pred_region
    _
  $region5: #{cnn_forward.5} parent=0 // pred_fallthru
    _
  // Predicated region
  $region6: #{cnn_forward.5} parent=0 // pred_check
    _
  $region7: #{cnn_forward.5} parent=0 // pred_check_branch
    %11 = sbr.rel (0) target = $region9
  $region8: #{cnn_forward.5} parent=0 // pred_region
    _
  $region9: #{cnn_forward.5} parent=0 // pred_fallthru
    _
  // Predicated region
  $region10: #{cnn_forward.5} parent=0 // pred_check
    _
  $region11: #{cnn_forward.5} parent=0 // pred_check_branch
    %13 = sbr.rel (0) target = $region13
  $region12: #{cnn_forward.5} parent=0 // pred_region
    _
  $region13: #{cnn_forward.5} parent=0 // pred_fallthru
    _
  %v15 = vld [vmem:[%s0] sm:$0xff]
  %v16 = vld [vmem:[%s0 + $0x8] sm:$0xff]
  %v17 = vld [vmem:[%s0 + $0x10] sm:$0xff]
  %v18 = vld [vmem:[%s0 + $0x18] sm:$0xff]
  %v19 = vld [vmem:[%s0 + $0x20] sm:$0xff]
  %v20 = vld [vmem:[%s0 + $0x28] sm:$0xff]
  %v21 = vld [vmem:[%s0 + $0x30] sm:$0xf]
  %v22 = vld [vmem:[%s0 + $0x34] sm:$0xff]
  %v23 = vld [vmem:[%s0 + $0x3c] sm:$0xff]
  %v24 = vld [vmem:[%s0 + $0x44] sm:$0xff]
  %v25 = vld [vmem:[%s0 + $0x4c] sm:$0xff]
  %v26 = vld [vmem:[%s0 + $0x54] sm:$0xff]
  %v27 = vld [vmem:[%s0 + $0x5c] sm:$0xff]
  %v28 = vld [vmem:[%s0 + $0x64] sm:$0xf]
  %v29 = vld [vmem:[%s1] sm:$0xf]
  %v30 = vld [vmem:[%s1 + $0x4] sm:$0xf]
  %v31 = vld [vmem:[%s1 + $0x8] sm:$0xf]
  %v32 = vld [vmem:[%s1 + $0xc] sm:$0xf]
  %v33 = vld [vmem:[%s1 + $0x10] sm:$0xf]
  %v34 = vld [vmem:[%s1 + $0x14] sm:$0xf]
  %v35 = vld [vmem:[%s1 + $0x18] sm:$0xf]
  %v36 = vld [vmem:[%s1 + $0x1c] sm:$0xf]
  %v37 = vld [vmem:[%s1 + $0x20] sm:$0xf]
  %v38 = vld [vmem:[%s1 + $0x24] sm:$0xf]
  %v39 = vld [vmem:[%s1 + $0x28] sm:$0xf]
  %v40 = vld [vmem:[%s1 + $0x2c] sm:$0xf]
  %v41 = vld [vmem:[%s1 + $0x30] sm:$0xf]
  %v42 = vld [vmem:[%s1 + $0x34] sm:$0xf]
  %v43 = vld [vmem:[%s1 + $0x38] sm:$0xf]
  %v44 = vld [vmem:[%s1 + $0x3c] sm:$0xf]
  %v45 = vld [vmem:[%s1 + $0x40] sm:$0xf]
  %v46 = vld [vmem:[%s1 + $0x44] sm:$0xf]
  %v47 = vld [vmem:[%s1 + $0x48] sm:$0xf]
  %v48 = vld [vmem:[%s1 + $0x4c] sm:$0xf]
  %v49 = vld [vmem:[%s1 + $0x50] sm:$0xf]
  %v50 = vld [vmem:[%s1 + $0x54] sm:$0xf]
  %v51 = vld [vmem:[%s1 + $0x58] sm:$0xf]
  %v52 = vld [vmem:[%s1 + $0x5c] sm:$0xf]
  %v53 = vld [vmem:[%s1 + $0x60] sm:$0xf]
  %v54 = vld [vmem:[%s1 + $0x64] sm:$0xf]
  %v55 = vld [vmem:[%s1 + $0x68] sm:$0xf]
  %v56 = vld [vmem:[%s1 + $0x6c] sm:$0xf]
  %v57 = vld [vmem:[%s1 + $0x70] sm:$0xf]
  %v58 = vld [vmem:[%s1 + $0x74] sm:$0xf]
  %v59 = vld [vmem:[%s1 + $0x78] sm:$0xf]
  %v60 = vld [vmem:[%s1 + $0x7c] sm:$0xf]
  %v61 = vld [vmem:[%s1 + $0x80] sm:$0xf]
  %v62 = vld [vmem:[%s1 + $0x84] sm:$0xf]
  %v63 = vld [vmem:[%s1 + $0x88] sm:$0xf]
  %v64 = vld [vmem:[%s1 + $0x8c] sm:$0xf]
  %v65 = vld [vmem:[%s1 + $0x90] sm:$0xf]
  %v66 = vld [vmem:[%s1 + $0x94] sm:$0xf]
  %v67 = vld [vmem:[%s1 + $0x98] sm:$0xf]
  %v68 = vld [vmem:[%s1 + $0x9c] sm:$0xf]
  %v69 = vld [vmem:[%s1 + $0xa0] sm:$0xf]
  %v70 = vld [vmem:[%s1 + $0xa4] sm:$0xf]
  %v71 = vld [vmem:[%s1 + $0xa8] sm:$0xf]
  %v72 = vld [vmem:[%s1 + $0xac] sm:$0xf]
  %v73 = vld [vmem:[%s1 + $0xb0] sm:$0xf]
  %v74 = vld [vmem:[%s1 + $0xb4] sm:$0xf]
  %v75 = vld [vmem:[%s1 + $0xb8] sm:$0xf]
  %v76 = vld [vmem:[%s1 + $0xbc] sm:$0xf]
  %v77 = vld [vmem:[%s1 + $0xc0] sm:$0xf]
  %v78 = vld [vmem:[%s1 + $0xc4] sm:$0xf]
  %v79 = vld [vmem:[%s1 + $0xc8] sm:$0xf]
  %v80 = vld [vmem:[%s1 + $0xcc] sm:$0xf]
  %v81 = vld [vmem:[%s1 + $0xd0] sm:$0xf]
  %v82 = vld [vmem:[%s1 + $0xd4] sm:$0xf]
  %v83 = vld [vmem:[%s1 + $0xd8] sm:$0xf]
  %v84 = vld [vmem:[%s1 + $0xdc] sm:$0xf]
  %v85 = vld [vmem:[%s1 + $0xe0] sm:$0xf]
  %v86 = vld [vmem:[%s1 + $0xe4] sm:$0xf]
  %v87 = vld [vmem:[%s1 + $0xe8] sm:$0xf]
  %v88 = vld [vmem:[%s1 + $0xec] sm:$0xf]
  %v89 = vld [vmem:[%s1 + $0xf0] sm:$0xf]
  %v90 = vld [vmem:[%s1 + $0xf4] sm:$0xf]
  %v91 = vld [vmem:[%s1 + $0xf8] sm:$0xf]
  %v92 = vld [vmem:[%s1 + $0xfc] sm:$0xf]
  %v93 = vld [vmem:[%s1 + $0x100] sm:$0xf]
  %v94 = vld [vmem:[%s1 + $0x104] sm:$0xf]
  %v95 = vld [vmem:[%s1 + $0x108] sm:$0xf]
  %v96 = vld [vmem:[%s1 + $0x10c] sm:$0xf]
  %v97 = vld [vmem:[%s1 + $0x110] sm:$0xf]
  %v98 = vld [vmem:[%s1 + $0x114] sm:$0xf]
  %v99 = vld [vmem:[%s1 + $0x118] sm:$0xf]
  %v100 = vld [vmem:[%s1 + $0x11c] sm:$0xf]
  %v101 = vld [vmem:[%s1 + $0x120] sm:$0xf]
  %v102 = vld [vmem:[%s1 + $0x124] sm:$0xf]
  %v103 = vld [vmem:[%s1 + $0x128] sm:$0xf]
  %v104 = vld [vmem:[%s1 + $0x12c] sm:$0xf]
  %v105 = vld [vmem:[%s1 + $0x130] sm:$0xf]
  %v106 = vld [vmem:[%s1 + $0x134] sm:$0xf]
  %v107 = vld [vmem:[%s1 + $0x138] sm:$0xf]
  %v108 = vld [vmem:[%s1 + $0x13c] sm:$0xf]
  %v109 = vld [vmem:[%s1 + $0x140] sm:$0xf]
  %v110 = vld [vmem:[%s1 + $0x144] sm:$0xf]
  %v111 = vld [vmem:[%s1 + $0x148] sm:$0xf]
  %v112 = vld [vmem:[%s1 + $0x14c] sm:$0xf]
  %v113 = vld [vmem:[%s1 + $0x150] sm:$0xf]
  %v114 = vld [vmem:[%s1 + $0x154] sm:$0xf]
  %v115 = vld [vmem:[%s1 + $0x158] sm:$0xf]
  %v116 = vld [vmem:[%s1 + $0x15c] sm:$0xf]
  %v117 = vld [vmem:[%s1 + $0x160] sm:$0xf]
  %v118 = vld [vmem:[%s1 + $0x164] sm:$0xf]
  %v119 = vld [vmem:[%s1 + $0x168] sm:$0xf]
  %v120 = vld [vmem:[%s1 + $0x16c] sm:$0xf]
  %v121 = vld [vmem:[%s1 + $0x170] sm:$0xf]
  %v122 = vld [vmem:[%s1 + $0x174] sm:$0xf]
  %v123 = vld [vmem:[%s1 + $0x178] sm:$0xf]
  %v124 = vld [vmem:[%s1 + $0x17c] sm:$0xf]
  %v125 = vld [vmem:[%s1 + $0x180] sm:$0xf]
  %v126 = vld [vmem:[%s1 + $0x184] sm:$0xf]
  %v127 = vld [vmem:[%s1 + $0x188] sm:$0xf]
  %v128 = vld [vmem:[%s1 + $0x18c] sm:$0xf]
  %v129 = vld [vmem:[%s1 + $0x190] sm:$0xf]
  %v130 = vld [vmem:[%s1 + $0x194] sm:$0xf]
  %v131 = vld [vmem:[%s1 + $0x198] sm:$0xf]
  %v132 = vld [vmem:[%s1 + $0x19c] sm:$0xf]
  %v133 = vld [vmem:[%s1 + $0x1a0] sm:$0xf]
  %v134 = vld [vmem:[%s1 + $0x1a4] sm:$0xf]
  %v135 = vld [vmem:[%s1 + $0x1a8] sm:$0xf]
  %v136 = vld [vmem:[%s1 + $0x1ac] sm:$0xf]
  %v137 = vld [vmem:[%s1 + $0x1b0] sm:$0xf]
  %v138 = vld [vmem:[%s1 + $0x1b4] sm:$0xf]
  %v139 = vld [vmem:[%s1 + $0x1b8] sm:$0xf]
  %v140 = vld [vmem:[%s1 + $0x1bc] sm:$0xf]
  %v141 = vld [vmem:[%s1 + $0x1c0] sm:$0xf]
  %v142 = vld [vmem:[%s1 + $0x1c4] sm:$0xf]
  %v143 = vld [vmem:[%s1 + $0x1c8] sm:$0xf]
  %v144 = vld [vmem:[%s1 + $0x1cc] sm:$0xf]
  %v145 = vld [vmem:[%s1 + $0x1d0] sm:$0xf]
  %v146 = vld [vmem:[%s1 + $0x1d4] sm:$0xf]
  %v147 = vld [vmem:[%s1 + $0x1d8] sm:$0xf]
  %v148 = vld [vmem:[%s1 + $0x1dc] sm:$0xf]
  %v149 = vld [vmem:[%s1 + $0x1e0] sm:$0xf]
  %v150 = vld [vmem:[%s1 + $0x1e4] sm:$0xf]
  %v151 = vld [vmem:[%s1 + $0x1e8] sm:$0xf]
  %v152 = vld [vmem:[%s1 + $0x1ec] sm:$0xf]
  %v153 = vld [vmem:[%s1 + $0x1f0] sm:$0xf]
  %v154 = vld [vmem:[%s1 + $0x1f4] sm:$0xf]
  %v155 = vld [vmem:[%s1 + $0x1f8] sm:$0xf]
  %v156 = vld [vmem:[%s1 + $0x1fc] sm:$0xf]
  %v157 = vld [vmem:[%s1 + $0x200] sm:$0xf]
  %v158 = vld [vmem:[%s1 + $0x204] sm:$0xf]
  %v159 = vld [vmem:[%s1 + $0x208] sm:$0xf]
  %v160 = vld [vmem:[%s1 + $0x20c] sm:$0xf]
  %v161 = vld [vmem:[%s1 + $0x210] sm:$0xf]
  %v162 = vld [vmem:[%s1 + $0x214] sm:$0xf]
  %v163 = vld [vmem:[%s1 + $0x218] sm:$0xf]
  %v164 = vld [vmem:[%s1 + $0x21c] sm:$0xf]
  %v165 = vld [vmem:[%s1 + $0x220] sm:$0xf]
  %v166 = vld [vmem:[%s1 + $0x224] sm:$0xf]
  %v167 = vld [vmem:[%s1 + $0x228] sm:$0xf]
  %v168 = vld [vmem:[%s1 + $0x22c] sm:$0xf]
  %v169 = vld [vmem:[%s1 + $0x230] sm:$0xf]
  %v170 = vld [vmem:[%s1 + $0x234] sm:$0xf]
  %v171 = vld [vmem:[%s1 + $0x238] sm:$0xf]
  %v172 = vld [vmem:[%s1 + $0x23c] sm:$0xf]
  %v173 = vld [vmem:[%s1 + $0x240] sm:$0xf]
  %v174 = vld [vmem:[%s1 + $0x244] sm:$0xf]
  %v175 = vld [vmem:[%s1 + $0x248] sm:$0xf]
  %v176 = vld [vmem:[%s1 + $0x24c] sm:$0xf]
  %v177 = vld [vmem:[%s1 + $0x250] sm:$0xf]
  %v178 = vld [vmem:[%s1 + $0x254] sm:$0xf]
  %v179 = vld [vmem:[%s1 + $0x258] sm:$0xf]
  %v180 = vld [vmem:[%s1 + $0x25c] sm:$0xf]
  %v181 = vld [vmem:[%s1 + $0x260] sm:$0xf]
  %v182 = vld [vmem:[%s1 + $0x264] sm:$0xf]
  %v183 = vld [vmem:[%s1 + $0x268] sm:$0xf]
  %v184 = vld [vmem:[%s1 + $0x26c] sm:$0xf]
  %v185 = vld [vmem:[%s1 + $0x270] sm:$0xf]
  %v186 = vld [vmem:[%s1 + $0x274] sm:$0xf]
  %v187 = vld [vmem:[%s1 + $0x278] sm:$0xf]
  %v188 = vld [vmem:[%s1 + $0x27c] sm:$0xf]
  %v189 = vld [vmem:[%s1 + $0x280] sm:$0xf]
  %v190 = vld [vmem:[%s1 + $0x284] sm:$0xf]
  %v191 = vld [vmem:[%s1 + $0x288] sm:$0xf]
  %v192 = vld [vmem:[%s1 + $0x28c] sm:$0xf]
  %v193 = vld [vmem:[%s1 + $0x290] sm:$0xf]
  %v194 = vld [vmem:[%s1 + $0x294] sm:$0xf]
  %v195 = vld [vmem:[%s1 + $0x298] sm:$0xf]
  %v196 = vld [vmem:[%s1 + $0x29c] sm:$0xf]
  %v197 = vld [vmem:[%s1 + $0x2a0] sm:$0xf]
  %v198 = vld [vmem:[%s1 + $0x2a4] sm:$0xf]
  %v199 = vld [vmem:[%s1 + $0x2a8] sm:$0xf]
  %v200 = vld [vmem:[%s1 + $0x2ac] sm:$0xf]
  %v201 = vld [vmem:[%s1 + $0x2b0] sm:$0xf]
  %v202 = vld [vmem:[%s1 + $0x2b4] sm:$0xf]
  %v203 = vld [vmem:[%s1 + $0x2b8] sm:$0xf]
  %v204 = vld [vmem:[%s1 + $0x2bc] sm:$0xf]
  %v205 = vld [vmem:[%s1 + $0x2c0] sm:$0xf]
  %v206 = vld [vmem:[%s1 + $0x2c4] sm:$0xf]
  %v207 = vld [vmem:[%s1 + $0x2c8] sm:$0xf]
  %v208 = vld [vmem:[%s1 + $0x2cc] sm:$0xf]
  %v209 = vld [vmem:[%s1 + $0x2d0] sm:$0xf]
  %v210 = vld [vmem:[%s1 + $0x2d4] sm:$0xf]
  %v211 = vld [vmem:[%s1 + $0x2d8] sm:$0xf]
  %v212 = vld [vmem:[%s1 + $0x2dc] sm:$0xf]
  %v213 = vld [vmem:[%s1 + $0x2e0] sm:$0xf]
  %v214 = vld [vmem:[%s1 + $0x2e4] sm:$0xf]
  %v215 = vld [vmem:[%s1 + $0x2e8] sm:$0xf]
  %v216 = vld [vmem:[%s1 + $0x2ec] sm:$0xf]
  %v217 = vld [vmem:[%s1 + $0x2f0] sm:$0xf]
  %v218 = vld [vmem:[%s1 + $0x2f4] sm:$0xf]
  %v219 = vld [vmem:[%s1 + $0x2f8] sm:$0xf]
  %v220 = vld [vmem:[%s1 + $0x2fc] sm:$0xf]
  %v221 = vld [vmem:[%s1 + $0x300] sm:$0xf]
  %v222 = vld [vmem:[%s1 + $0x304] sm:$0xf]
  %v223 = vld [vmem:[%s1 + $0x308] sm:$0xf]
  %v224 = vld [vmem:[%s1 + $0x30c] sm:$0xf]
  %v225 = vld [vmem:[%s2] sm:$0x1]
  %v227 = vlaneseq
  %v228 = vshrl.u32 %v227, 7
  %v229 = vsub.s32 0, %v228
  %v230 = vrot.slane %v225, %v229
  %v246 = vunpack.c.l.b16 %v15
  %v247 = vunpack.c.h.b16 %v15
  %v248 = vunpack.c.l.b16 %v16
  %v249 = vunpack.c.h.b16 %v16
  %v250 = vunpack.c.l.b16 %v17
  %v251 = vunpack.c.h.b16 %v17
  %v252 = vunpack.c.l.b16 %v18
  %v253 = vunpack.c.h.b16 %v18
  %v254 = vunpack.c.l.b16 %v19
  %v255 = vunpack.c.h.b16 %v19
  %v256 = vunpack.c.l.b16 %v20
  %v257 = vunpack.c.h.b16 %v20
  %v258 = vunpack.c.l.b16 %v21
  %v259 = vunpack.c.l.b16 %v22
  %v260 = vunpack.c.h.b16 %v22
  %v261 = vunpack.c.l.b16 %v23
  %v262 = vunpack.c.h.b16 %v23
  %v263 = vunpack.c.l.b16 %v24
  %v264 = vunpack.c.h.b16 %v24
  %v265 = vunpack.c.l.b16 %v25
  %v266 = vunpack.c.h.b16 %v25
  %v267 = vunpack.c.l.b16 %v26
  %v268 = vunpack.c.h.b16 %v26
  %v269 = vunpack.c.l.b16 %v27
  %v270 = vunpack.c.h.b16 %v27
  %v271 = vunpack.c.l.b16 %v28
  %v272 = vpack.c.b16 %v259, %v246
  %v273 = vpack.c.b16 %v260, %v247
  %v274 = vpack.c.b16 %v261, %v248
  %v275 = vpack.c.b16 %v262, %v249
  %v276 = vpack.c.b16 %v263, %v250
  %v277 = vpack.c.b16 %v264, %v251
  %v278 = vpack.c.b16 %v265, %v252
  %v279 = vpack.c.b16 %v266, %v253
  %v280 = vpack.c.b16 %v267, %v254
  %v281 = vpack.c.b16 %v268, %v255
  %v282 = vpack.c.b16 %v269, %v256
  %v283 = vpack.c.b16 %v270, %v257
  %v284 = vpack.c.b16 %v271, %v258
  %v493 = vunpack.c.l.b16 %v29
  %v494 = vunpack.c.l.b16 %v30
  %v495 = vunpack.c.l.b16 %v31
  %v496 = vunpack.c.l.b16 %v32
  %v497 = vunpack.c.l.b16 %v33
  %v498 = vunpack.c.l.b16 %v34
  %v499 = vunpack.c.l.b16 %v35
  %v500 = vunpack.c.l.b16 %v36
  %v501 = vunpack.c.l.b16 %v37
  %v502 = vunpack.c.l.b16 %v38
  %v503 = vunpack.c.l.b16 %v39
  %v504 = vunpack.c.l.b16 %v40
  %v505 = vunpack.c.l.b16 %v41
  %v506 = vunpack.c.l.b16 %v42
  %v507 = vunpack.c.l.b16 %v43
  %v508 = vunpack.c.l.b16 %v44
  %v509 = vunpack.c.l.b16 %v45
  %v510 = vunpack.c.l.b16 %v46
  %v511 = vunpack.c.l.b16 %v47
  %v512 = vunpack.c.l.b16 %v48
  %v513 = vunpack.c.l.b16 %v49
  %v514 = vunpack.c.l.b16 %v50
  %v515 = vunpack.c.l.b16 %v51
  %v516 = vunpack.c.l.b16 %v52
  %v517 = vunpack.c.l.b16 %v53
  %v518 = vunpack.c.l.b16 %v54
  %v519 = vunpack.c.l.b16 %v55
  %v520 = vunpack.c.l.b16 %v56
  %v521 = vunpack.c.l.b16 %v57
  %v522 = vunpack.c.l.b16 %v58
  %v523 = vunpack.c.l.b16 %v59
  %v524 = vunpack.c.l.b16 %v60
  %v525 = vunpack.c.l.b16 %v61
  %v526 = vunpack.c.l.b16 %v62
  %v527 = vunpack.c.l.b16 %v63
  %v528 = vunpack.c.l.b16 %v64
  %v529 = vunpack.c.l.b16 %v65
  %v530 = vunpack.c.l.b16 %v66
  %v531 = vunpack.c.l.b16 %v67
  %v532 = vunpack.c.l.b16 %v68
  %v533 = vunpack.c.l.b16 %v69
  %v534 = vunpack.c.l.b16 %v70
  %v535 = vunpack.c.l.b16 %v71
  %v536 = vunpack.c.l.b16 %v72
  %v537 = vunpack.c.l.b16 %v73
  %v538 = vunpack.c.l.b16 %v74
  %v539 = vunpack.c.l.b16 %v75
  %v540 = vunpack.c.l.b16 %v76
  %v541 = vunpack.c.l.b16 %v77
  %v542 = vunpack.c.l.b16 %v78
  %v543 = vunpack.c.l.b16 %v79
  %v544 = vunpack.c.l.b16 %v80
  %v545 = vunpack.c.l.b16 %v81
  %v546 = vunpack.c.l.b16 %v82
  %v547 = vunpack.c.l.b16 %v83
  %v548 = vunpack.c.l.b16 %v84
  %v549 = vunpack.c.l.b16 %v85
  %v550 = vunpack.c.l.b16 %v86
  %v551 = vunpack.c.l.b16 %v87
  %v552 = vunpack.c.l.b16 %v88
  %v553 = vunpack.c.l.b16 %v89
  %v554 = vunpack.c.l.b16 %v90
  %v555 = vunpack.c.l.b16 %v91
  %v556 = vunpack.c.l.b16 %v92
  %v557 = vunpack.c.l.b16 %v93
  %v558 = vunpack.c.l.b16 %v94
  %v559 = vunpack.c.l.b16 %v95
  %v560 = vunpack.c.l.b16 %v96
  %v561 = vunpack.c.l.b16 %v97
  %v562 = vunpack.c.l.b16 %v98
  %v563 = vunpack.c.l.b16 %v99
  %v564 = vunpack.c.l.b16 %v100
  %v565 = vunpack.c.l.b16 %v101
  %v566 = vunpack.c.l.b16 %v102
  %v567 = vunpack.c.l.b16 %v103
  %v568 = vunpack.c.l.b16 %v104
  %v569 = vunpack.c.l.b16 %v105
  %v570 = vunpack.c.l.b16 %v106
  %v571 = vunpack.c.l.b16 %v107
  %v572 = vunpack.c.l.b16 %v108
  %v573 = vunpack.c.l.b16 %v109
  %v574 = vunpack.c.l.b16 %v110
  %v575 = vunpack.c.l.b16 %v111
  %v576 = vunpack.c.l.b16 %v112
  %v577 = vunpack.c.l.b16 %v113
  %v578 = vunpack.c.l.b16 %v114
  %v579 = vunpack.c.l.b16 %v115
  %v580 = vunpack.c.l.b16 %v116
  %v581 = vunpack.c.l.b16 %v117
  %v582 = vunpack.c.l.b16 %v118
  %v583 = vunpack.c.l.b16 %v119
  %v584 = vunpack.c.l.b16 %v120
  %v585 = vunpack.c.l.b16 %v121
  %v586 = vunpack.c.l.b16 %v122
  %v587 = vunpack.c.l.b16 %v123
  %v588 = vunpack.c.l.b16 %v124
  %v589 = vunpack.c.l.b16 %v125
  %v590 = vunpack.c.l.b16 %v126
  %v591 = vunpack.c.l.b16 %v127
  %v592 = vunpack.c.l.b16 %v128
  %v593 = vunpack.c.l.b16 %v129
  %v594 = vunpack.c.l.b16 %v130
  %v595 = vunpack.c.l.b16 %v131
  %v596 = vunpack.c.l.b16 %v132
  %v597 = vunpack.c.l.b16 %v133
  %v598 = vunpack.c.l.b16 %v134
  %v599 = vunpack.c.l.b16 %v135
  %v600 = vunpack.c.l.b16 %v136
  %v601 = vunpack.c.l.b16 %v137
  %v602 = vunpack.c.l.b16 %v138
  %v603 = vunpack.c.l.b16 %v139
  %v604 = vunpack.c.l.b16 %v140
  %v605 = vunpack.c.l.b16 %v141
  %v606 = vunpack.c.l.b16 %v142
  %v607 = vunpack.c.l.b16 %v143
  %v608 = vunpack.c.l.b16 %v144
  %v609 = vunpack.c.l.b16 %v145
  %v610 = vunpack.c.l.b16 %v146
  %v611 = vunpack.c.l.b16 %v147
  %v612 = vunpack.c.l.b16 %v148
  %v613 = vunpack.c.l.b16 %v149
  %v614 = vunpack.c.l.b16 %v150
  %v615 = vunpack.c.l.b16 %v151
  %v616 = vunpack.c.l.b16 %v152
  %v617 = vunpack.c.l.b16 %v153
  %v618 = vunpack.c.l.b16 %v154
  %v619 = vunpack.c.l.b16 %v155
  %v620 = vunpack.c.l.b16 %v156
  %v621 = vunpack.c.l.b16 %v157
  %v622 = vunpack.c.l.b16 %v158
  %v623 = vunpack.c.l.b16 %v159
  %v624 = vunpack.c.l.b16 %v160
  %v625 = vunpack.c.l.b16 %v161
  %v626 = vunpack.c.l.b16 %v162
  %v627 = vunpack.c.l.b16 %v163
  %v628 = vunpack.c.l.b16 %v164
  %v629 = vunpack.c.l.b16 %v165
  %v630 = vunpack.c.l.b16 %v166
  %v631 = vunpack.c.l.b16 %v167
  %v632 = vunpack.c.l.b16 %v168
  %v633 = vunpack.c.l.b16 %v169
  %v634 = vunpack.c.l.b16 %v170
  %v635 = vunpack.c.l.b16 %v171
  %v636 = vunpack.c.l.b16 %v172
  %v637 = vunpack.c.l.b16 %v173
  %v638 = vunpack.c.l.b16 %v174
  %v639 = vunpack.c.l.b16 %v175
  %v640 = vunpack.c.l.b16 %v176
  %v641 = vunpack.c.l.b16 %v177
  %v642 = vunpack.c.l.b16 %v178
  %v643 = vunpack.c.l.b16 %v179
  %v644 = vunpack.c.l.b16 %v180
  %v645 = vunpack.c.l.b16 %v181
  %v646 = vunpack.c.l.b16 %v182
  %v647 = vunpack.c.l.b16 %v183
  %v648 = vunpack.c.l.b16 %v184
  %v649 = vunpack.c.l.b16 %v185
  %v650 = vunpack.c.l.b16 %v186
  %v651 = vunpack.c.l.b16 %v187
  %v652 = vunpack.c.l.b16 %v188
  %v653 = vunpack.c.l.b16 %v189
  %v654 = vunpack.c.l.b16 %v190
  %v655 = vunpack.c.l.b16 %v191
  %v656 = vunpack.c.l.b16 %v192
  %v657 = vunpack.c.l.b16 %v193
  %v658 = vunpack.c.l.b16 %v194
  %v659 = vunpack.c.l.b16 %v195
  %v660 = vunpack.c.l.b16 %v196
  %v661 = vunpack.c.l.b16 %v197
  %v662 = vunpack.c.l.b16 %v198
  %v663 = vunpack.c.l.b16 %v199
  %v664 = vunpack.c.l.b16 %v200
  %v665 = vunpack.c.l.b16 %v201
  %v666 = vunpack.c.l.b16 %v202
  %v667 = vunpack.c.l.b16 %v203
  %v668 = vunpack.c.l.b16 %v204
  %v669 = vunpack.c.l.b16 %v205
  %v670 = vunpack.c.l.b16 %v206
  %v671 = vunpack.c.l.b16 %v207
  %v672 = vunpack.c.l.b16 %v208
  %v673 = vunpack.c.l.b16 %v209
  %v674 = vunpack.c.l.b16 %v210
  %v675 = vunpack.c.l.b16 %v211
  %v676 = vunpack.c.l.b16 %v212
  %v677 = vunpack.c.l.b16 %v213
  %v678 = vunpack.c.l.b16 %v214
  %v679 = vunpack.c.l.b16 %v215
  %v680 = vunpack.c.l.b16 %v216
  %v681 = vunpack.c.l.b16 %v217
  %v682 = vunpack.c.l.b16 %v218
  %v683 = vunpack.c.l.b16 %v219
  %v684 = vunpack.c.l.b16 %v220
  %v685 = vunpack.c.l.b16 %v221
  %v686 = vunpack.c.l.b16 %v222
  %v687 = vunpack.c.l.b16 %v223
  %v688 = vunpack.c.l.b16 %v224
  %v689 = vpack.c.b16 %v494, %v493
  %v690 = vpack.c.b16 %v496, %v495
  %v691 = vpack.c.b16 %v498, %v497
  %v692 = vpack.c.b16 %v500, %v499
  %v693 = vpack.c.b16 %v502, %v501
  %v694 = vpack.c.b16 %v504, %v503
  %v695 = vpack.c.b16 %v506, %v505
  %v696 = vpack.c.b16 %v508, %v507
  %v697 = vpack.c.b16 %v510, %v509
  %v698 = vpack.c.b16 %v512, %v511
  %v699 = vpack.c.b16 %v514, %v513
  %v700 = vpack.c.b16 %v516, %v515
  %v701 = vpack.c.b16 %v518, %v517
  %v702 = vpack.c.b16 %v520, %v519
  %v703 = vpack.c.b16 %v522, %v521
  %v704 = vpack.c.b16 %v524, %v523
  %v705 = vpack.c.b16 %v526, %v525
  %v706 = vpack.c.b16 %v528, %v527
  %v707 = vpack.c.b16 %v530, %v529
  %v708 = vpack.c.b16 %v532, %v531
  %v709 = vpack.c.b16 %v534, %v533
  %v710 = vpack.c.b16 %v536, %v535
  %v711 = vpack.c.b16 %v538, %v537
  %v712 = vpack.c.b16 %v540, %v539
  %v713 = vpack.c.b16 %v542, %v541
  %v714 = vpack.c.b16 %v544, %v543
  %v715 = vpack.c.b16 %v546, %v545
  %v716 = vpack.c.b16 %v548, %v547
  %v717 = vpack.c.b16 %v550, %v549
  %v718 = vpack.c.b16 %v552, %v551
  %v719 = vpack.c.b16 %v554, %v553
  %v720 = vpack.c.b16 %v556, %v555
  %v721 = vpack.c.b16 %v558, %v557
  %v722 = vpack.c.b16 %v560, %v559
  %v723 = vpack.c.b16 %v562, %v561
  %v724 = vpack.c.b16 %v564, %v563
  %v725 = vpack.c.b16 %v566, %v565
  %v726 = vpack.c.b16 %v568, %v567
  %v727 = vpack.c.b16 %v570, %v569
  %v728 = vpack.c.b16 %v572, %v571
  %v729 = vpack.c.b16 %v574, %v573
  %v730 = vpack.c.b16 %v576, %v575
  %v731 = vpack.c.b16 %v578, %v577
  %v732 = vpack.c.b16 %v580, %v579
  %v733 = vpack.c.b16 %v582, %v581
  %v734 = vpack.c.b16 %v584, %v583
  %v735 = vpack.c.b16 %v586, %v585
  %v736 = vpack.c.b16 %v588, %v587
  %v737 = vpack.c.b16 %v590, %v589
  %v738 = vpack.c.b16 %v592, %v591
  %v739 = vpack.c.b16 %v594, %v593
  %v740 = vpack.c.b16 %v596, %v595
  %v741 = vpack.c.b16 %v598, %v597
  %v742 = vpack.c.b16 %v600, %v599
  %v743 = vpack.c.b16 %v602, %v601
  %v744 = vpack.c.b16 %v604, %v603
  %v745 = vpack.c.b16 %v606, %v605
  %v746 = vpack.c.b16 %v608, %v607
  %v747 = vpack.c.b16 %v610, %v609
  %v748 = vpack.c.b16 %v612, %v611
  %v749 = vpack.c.b16 %v614, %v613
  %v750 = vpack.c.b16 %v616, %v615
  %v751 = vpack.c.b16 %v618, %v617
  %v752 = vpack.c.b16 %v620, %v619
  %v753 = vpack.c.b16 %v622, %v621
  %v754 = vpack.c.b16 %v624, %v623
  %v755 = vpack.c.b16 %v626, %v625
  %v756 = vpack.c.b16 %v628, %v627
  %v757 = vpack.c.b16 %v630, %v629
  %v758 = vpack.c.b16 %v632, %v631
  %v759 = vpack.c.b16 %v634, %v633
  %v760 = vpack.c.b16 %v636, %v635
  %v761 = vpack.c.b16 %v638, %v637
  %v762 = vpack.c.b16 %v640, %v639
  %v763 = vpack.c.b16 %v642, %v641
  %v764 = vpack.c.b16 %v644, %v643
  %v765 = vpack.c.b16 %v646, %v645
  %v766 = vpack.c.b16 %v648, %v647
  %v767 = vpack.c.b16 %v650, %v649
  %v768 = vpack.c.b16 %v652, %v651
  %v769 = vpack.c.b16 %v654, %v653
  %v770 = vpack.c.b16 %v656, %v655
  %v771 = vpack.c.b16 %v658, %v657
  %v772 = vpack.c.b16 %v660, %v659
  %v773 = vpack.c.b16 %v662, %v661
  %v774 = vpack.c.b16 %v664, %v663
  %v775 = vpack.c.b16 %v666, %v665
  %v776 = vpack.c.b16 %v668, %v667
  %v777 = vpack.c.b16 %v670, %v669
  %v778 = vpack.c.b16 %v672, %v671
  %v779 = vpack.c.b16 %v674, %v673
  %v780 = vpack.c.b16 %v676, %v675
  %v781 = vpack.c.b16 %v678, %v677
  %v782 = vpack.c.b16 %v680, %v679
  %v783 = vpack.c.b16 %v682, %v681
  %v784 = vpack.c.b16 %v684, %v683
  %v785 = vpack.c.b16 %v686, %v685
  %v786 = vpack.c.b16 %v688, %v687
  %vm885 = vcmask 261120
  %v887 = vsel %vm885, %v284, 0
  %889 = vmatprep.subr.bf16.mxu0 0
  %890 = vmatpush1.bf16.msra.mxu0 %v696
  %891 = vmatprep.subr.bf16.mxu0 0
  %892 = vmatpush1.bf16.msra.mxu0 %v695
  %893 = vmatprep.subr.bf16.mxu0 0
  %894 = vmatpush1.bf16.msra.mxu0 %v694
  %895 = vmatprep.subr.bf16.mxu0 0
  %896 = vmatpush1.bf16.msra.mxu0 %v693
  %897 = vmatprep.subr.bf16.mxu0 0
  %898 = vmatpush1.bf16.msra.mxu0 %v692
  %899 = vmatprep.subr.bf16.mxu0 0
  %900 = vmatpush1.bf16.msra.mxu0 %v691
  %901 = vmatprep.subr.bf16.mxu0 0
  %902 = vmatpush1.bf16.msra.mxu0 %v690
  %903 = vmatprep.subr.bf16.mxu0 0
  %904 = vmatpush1.bf16.msra.mxu0 %v689
  %905 = vmatprep.subr.bf16.mxu0 0
  %906 = vmatpush2.bf16.msra.mxu0 %v704
  %907 = vmatprep.subr.bf16.mxu0 0
  %908 = vmatpush2.bf16.msra.mxu0 %v703
  %909 = vmatprep.subr.bf16.mxu0 0
  %910 = vmatpush2.bf16.msra.mxu0 %v702
  %911 = vmatprep.subr.bf16.mxu0 0
  %912 = vmatpush2.bf16.msra.mxu0 %v701
  %913 = vmatprep.subr.bf16.mxu0 0
  %914 = vmatpush2.bf16.msra.mxu0 %v700
  %915 = vmatprep.subr.bf16.mxu0 0
  %916 = vmatpush2.bf16.msra.mxu0 %v699
  %917 = vmatprep.subr.bf16.mxu0 0
  %918 = vmatpush2.bf16.msra.mxu0 %v698
  %919 = vmatprep.subr.bf16.mxu0 0
  %920 = vmatpush2.bf16.msra.mxu0 %v697
  %921 = vmatprep.mubr.bf16.mxu0 %v273
  %922 = vmatmul.mubr.bf16.gmra.mxu0 %v272
  %v923 = vpop.f32.mrf.mxu0
  %v924 = vadd.f32 %v230, %v923
  %v925 = vpop.f32.mrf.mxu0
  %v926 = vpop.f32.mrf.mxu0
  %v927 = vadd.f32 %v230, %v926
  %v928 = vpop.f32.mrf.mxu0
  %929 = vdwg.mxu0
  %930 = vmatprep.subr.bf16.mxu0 0
  %931 = vmatpush1.bf16.msra.mxu0 %v712
  %932 = vmatprep.subr.bf16.mxu0 0
  %933 = vmatpush1.bf16.msra.mxu0 %v711
  %934 = vmatprep.subr.bf16.mxu0 0
  %935 = vmatpush1.bf16.msra.mxu0 %v710
  %936 = vmatprep.subr.bf16.mxu0 0
  %937 = vmatpush1.bf16.msra.mxu0 %v709
  %938 = vmatprep.subr.bf16.mxu0 0
  %939 = vmatpush1.bf16.msra.mxu0 %v708
  %940 = vmatprep.subr.bf16.mxu0 0
  %941 = vmatpush1.bf16.msra.mxu0 %v707
  %942 = vmatprep.subr.bf16.mxu0 0
  %943 = vmatpush1.bf16.msra.mxu0 %v706
  %944 = vmatprep.subr.bf16.mxu0 0
  %945 = vmatpush1.bf16.msra.mxu0 %v705
  %946 = vmatprep.subr.bf16.mxu0 0
  %947 = vmatpush2.bf16.msra.mxu0 %v720
  %948 = vmatprep.subr.bf16.mxu0 0
  %949 = vmatpush2.bf16.msra.mxu0 %v719
  %950 = vmatprep.subr.bf16.mxu0 0
  %951 = vmatpush2.bf16.msra.mxu0 %v718
  %952 = vmatprep.subr.bf16.mxu0 0
  %953 = vmatpush2.bf16.msra.mxu0 %v717
  %954 = vmatprep.subr.bf16.mxu0 0
  %955 = vmatpush2.bf16.msra.mxu0 %v716
  %956 = vmatprep.subr.bf16.mxu0 0
  %957 = vmatpush2.bf16.msra.mxu0 %v715
  %958 = vmatprep.subr.bf16.mxu0 0
  %959 = vmatpush2.bf16.msra.mxu0 %v714
  %960 = vmatprep.subr.bf16.mxu0 0
  %961 = vmatpush2.bf16.msra.mxu0 %v713
  %962 = vmatprep.mubr.bf16.mxu0 %v275
  %963 = vmatmul.mubr.bf16.gmra.mxu0 %v274
  %v964 = vpop.f32.mrf.mxu0
  %v965 = vadd.f32 %v924, %v964
  %v966 = vpop.f32.mrf.mxu0
  %v967 = vpop.f32.mrf.mxu0
  %v968 = vadd.f32 %v927, %v967
  %v969 = vpop.f32.mrf.mxu0
  %970 = vdwg.mxu0
  %971 = vmatprep.subr.bf16.mxu0 0
  %972 = vmatpush1.bf16.msra.mxu0 %v728
  %973 = vmatprep.subr.bf16.mxu0 0
  %974 = vmatpush1.bf16.msra.mxu0 %v727
  %975 = vmatprep.subr.bf16.mxu0 0
  %976 = vmatpush1.bf16.msra.mxu0 %v726
  %977 = vmatprep.subr.bf16.mxu0 0
  %978 = vmatpush1.bf16.msra.mxu0 %v725
  %979 = vmatprep.subr.bf16.mxu0 0
  %980 = vmatpush1.bf16.msra.mxu0 %v724
  %981 = vmatprep.subr.bf16.mxu0 0
  %982 = vmatpush1.bf16.msra.mxu0 %v723
  %983 = vmatprep.subr.bf16.mxu0 0
  %984 = vmatpush1.bf16.msra.mxu0 %v722
  %985 = vmatprep.subr.bf16.mxu0 0
  %986 = vmatpush1.bf16.msra.mxu0 %v721
  %987 = vmatprep.subr.bf16.mxu0 0
  %988 = vmatpush2.bf16.msra.mxu0 %v736
  %989 = vmatprep.subr.bf16.mxu0 0
  %990 = vmatpush2.bf16.msra.mxu0 %v735
  %991 = vmatprep.subr.bf16.mxu0 0
  %992 = vmatpush2.bf16.msra.mxu0 %v734
  %993 = vmatprep.subr.bf16.mxu0 0
  %994 = vmatpush2.bf16.msra.mxu0 %v733
  %995 = vmatprep.subr.bf16.mxu0 0
  %996 = vmatpush2.bf16.msra.mxu0 %v732
  %997 = vmatprep.subr.bf16.mxu0 0
  %998 = vmatpush2.bf16.msra.mxu0 %v731
  %999 = vmatprep.subr.bf16.mxu0 0
  %1000 = vmatpush2.bf16.msra.mxu0 %v730
  %1001 = vmatprep.subr.bf16.mxu0 0
  %1002 = vmatpush2.bf16.msra.mxu0 %v729
  %1003 = vmatprep.mubr.bf16.mxu0 %v277
  %1004 = vmatmul.mubr.bf16.gmra.mxu0 %v276
  %v1005 = vpop.f32.mrf.mxu0
  %v1006 = vadd.f32 %v965, %v1005
  %v1007 = vpop.f32.mrf.mxu0
  %v1008 = vpop.f32.mrf.mxu0
  %v1009 = vadd.f32 %v968, %v1008
  %v1010 = vpop.f32.mrf.mxu0
  %1011 = vdwg.mxu0
  %1012 = vmatprep.subr.bf16.mxu0 0
  %1013 = vmatpush1.bf16.msra.mxu0 %v744
  %1014 = vmatprep.subr.bf16.mxu0 0
  %1015 = vmatpush1.bf16.msra.mxu0 %v743
  %1016 = vmatprep.subr.bf16.mxu0 0
  %1017 = vmatpush1.bf16.msra.mxu0 %v742
  %1018 = vmatprep.subr.bf16.mxu0 0
  %1019 = vmatpush1.bf16.msra.mxu0 %v741
  %1020 = vmatprep.subr.bf16.mxu0 0
  %1021 = vmatpush1.bf16.msra.mxu0 %v740
  %1022 = vmatprep.subr.bf16.mxu0 0
  %1023 = vmatpush1.bf16.msra.mxu0 %v739
  %1024 = vmatprep.subr.bf16.mxu0 0
  %1025 = vmatpush1.bf16.msra.mxu0 %v738
  %1026 = vmatprep.subr.bf16.mxu0 0
  %1027 = vmatpush1.bf16.msra.mxu0 %v737
  %1028 = vmatprep.subr.bf16.mxu0 0
  %1029 = vmatpush2.bf16.msra.mxu0 %v752
  %1030 = vmatprep.subr.bf16.mxu0 0
  %1031 = vmatpush2.bf16.msra.mxu0 %v751
  %1032 = vmatprep.subr.bf16.mxu0 0
  %1033 = vmatpush2.bf16.msra.mxu0 %v750
  %1034 = vmatprep.subr.bf16.mxu0 0
  %1035 = vmatpush2.bf16.msra.mxu0 %v749
  %1036 = vmatprep.subr.bf16.mxu0 0
  %1037 = vmatpush2.bf16.msra.mxu0 %v748
  %1038 = vmatprep.subr.bf16.mxu0 0
  %1039 = vmatpush2.bf16.msra.mxu0 %v747
  %1040 = vmatprep.subr.bf16.mxu0 0
  %1041 = vmatpush2.bf16.msra.mxu0 %v746
  %1042 = vmatprep.subr.bf16.mxu0 0
  %1043 = vmatpush2.bf16.msra.mxu0 %v745
  %1044 = vmatprep.mubr.bf16.mxu0 %v279
  %1045 = vmatmul.mubr.bf16.gmra.mxu0 %v278
  %v1046 = vpop.f32.mrf.mxu0
  %v1047 = vadd.f32 %v1006, %v1046
  %v1048 = vpop.f32.mrf.mxu0
  %v1049 = vpop.f32.mrf.mxu0
  %v1050 = vadd.f32 %v1009, %v1049
  %v1051 = vpop.f32.mrf.mxu0
  %1052 = vdwg.mxu0
  %1053 = vmatprep.subr.bf16.mxu0 0
  %1054 = vmatpush1.bf16.msra.mxu0 %v760
  %1055 = vmatprep.subr.bf16.mxu0 0
  %1056 = vmatpush1.bf16.msra.mxu0 %v759
  %1057 = vmatprep.subr.bf16.mxu0 0
  %1058 = vmatpush1.bf16.msra.mxu0 %v758
  %1059 = vmatprep.subr.bf16.mxu0 0
  %1060 = vmatpush1.bf16.msra.mxu0 %v757
  %1061 = vmatprep.subr.bf16.mxu0 0
  %1062 = vmatpush1.bf16.msra.mxu0 %v756
  %1063 = vmatprep.subr.bf16.mxu0 0
  %1064 = vmatpush1.bf16.msra.mxu0 %v755
  %1065 = vmatprep.subr.bf16.mxu0 0
  %1066 = vmatpush1.bf16.msra.mxu0 %v754
  %1067 = vmatprep.subr.bf16.mxu0 0
  %1068 = vmatpush1.bf16.msra.mxu0 %v753
  %1069 = vmatprep.subr.bf16.mxu0 0
  %1070 = vmatpush2.bf16.msra.mxu0 %v768
  %1071 = vmatprep.subr.bf16.mxu0 0
  %1072 = vmatpush2.bf16.msra.mxu0 %v767
  %1073 = vmatprep.subr.bf16.mxu0 0
  %1074 = vmatpush2.bf16.msra.mxu0 %v766
  %1075 = vmatprep.subr.bf16.mxu0 0
  %1076 = vmatpush2.bf16.msra.mxu0 %v765
  %1077 = vmatprep.subr.bf16.mxu0 0
  %1078 = vmatpush2.bf16.msra.mxu0 %v764
  %1079 = vmatprep.subr.bf16.mxu0 0
  %1080 = vmatpush2.bf16.msra.mxu0 %v763
  %1081 = vmatprep.subr.bf16.mxu0 0
  %1082 = vmatpush2.bf16.msra.mxu0 %v762
  %1083 = vmatprep.subr.bf16.mxu0 0
  %1084 = vmatpush2.bf16.msra.mxu0 %v761
  %1085 = vmatprep.mubr.bf16.mxu0 %v281
  %1086 = vmatmul.mubr.bf16.gmra.mxu0 %v280
  %v1087 = vpop.f32.mrf.mxu0
  %v1088 = vadd.f32 %v1047, %v1087
  %v1089 = vpop.f32.mrf.mxu0
  %v1090 = vpop.f32.mrf.mxu0
  %v1091 = vadd.f32 %v1050, %v1090
  %v1092 = vpop.f32.mrf.mxu0
  %1093 = vdwg.mxu0
  %1094 = vmatprep.subr.bf16.mxu0 0
  %1095 = vmatpush1.bf16.msra.mxu0 %v776
  %1096 = vmatprep.subr.bf16.mxu0 0
  %1097 = vmatpush1.bf16.msra.mxu0 %v775
  %1098 = vmatprep.subr.bf16.mxu0 0
  %1099 = vmatpush1.bf16.msra.mxu0 %v774
  %1100 = vmatprep.subr.bf16.mxu0 0
  %1101 = vmatpush1.bf16.msra.mxu0 %v773
  %1102 = vmatprep.subr.bf16.mxu0 0
  %1103 = vmatpush1.bf16.msra.mxu0 %v772
  %1104 = vmatprep.subr.bf16.mxu0 0
  %1105 = vmatpush1.bf16.msra.mxu0 %v771
  %1106 = vmatprep.subr.bf16.mxu0 0
  %1107 = vmatpush1.bf16.msra.mxu0 %v770
  %1108 = vmatprep.subr.bf16.mxu0 0
  %1109 = vmatpush1.bf16.msra.mxu0 %v769
  %1110 = vmatprep.subr.bf16.mxu0 0
  %1111 = vmatpush2.bf16.msra.mxu0 %v784
  %1112 = vmatprep.subr.bf16.mxu0 0
  %1113 = vmatpush2.bf16.msra.mxu0 %v783
  %1114 = vmatprep.subr.bf16.mxu0 0
  %1115 = vmatpush2.bf16.msra.mxu0 %v782
  %1116 = vmatprep.subr.bf16.mxu0 0
  %1117 = vmatpush2.bf16.msra.mxu0 %v781
  %1118 = vmatprep.subr.bf16.mxu0 0
  %1119 = vmatpush2.bf16.msra.mxu0 %v780
  %1120 = vmatprep.subr.bf16.mxu0 0
  %1121 = vmatpush2.bf16.msra.mxu0 %v779
  %1122 = vmatprep.subr.bf16.mxu0 0
  %1123 = vmatpush2.bf16.msra.mxu0 %v778
  %1124 = vmatprep.subr.bf16.mxu0 0
  %1125 = vmatpush2.bf16.msra.mxu0 %v777
  %1126 = vmatprep.mubr.bf16.mxu0 %v283
  %1127 = vmatmul.mubr.bf16.gmra.mxu0 %v282
  %v1128 = vpop.f32.mrf.mxu0
  %v1129 = vadd.f32 %v1088, %v1128
  %v1130 = vpop.f32.mrf.mxu0
  %v1131 = vpop.f32.mrf.mxu0
  %v1132 = vadd.f32 %v1091, %v1131
  %v1133 = vpop.f32.mrf.mxu0
  %1134 = vdwg.mxu0
  %1135 = vmatprep.subr.bf16.mxu0 0
  %1136 = vmatpush1.bf16.msra.mxu0 0
  %1137 = vmatprep.subr.bf16.mxu0 0
  %1138 = vmatpush1.bf16.msra.mxu0 0
  %1139 = vmatprep.subr.bf16.mxu0 0
  %1140 = vmatpush1.bf16.msra.mxu0 0
  %1141 = vmatprep.subr.bf16.mxu0 0
  %1142 = vmatpush1.bf16.msra.mxu0 0
  %1143 = vmatprep.subr.bf16.mxu0 0
  %1144 = vmatpush1.bf16.msra.mxu0 0
  %1145 = vmatprep.subr.bf16.mxu0 0
  %1146 = vmatpush1.bf16.msra.mxu0 0
  %1147 = vmatprep.subr.bf16.mxu0 0
  %1148 = vmatpush1.bf16.msra.mxu0 %v786
  %1149 = vmatprep.subr.bf16.mxu0 0
  %1150 = vmatpush1.bf16.msra.mxu0 %v785
  %1151 = vmatprep.subr.bf16.mxu0 0
  %1152 = vmatpush2.bf16.msra.mxu0 0
  %1153 = vmatprep.subr.bf16.mxu0 0
  %1154 = vmatpush2.bf16.msra.mxu0 0
  %1155 = vmatprep.subr.bf16.mxu0 0
  %1156 = vmatpush2.bf16.msra.mxu0 0
  %1157 = vmatprep.subr.bf16.mxu0 0
  %1158 = vmatpush2.bf16.msra.mxu0 0
  %1159 = vmatprep.subr.bf16.mxu0 0
  %1160 = vmatpush2.bf16.msra.mxu0 0
  %1161 = vmatprep.subr.bf16.mxu0 0
  %1162 = vmatpush2.bf16.msra.mxu0 0
  %1163 = vmatprep.subr.bf16.mxu0 0
  %1164 = vmatpush2.bf16.msra.mxu0 0
  %1165 = vmatprep.subr.bf16.mxu0 0
  %1166 = vmatpush2.bf16.msra.mxu0 0
  %1167 = vmatprep.mubr.bf16.mxu0 0
  %1168 = vmatmul.mubr.bf16.gmra.mxu0 %v887
  %v1169 = vpop.f32.mrf.mxu0
  %v1170 = vadd.f32 %v1129, %v1169
  %v1171 = vpop.f32.mrf.mxu0
  %v1172 = vpop.f32.mrf.mxu0
  %v1173 = vadd.f32 %v1132, %v1172
  %v1174 = vpop.f32.mrf.mxu0
  %1175 = vdwg.mxu0
  %1176 = vst [vmem:[%s3] sm:$0xff] %v1170
  %1177 = vst [vmem:[%s3 + $0x8] sm:$0xff] %v1173
  // Predicated region
  $region14: #{cnn_forward.5} parent=0 // pred_check
    _
  $region15: #{cnn_forward.5} parent=0 // pred_check_branch
    %1179 = sbr.rel (0) target = $region17
  $region16: #{cnn_forward.5} parent=0 // pred_region
    _
  $region17: #{cnn_forward.5} parent=0 // pred_fallthru
    _
  // Predicated region
  $region18: #{cnn_forward.5} parent=0 // pred_check
    _
  $region19: #{cnn_forward.5} parent=0 // pred_check_branch
    %1181 = sbr.rel (0) target = $region21
  $region20: #{cnn_forward.5} parent=0 // pred_region
    _
  $region21: #{cnn_forward.5} parent=0 // pred_fallthru
    _

</llo_original>
